<compile_context>
chip_gen: v7x
topology: tpu7x:2x2x1
jax: 0.10.0
libtpu: 0.0.40
codegen_flags: <defaults>
</compile_context>

<pallas_src>
import functools

import jax
import jax.numpy as jnp
from jax import lax
from jax.experimental import pallas as pl
from jax.experimental.pallas import tpu as pltpu


def _round_up(x, m):
    return (x + m - 1) // m * m


def _vmem_capacity_bytes():
    try:
        return int(pltpu.get_tpu_info().vmem_capacity_bytes)
    except Exception:
        return 64 * 1024 * 1024  # conservative fallback (v7x per-TC size)


def _plan_chunks(T, Bp, Dp, Hp):
    """Pick the time chunk Tc from a per-generation VMEM budget.

    Returns (Tc, Tp, vmem_limit_bytes) with Tp = round_up(T, Tc).
    """
    G = 3 * Hp
    cap = _vmem_capacity_bytes()
    budget = min(cap // 2, 48 * 1024 * 1024)   # headroom; safe on v5e/v6e/v7x

    # Per-timestep VMEM bytes (worst layer): double-buffered bf16 input chunk,
    # double-buffered bf16 gi output chunk, f32 hidden-sequence scratch,
    # f32 gi scratch (first layer's fused input projection).
    per_t = Bp * (2 * max(Dp, G) * 2 + 2 * G * 2 + Hp * 4 + G * 4)
    # Fixed cost: weights (W_hh + next W_ih / fc, conservatively double
    # buffered), biases, f32 hidden carry, compiler slack.
    fixed = 2 * 2 * (Hp * G * 2) + 2 * G * 4 + Bp * Hp * 4 + (2 << 20)

    tc = max(8, min(256, (budget - fixed) // max(per_t, 1)))
    tc = max(8, (tc // 8) * 8)
    tc = min(tc, _round_up(T, 8))            # do not over-pad short sequences
    tp = _round_up(T, tc)

    est = fixed + tc * per_t
    vmem_limit = int(min(cap * 3 // 4, max(32 * 1024 * 1024, 2 * est)))
    return tc, tp, vmem_limit


# ------------------------------ fused layer kernel ------------------------------

def _gru_layer_kernel(*refs, tc, bp, hp, has_in_proj, is_last, t_real, t_pad,
                      unroll):
    """One GRU layer over one time chunk.

    has_in_proj: layer 0 — fuse x @ W_ih (+bias) per chunk (one hoisted matmul).
    is_last:     final layer — keep only h_T and fuse the Linear head;
                 otherwise emit the next layer's gates gi_{l+1} in bf16.
    """
    # ---- unpack refs (inputs, outputs, scratch) ----
    idx = 0
    in_ref = refs[idx]; idx += 1                     # x chunk or gi chunk
    if has_in_proj:
        wih_ref = refs[idx]; idx += 1                # (Dp, 3Hp)  bf16
        bgi_ref = refs[idx]; idx += 1                # (1, 3Hp)   f32
    whh_ref = refs[idx]; idx += 1                    # (Hp, 3Hp)  bf16
    bhn_ref = refs[idx]; idx += 1                    # (1, Hp)    f32
    if is_last:
        fcw_ref = refs[idx]; idx += 1                # (Hp, Op)   bf16
        fcb_ref = refs[idx]; idx += 1                # (1, Op)    f32
    else:
        nwih_ref = refs[idx]; idx += 1               # (Hp, 3Hp)  bf16 (next layer)
        nbgi_ref = refs[idx]; idx += 1               # (1, 3Hp)   f32  (next layer)
    out_ref = refs[idx]; idx += 1
    h_carry = refs[idx]; idx += 1                    # (Bp, Hp)   f32 hidden carry
    gi_scr = None
    hseq_scr = None
    if has_in_proj:
        gi_scr = refs[idx]; idx += 1                 # (Tc, Bp, 3Hp) f32
    if not is_last:
        hseq_scr = refs[idx]; idx += 1               # (Tc, Bp, Hp)  f32

    c = pl.program_id(0)

    @pl.when(c == 0)
    def _():
        h_carry[...] = jnp.zeros_like(h_carry)

    whh = whh_ref[...]                               # hoisted out of the time loop
    b_hn = jnp.broadcast_to(bhn_ref[...], (bp, hp))  # hoisted broadcast (no re-CSE)

    if has_in_proj:
        # Fused input projection for the whole chunk: one MXU matmul, hoisted
        # out of the serial recurrence.
        x_chunk = in_ref[...]                        # (Tc, Bp, Dp) bf16
        dp = x_chunk.shape[-1]
        gi = jnp.dot(x_chunk.reshape(tc * bp, dp), wih_ref[...],
                     preferred_element_type=jnp.float32) + bgi_ref[...]
        gi_scr[...] = gi.reshape(tc, bp, 3 * hp)

    def step(t, h):
        if has_in_proj:
            gi_t = gi_scr[t]                                  # (Bp, 3Hp) f32
        else:
            gi_t = in_ref[t].astype(jnp.float32)              # bf16 -> f32
        gh = jnp.dot(h.astype(jnp.bfloat16), whh,
                     preferred_element_type=jnp.float32)
        r = jax.nn.sigmoid(gi_t[:, :hp] + gh[:, :hp])
        z = jax.nn.sigmoid(gi_t[:, hp:2 * hp] + gh[:, hp:2 * hp])
        n = jnp.tanh(gi_t[:, 2 * hp:] + r * (gh[:, 2 * hp:] + b_hn))
        h_new = (1.0 - z) * n + z * h
        if t_real != t_pad:                                   # mask padded steps
            h_new = jnp.where(c * tc + t < t_real, h_new, h)
        if not is_last:
            hseq_scr[t] = h_new
        return h_new

    h_last = lax.fori_loop(0, tc, step, h_carry[...], unroll=unroll)
    h_carry[...] = h_last

    if is_last:
        @pl.when(c == pl.num_programs(0) - 1)
        def _():
            out_ref[...] = (
                jnp.dot(h_last.astype(jnp.bfloat16), fcw_ref[...],
                        preferred_element_type=jnp.float32)
                + fcb_ref[...]
            )
    else:
        # Fused next-layer input projection over the whole chunk (one matmul),
        # streamed out in bf16 — the hidden sequence never hits HBM.
        hseq = hseq_scr[...].reshape(tc * bp, hp).astype(jnp.bfloat16)
        gi_n = jnp.dot(hseq, nwih_ref[...],
                       preferred_element_type=jnp.float32) + nbgi_ref[...]
        out_ref[...] = gi_n.reshape(tc, bp, 3 * hp).astype(out_ref.dtype)


def _run_gru_layer(in_seq, w_hh, b_hn, *, in_proj=None, next_proj=None, fc=None,
                   tc, t_real, vmem_limit):
    """Run one GRU layer over time chunks.

    in_seq: (Tp, Bp, W) bf16 time-major; W = input_dim (layer 0) or 3Hp (gates).
    Exactly one of `next_proj` (emit next layer's gates) / `fc` (final head).
    """
    assert (next_proj is None) != (fc is None)
    tp, bp, w_in = in_seq.shape
    hp = w_hh.shape[0]
    g = 3 * hp
    has_in_proj = in_proj is not None
    is_last = fc is not None
    n_chunks = tp // tc
    unroll = min(8, tc)

    operands = [in_seq]
    in_specs = [pl.BlockSpec((tc, bp, w_in), lambda c: (c, 0, 0))]
    if has_in_proj:
        w_ih, b_gi = in_proj
        operands += [w_ih, b_gi]
        in_specs += [pl.BlockSpec(w_ih.shape, lambda c: (0, 0)),
                     pl.BlockSpec((1, g), lambda c: (0, 0))]
    operands += [w_hh, b_hn]
    in_specs += [pl.BlockSpec((hp, g), lambda c: (0, 0)),
                 pl.BlockSpec((1, hp), lambda c: (0, 0))]
    if is_last:
        fc_w, fc_b = fc
        op = fc_w.shape[1]
        operands += [fc_w, fc_b]
        in_specs += [pl.BlockSpec((hp, op), lambda c: (0, 0)),
                     pl.BlockSpec((1, op), lambda c: (0, 0))]
        out_shape = jax.ShapeDtypeStruct((bp, op), jnp.float32)
        out_specs = pl.BlockSpec((bp, op), lambda c: (0, 0))  # resident accumulator
    else:
        w_ih_n, b_gi_n = next_proj
        operands += [w_ih_n, b_gi_n]
        in_specs += [pl.BlockSpec((hp, g), lambda c: (0, 0)),
                     pl.BlockSpec((1, g), lambda c: (0, 0))]
        out_shape = jax.ShapeDtypeStruct((tp, bp, g), jnp.bfloat16)
        out_specs = pl.BlockSpec((tc, bp, g), lambda c: (c, 0, 0))

    scratch = [pltpu.VMEM((bp, hp), jnp.float32)]              # hidden carry
    if has_in_proj:
        scratch.append(pltpu.VMEM((tc, bp, g), jnp.float32))   # gi chunk (layer 0)
    if not is_last:
        scratch.append(pltpu.VMEM((tc, bp, hp), jnp.float32))  # h chunk for next proj

    kernel = functools.partial(
        _gru_layer_kernel, tc=tc, bp=bp, hp=hp,
        has_in_proj=has_in_proj, is_last=is_last,
        t_real=t_real, t_pad=tp, unroll=unroll)

    return pl.pallas_call(
        kernel,
        out_shape=out_shape,
        grid_spec=pltpu.PrefetchScalarGridSpec(
            num_scalar_prefetch=0,
            grid=(n_chunks,),
            in_specs=in_specs,
            out_specs=out_specs,
            scratch_shapes=scratch),
        compiler_params=pltpu.CompilerParams(
            dimension_semantics=("arbitrary",),   # serial carry over time chunks
            vmem_limit_bytes=vmem_limit),
    )(*operands)


# --------------------------------- parameters ---------------------------------

def _pad_gate_cols(a, H, Hp):
    """(R, 3H) -> (R, 3Hp): each gate block starts at a 128-lane boundary."""
    R = a.shape[0]
    out = jnp.zeros((R, 3 * Hp), a.dtype)
    for g in range(3):
        out = out.at[:, g * Hp:g * Hp + H].set(a[:, g * H:(g + 1) * H])
    return out


def _pad_rows(a, Rp):
    out = jnp.zeros((Rp,) + a.shape[1:], a.dtype)
    return out.at[:a.shape[0]].set(a)


def init_params(key, input_dim, hidden_dim, num_layers, output_dim):
    """Mirror torch.nn.GRU / nn.Linear default init: Uniform(-1/sqrt(H), 1/sqrt(H))."""
    H = hidden_dim
    Hp = _round_up(H, 128)
    Op = _round_up(output_dim, 128)
    bound = 1.0 / float(H) ** 0.5

    layers = []
    for layer in range(num_layers):
        d_in = input_dim if layer == 0 else hidden_dim
        d_in_p = input_dim if layer == 0 else Hp
        key, k1, k2, k3, k4 = jax.random.split(key, 5)
        # Logical weights (transposed vs PyTorch), gate order r, z, n.
        w_ih = jax.random.uniform(k1, (d_in, 3 * H), jnp.float32, -bound, bound)
        w_hh = jax.random.uniform(k2, (H, 3 * H), jnp.float32, -bound, bound)
        b_ih = jax.random.uniform(k3, (1, 3 * H), jnp.float32, -bound, bound)
        b_hh = jax.random.uniform(k4, (1, 3 * H), jnp.float32, -bound, bound)

        w_ih_p = _pad_rows(_pad_gate_cols(w_ih, H, Hp), d_in_p)
        w_hh_p = _pad_rows(_pad_gate_cols(w_hh, H, Hp), Hp)
        b_ih_p = _pad_gate_cols(b_ih, H, Hp)
        b_hh_p = _pad_gate_cols(b_hh, H, Hp)
        # Fold b_ih (all gates) plus b_hh's r/z parts into the gate bias;
        # b_hh's n part must stay inside r * (W_hn h + b_hn).
        b_gi = b_ih_p.at[:, :2 * Hp].add(b_hh_p[:, :2 * Hp])
        b_hn = b_hh_p[:, 2 * Hp:]

        layers.append({
            "w_ih": w_ih_p.astype(jnp.bfloat16),   # (Din_p, 3Hp)
            "w_hh": w_hh_p.astype(jnp.bfloat16),   # (Hp, 3Hp)
            "b_gi": b_gi,                          # (1, 3Hp) f32
            "b_hn": b_hn,                          # (1, Hp)  f32
        })

    key, k5, k6 = jax.random.split(key, 3)
    fc_w = jax.random.uniform(k5, (hidden_dim, output_dim), jnp.float32, -bound, bound)
    fc_b = jax.random.uniform(k6, (1, output_dim), jnp.float32, -bound, bound)
    fc_w_p = jnp.zeros((Hp, Op), jnp.float32).at[:hidden_dim, :output_dim].set(fc_w)
    fc_b_p = jnp.zeros((1, Op), jnp.float32).at[:, :output_dim].set(fc_b)

    return {"layers": layers,
            "fc_w": fc_w_p.astype(jnp.bfloat16),
            "fc_b": fc_b_p}


# ---------------------------------- forward ----------------------------------

@functools.partial(jax.jit, static_argnames=("output_dim",))
def gru_forward(x_btd, params, *, output_dim):
    """Equivalent of the PyTorch module's forward: fc(gru(x)[:, -1, :]).

    x_btd: (B, T, D) float32 (batch_first). Returns (B, output_dim) float32.
    """
    B, T, D = x_btd.shape
    layers = params["layers"]
    L = len(layers)
    Hp = layers[0]["w_hh"].shape[0]
    Bp = max(8, _round_up(B, 8))                       # sublane-aligned batch
    tc, tp, vmem_limit = _plan_chunks(T, Bp, D, Hp)

    # Time-major, batch/time-padded bf16 input. x is narrow (width D) so this
    # single relayout is cheap; all wide inter-layer tensors stay time-major
    # inside the fused kernels and never round-trip through HBM as hidden seqs.
    x = jnp.transpose(x_btd, (1, 0, 2)).astype(jnp.bfloat16)
    x = jnp.pad(x, ((0, tp - T), (0, Bp - B), (0, 0)))

    seq = x
    out = None
    for i in range(L):
        lyr = layers[i]
        in_proj = (lyr["w_ih"], lyr["b_gi"]) if i == 0 else None
        if i < L - 1:
            nxt = layers[i + 1]
            seq = _run_gru_layer(seq, lyr["w_hh"], lyr["b_hn"],
                                 in_proj=in_proj,
                                 next_proj=(nxt["w_ih"], nxt["b_gi"]),
                                 tc=tc, t_real=T, vmem_limit=vmem_limit)
        else:
            out = _run_gru_layer(seq, lyr["w_hh"], lyr["b_hn"],
                                 in_proj=in_proj,
                                 fc=(params["fc_w"], params["fc_b"]),
                                 tc=tc, t_real=T, vmem_limit=vmem_limit)
    return out[:B, :output_dim]


# -------------------------- pure-JAX reference (f32) --------------------------

def reference_forward(x_btd, params, output_dim):
    h_seq = jnp.transpose(x_btd, (1, 0, 2)).astype(jnp.float32)   # (T, B, W)
    h = None
    for lyr in params["layers"]:
        w_ih = lyr["w_ih"].astype(jnp.float32)
        w_hh = lyr["w_hh"].astype(jnp.float32)
        b_gi, b_hn = lyr["b_gi"], lyr["b_hn"]
        Hp = w_hh.shape[0]
        T, B, _ = h_seq.shape
        h = jnp.zeros((B, Hp), jnp.float32)
        outs = []
        for t in range(T):
            gi = h_seq[t] @ w_ih + b_gi
            gh = h @ w_hh
            r = jax.nn.sigmoid(gi[:, :Hp] + gh[:, :Hp])
            z = jax.nn.sigmoid(gi[:, Hp:2 * Hp] + gh[:, Hp:2 * Hp])
            n = jnp.tanh(gi[:, 2 * Hp:] + r * (gh[:, 2 * Hp:] + b_hn))
            h = (1.0 - z) * n + z * h
            outs.append(h)
        h_seq = jnp.stack(outs)
    out = h @ params["fc_w"].astype(jnp.float32) + params["fc_b"]
    return out[:, :output_dim]


if __name__ == "__main__":
    # Small shapes consistent with the module: input_dim=16, hidden=32, layers=2, out=8
    B, T, D = 2, 8, 16
    HIDDEN, LAYERS, OUT = 32, 2, 8

    key = jax.random.PRNGKey(0)
    key, xk = jax.random.split(key)
    x = jax.random.normal(xk, (B, T, D), dtype=jnp.float32)

    params = init_params(key, D, HIDDEN, LAYERS, OUT)

    out = gru_forward(x, params, output_dim=OUT)
    out = jax.block_until_ready(out)
    assert out.shape == (B, OUT)

    ref = reference_forward(x, params, OUT)
    err = float(jnp.max(jnp.abs(out - ref)))
    assert err < 0.1, f"kernel vs reference max abs err {err}"

    print("KERNEL_OK")
</pallas_src>

<mosaic_0001>
module attributes {stable_mosaic.version = 11 : i64} {
  func.func @_gru_layer_kernel(%arg0: i32, %arg1: memref<8x8x16xbf16, #tpu.memory_space<vmem>>, %arg2: memref<16x384xbf16, #tpu.memory_space<vmem>>, %arg3: memref<1x384xf32, #tpu.memory_space<vmem>>, %arg4: memref<128x384xbf16, #tpu.memory_space<vmem>>, %arg5: memref<1x128xf32, #tpu.memory_space<vmem>>, %arg6: memref<128x384xbf16, #tpu.memory_space<vmem>>, %arg7: memref<1x384xf32, #tpu.memory_space<vmem>>, %arg8: memref<8x8x384xbf16, #tpu.memory_space<vmem>>, %arg9: memref<8x128xf32, #tpu.memory_space<vmem>>, %arg10: memref<8x8x384xf32, #tpu.memory_space<vmem>>, %arg11: memref<8x8x128xf32, #tpu.memory_space<vmem>>) attributes {dimension_semantics = [#tpu.dimension_semantics<arbitrary>], iteration_bounds = array<i64: 1>, scalar_prefetch = 0 : i64, scratch_operands = 3 : i64, tpu.core_type = #tpu.core_type<tc>, window_params = [{transform_indices = @transform_0, window_bounds = array<i64: 8, 8, 16>}, {pipeline_mode = #tpu.pipeline_mode<synchronous>, transform_indices = @transform_1, window_bounds = array<i64: 16, 384>}, {pipeline_mode = #tpu.pipeline_mode<synchronous>, transform_indices = @transform_2, window_bounds = array<i64: 1, 384>}, {pipeline_mode = #tpu.pipeline_mode<synchronous>, transform_indices = @transform_3, window_bounds = array<i64: 128, 384>}, {pipeline_mode = #tpu.pipeline_mode<synchronous>, transform_indices = @transform_4, window_bounds = array<i64: 1, 128>}, {pipeline_mode = #tpu.pipeline_mode<synchronous>, transform_indices = @transform_5, window_bounds = array<i64: 128, 384>}, {pipeline_mode = #tpu.pipeline_mode<synchronous>, transform_indices = @transform_6, window_bounds = array<i64: 1, 384>}, {transform_indices = @transform_7, window_bounds = array<i64: 8, 8, 384>}]} {
    %c0_i32 = arith.constant 0 : i32
    %0 = arith.cmpi eq, %arg0, %c0_i32 : i32
    %1 = arith.extui %0 : i1 to i32
    %c0_i32_0 = arith.constant 0 : i32
    %2 = arith.cmpi ne, %1, %c0_i32_0 : i32
    scf.if %2 {
      %cst_94 = arith.constant 0.000000e+00 : f32
      %317 = vector.broadcast %cst_94 : f32 to vector<8x128xf32>
      %c0_95 = arith.constant 0 : index
      %c0_96 = arith.constant 0 : index
      %318 = vector.load %arg9[%c0_95, %c0_96] : memref<8x128xf32, #tpu.memory_space<vmem>>, vector<8x128xf32>
      tpu.vector_store %arg9[%c0_95, %c0_96], %317 {strides = array<i32>} : memref<8x128xf32, #tpu.memory_space<vmem>>, vector<8x128xf32>,
    } else {
    }
    %c0 = arith.constant 0 : index
    %c0_1 = arith.constant 0 : index
    %3 = vector.load %arg4[%c0, %c0_1] : memref<128x384xbf16, #tpu.memory_space<vmem>>, vector<128x384xbf16>
    %c0_2 = arith.constant 0 : index
    %c0_3 = arith.constant 0 : index
    %4 = vector.load %arg5[%c0_2, %c0_3] : memref<1x128xf32, #tpu.memory_space<vmem>>, vector<1x128xf32>
    %5 = vector.shape_cast %4 : vector<1x128xf32> to vector<1x128xf32>
    %6 = vector.broadcast %5 : vector<1x128xf32> to vector<8x128xf32>
    %c0_4 = arith.constant 0 : index
    %c0_5 = arith.constant 0 : index
    %c0_6 = arith.constant 0 : index
    %7 = vector.load %arg1[%c0_4, %c0_5, %c0_6] : memref<8x8x16xbf16, #tpu.memory_space<vmem>>, vector<8x8x16xbf16>
    %8 = vector.shape_cast %7 : vector<8x8x16xbf16> to vector<64x16xbf16>
    %c0_7 = arith.constant 0 : index
    %c0_8 = arith.constant 0 : index
    %9 = vector.load %arg2[%c0_7, %c0_8] : memref<16x384xbf16, #tpu.memory_space<vmem>>, vector<16x384xbf16>
    %cst = arith.constant dense<0.000000e+00> : vector<64x384xf32>
    %10 = tpu.matmul %8, %9, %cst {dimension_numbers = #tpu.dot_dimension_numbers<[1], [0], [0], [1], [0, 0, 1, 1], [], []>} : vector<64x16xbf16>, vector<16x384xbf16>, vector<64x384xf32> -> vector<64x384xf32>
    %c0_9 = arith.constant 0 : index
    %c0_10 = arith.constant 0 : index
    %11 = vector.load %arg3[%c0_9, %c0_10] : memref<1x384xf32, #tpu.memory_space<vmem>>, vector<1x384xf32>
    %12 = vector.broadcast %11 : vector<1x384xf32> to vector<64x384xf32>
    %13 = arith.addf %10, %12 : vector<64x384xf32>
    %14 = vector.shape_cast %13 : vector<64x384xf32> to vector<8x8x384xf32>
    %c0_11 = arith.constant 0 : index
    %c0_12 = arith.constant 0 : index
    %c0_13 = arith.constant 0 : index
    %15 = vector.load %arg10[%c0_11, %c0_12, %c0_13] : memref<8x8x384xf32, #tpu.memory_space<vmem>>, vector<8x8x384xf32>
    tpu.vector_store %arg10[%c0_11, %c0_12, %c0_13], %14 {strides = array<i32>} : memref<8x8x384xf32, #tpu.memory_space<vmem>>, vector<8x8x384xf32>,
    %c0_14 = arith.constant 0 : index
    %c0_15 = arith.constant 0 : index
    %16 = vector.load %arg9[%c0_14, %c0_15] : memref<8x128xf32, #tpu.memory_space<vmem>>, vector<8x128xf32>
    %c0_i32_16 = arith.constant 0 : i32
    %17 = arith.index_cast %c0_i32_16 : i32 to index
    %c0_17 = arith.constant 0 : index
    %c0_18 = arith.constant 0 : index
    %18 = vector.load %arg10[%17, %c0_17, %c0_18] : memref<8x8x384xf32, #tpu.memory_space<vmem>>, vector<1x8x384xf32>
    %19 = vector.shape_cast %18 : vector<1x8x384xf32> to vector<8x384xf32>
    %20 = arith.truncf %16 : vector<8x128xf32> to vector<8x128xbf16>
    %cst_19 = arith.constant dense<0.000000e+00> : vector<8x384xf32>
    %21 = tpu.matmul %20, %3, %cst_19 {dimension_numbers = #tpu.dot_dimension_numbers<[1], [0], [0], [1], [0, 0, 1, 1], [], []>} : vector<8x128xbf16>, vector<128x384xbf16>, vector<8x384xf32> -> vector<8x384xf32>
    %22 = vector.extract_strided_slice %19 {offsets = [0, 0], sizes = [8, 128], strides = [1, 1]} : vector<8x384xf32> to vector<8x128xf32>
    %23 = vector.extract_strided_slice %21 {offsets = [0, 0], sizes = [8, 128], strides = [1, 1]} : vector<8x384xf32> to vector<8x128xf32>
    %24 = arith.addf %22, %23 : vector<8x128xf32>
    %25 = arith.negf %24 : vector<8x128xf32>
    %26 = math.exp %25 : vector<8x128xf32>
    %cst_20 = arith.constant 1.000000e+00 : f32
    %27 = vector.broadcast %cst_20 : f32 to vector<8x128xf32>
    %28 = arith.addf %27, %26 : vector<8x128xf32>
    %29 = arith.divf %27, %28 : vector<8x128xf32>
    %30 = vector.extract_strided_slice %19 {offsets = [0, 128], sizes = [8, 128], strides = [1, 1]} : vector<8x384xf32> to vector<8x128xf32>
    %31 = vector.extract_strided_slice %21 {offsets = [0, 128], sizes = [8, 128], strides = [1, 1]} : vector<8x384xf32> to vector<8x128xf32>
    %32 = arith.addf %30, %31 : vector<8x128xf32>
    %33 = arith.negf %32 : vector<8x128xf32>
    %34 = math.exp %33 : vector<8x128xf32>
    %cst_21 = arith.constant 1.000000e+00 : f32
    %35 = vector.broadcast %cst_21 : f32 to vector<8x128xf32>
    %36 = arith.addf %35, %34 : vector<8x128xf32>
    %37 = arith.divf %35, %36 : vector<8x128xf32>
    %38 = vector.extract_strided_slice %19 {offsets = [0, 256], sizes = [8, 128], strides = [1, 1]} : vector<8x384xf32> to vector<8x128xf32>
    %39 = vector.extract_strided_slice %21 {offsets = [0, 256], sizes = [8, 128], strides = [1, 1]} : vector<8x384xf32> to vector<8x128xf32>
    %40 = arith.addf %39, %6 : vector<8x128xf32>
    %41 = arith.mulf %29, %40 : vector<8x128xf32>
    %42 = arith.addf %38, %41 : vector<8x128xf32>
    %43 = math.tanh %42 : vector<8x128xf32>
    %cst_22 = arith.constant 1.000000e+00 : f32
    %44 = vector.broadcast %cst_22 : f32 to vector<8x128xf32>
    %45 = arith.subf %44, %37 : vector<8x128xf32>
    %46 = arith.mulf %45, %43 : vector<8x128xf32>
    %47 = arith.mulf %37, %16 : vector<8x128xf32>
    %48 = arith.addf %46, %47 : vector<8x128xf32>
    %49 = arith.index_cast %c0_i32_16 : i32 to index
    %c0_23 = arith.constant 0 : index
    %c0_24 = arith.constant 0 : index
    %50 = vector.load %arg11[%49, %c0_23, %c0_24] : memref<8x8x128xf32, #tpu.memory_space<vmem>>, vector<1x8x128xf32>
    %51 = vector.shape_cast %50 : vector<1x8x128xf32> to vector<8x128xf32>
    %52 = vector.shape_cast %48 : vector<8x128xf32> to vector<1x8x128xf32>
    tpu.vector_store %arg11[%49, %c0_23, %c0_24], %52 {strides = array<i32>} : memref<8x8x128xf32, #tpu.memory_space<vmem>>, vector<1x8x128xf32>,
    %c1_i32 = arith.constant 1 : i32
    %53 = arith.index_cast %c1_i32 : i32 to index
    %c0_25 = arith.constant 0 : index
    %c0_26 = arith.constant 0 : index
    %54 = vector.load %arg10[%53, %c0_25, %c0_26] : memref<8x8x384xf32, #tpu.memory_space<vmem>>, vector<1x8x384xf32>
    %55 = vector.shape_cast %54 : vector<1x8x384xf32> to vector<8x384xf32>
    %56 = arith.truncf %48 : vector<8x128xf32> to vector<8x128xbf16>
    %cst_27 = arith.constant dense<0.000000e+00> : vector<8x384xf32>
    %57 = tpu.matmul %56, %3, %cst_27 {dimension_numbers = #tpu.dot_dimension_numbers<[1], [0], [0], [1], [0, 0, 1, 1], [], []>} : vector<8x128xbf16>, vector<128x384xbf16>, vector<8x384xf32> -> vector<8x384xf32>
    %58 = vector.extract_strided_slice %55 {offsets = [0, 0], sizes = [8, 128], strides = [1, 1]} : vector<8x384xf32> to vector<8x128xf32>
    %59 = vector.extract_strided_slice %57 {offsets = [0, 0], sizes = [8, 128], strides = [1, 1]} : vector<8x384xf32> to vector<8x128xf32>
    %60 = arith.addf %58, %59 : vector<8x128xf32>
    %61 = arith.negf %60 : vector<8x128xf32>
    %62 = math.exp %61 : vector<8x128xf32>
    %cst_28 = arith.constant 1.000000e+00 : f32
    %63 = vector.broadcast %cst_28 : f32 to vector<8x128xf32>
    %64 = arith.addf %63, %62 : vector<8x128xf32>
    %65 = arith.divf %63, %64 : vector<8x128xf32>
    %66 = vector.extract_strided_slice %55 {offsets = [0, 128], sizes = [8, 128], strides = [1, 1]} : vector<8x384xf32> to vector<8x128xf32>
    %67 = vector.extract_strided_slice %57 {offsets = [0, 128], sizes = [8, 128], strides = [1, 1]} : vector<8x384xf32> to vector<8x128xf32>
    %68 = arith.addf %66, %67 : vector<8x128xf32>
    %69 = arith.negf %68 : vector<8x128xf32>
    %70 = math.exp %69 : vector<8x128xf32>
    %cst_29 = arith.constant 1.000000e+00 : f32
    %71 = vector.broadcast %cst_29 : f32 to vector<8x128xf32>
    %72 = arith.addf %71, %70 : vector<8x128xf32>
    %73 = arith.divf %71, %72 : vector<8x128xf32>
    %74 = vector.extract_strided_slice %55 {offsets = [0, 256], sizes = [8, 128], strides = [1, 1]} : vector<8x384xf32> to vector<8x128xf32>
    %75 = vector.extract_strided_slice %57 {offsets = [0, 256], sizes = [8, 128], strides = [1, 1]} : vector<8x384xf32> to vector<8x128xf32>
    %76 = arith.addf %75, %6 : vector<8x128xf32>
    %77 = arith.mulf %65, %76 : vector<8x128xf32>
    %78 = arith.addf %74, %77 : vector<8x128xf32>
    %79 = math.tanh %78 : vector<8x128xf32>
    %cst_30 = arith.constant 1.000000e+00 : f32
    %80 = vector.broadcast %cst_30 : f32 to vector<8x128xf32>
    %81 = arith.subf %80, %73 : vector<8x128xf32>
    %82 = arith.mulf %81, %79 : vector<8x128xf32>
    %83 = arith.mulf %73, %48 : vector<8x128xf32>
    %84 = arith.addf %82, %83 : vector<8x128xf32>
    %85 = arith.index_cast %c1_i32 : i32 to index
    %c0_31 = arith.constant 0 : index
    %c0_32 = arith.constant 0 : index
    %86 = vector.load %arg11[%85, %c0_31, %c0_32] : memref<8x8x128xf32, #tpu.memory_space<vmem>>, vector<1x8x128xf32>
    %87 = vector.shape_cast %86 : vector<1x8x128xf32> to vector<8x128xf32>
    %88 = vector.shape_cast %84 : vector<8x128xf32> to vector<1x8x128xf32>
    tpu.vector_store %arg11[%85, %c0_31, %c0_32], %88 {strides = array<i32>} : memref<8x8x128xf32, #tpu.memory_space<vmem>>, vector<1x8x128xf32>,
    %c2_i32 = arith.constant 2 : i32
    %89 = arith.index_cast %c2_i32 : i32 to index
    %c0_33 = arith.constant 0 : index
    %c0_34 = arith.constant 0 : index
    %90 = vector.load %arg10[%89, %c0_33, %c0_34] : memref<8x8x384xf32, #tpu.memory_space<vmem>>, vector<1x8x384xf32>
    %91 = vector.shape_cast %90 : vector<1x8x384xf32> to vector<8x384xf32>
    %92 = arith.truncf %84 : vector<8x128xf32> to vector<8x128xbf16>
    %cst_35 = arith.constant dense<0.000000e+00> : vector<8x384xf32>
    %93 = tpu.matmul %92, %3, %cst_35 {dimension_numbers = #tpu.dot_dimension_numbers<[1], [0], [0], [1], [0, 0, 1, 1], [], []>} : vector<8x128xbf16>, vector<128x384xbf16>, vector<8x384xf32> -> vector<8x384xf32>
    %94 = vector.extract_strided_slice %91 {offsets = [0, 0], sizes = [8, 128], strides = [1, 1]} : vector<8x384xf32> to vector<8x128xf32>
    %95 = vector.extract_strided_slice %93 {offsets = [0, 0], sizes = [8, 128], strides = [1, 1]} : vector<8x384xf32> to vector<8x128xf32>
    %96 = arith.addf %94, %95 : vector<8x128xf32>
    %97 = arith.negf %96 : vector<8x128xf32>
    %98 = math.exp %97 : vector<8x128xf32>
    %cst_36 = arith.constant 1.000000e+00 : f32
    %99 = vector.broadcast %cst_36 : f32 to vector<8x128xf32>
    %100 = arith.addf %99, %98 : vector<8x128xf32>
    %101 = arith.divf %99, %100 : vector<8x128xf32>
    %102 = vector.extract_strided_slice %91 {offsets = [0, 128], sizes = [8, 128], strides = [1, 1]} : vector<8x384xf32> to vector<8x128xf32>
    %103 = vector.extract_strided_slice %93 {offsets = [0, 128], sizes = [8, 128], strides = [1, 1]} : vector<8x384xf32> to vector<8x128xf32>
    %104 = arith.addf %102, %103 : vector<8x128xf32>
    %105 = arith.negf %104 : vector<8x128xf32>
    %106 = math.exp %105 : vector<8x128xf32>
    %cst_37 = arith.constant 1.000000e+00 : f32
    %107 = vector.broadcast %cst_37 : f32 to vector<8x128xf32>
    %108 = arith.addf %107, %106 : vector<8x128xf32>
    %109 = arith.divf %107, %108 : vector<8x128xf32>
    %110 = vector.extract_strided_slice %91 {offsets = [0, 256], sizes = [8, 128], strides = [1, 1]} : vector<8x384xf32> to vector<8x128xf32>
    %111 = vector.extract_strided_slice %93 {offsets = [0, 256], sizes = [8, 128], strides = [1, 1]} : vector<8x384xf32> to vector<8x128xf32>
    %112 = arith.addf %111, %6 : vector<8x128xf32>
    %113 = arith.mulf %101, %112 : vector<8x128xf32>
    %114 = arith.addf %110, %113 : vector<8x128xf32>
    %115 = math.tanh %114 : vector<8x128xf32>
    %cst_38 = arith.constant 1.000000e+00 : f32
    %116 = vector.broadcast %cst_38 : f32 to vector<8x128xf32>
    %117 = arith.subf %116, %109 : vector<8x128xf32>
    %118 = arith.mulf %117, %115 : vector<8x128xf32>
    %119 = arith.mulf %109, %84 : vector<8x128xf32>
    %120 = arith.addf %118, %119 : vector<8x128xf32>
    %121 = arith.index_cast %c2_i32 : i32 to index
    %c0_39 = arith.constant 0 : index
    %c0_40 = arith.constant 0 : index
    %122 = vector.load %arg11[%121, %c0_39, %c0_40] : memref<8x8x128xf32, #tpu.memory_space<vmem>>, vector<1x8x128xf32>
    %123 = vector.shape_cast %122 : vector<1x8x128xf32> to vector<8x128xf32>
    %124 = vector.shape_cast %120 : vector<8x128xf32> to vector<1x8x128xf32>
    tpu.vector_store %arg11[%121, %c0_39, %c0_40], %124 {strides = array<i32>} : memref<8x8x128xf32, #tpu.memory_space<vmem>>, vector<1x8x128xf32>,
    %c3_i32 = arith.constant 3 : i32
    %125 = arith.index_cast %c3_i32 : i32 to index
    %c0_41 = arith.constant 0 : index
    %c0_42 = arith.constant 0 : index
    %126 = vector.load %arg10[%125, %c0_41, %c0_42] : memref<8x8x384xf32, #tpu.memory_space<vmem>>, vector<1x8x384xf32>
    %127 = vector.shape_cast %126 : vector<1x8x384xf32> to vector<8x384xf32>
    %128 = arith.truncf %120 : vector<8x128xf32> to vector<8x128xbf16>
    %cst_43 = arith.constant dense<0.000000e+00> : vector<8x384xf32>
    %129 = tpu.matmul %128, %3, %cst_43 {dimension_numbers = #tpu.dot_dimension_numbers<[1], [0], [0], [1], [0, 0, 1, 1], [], []>} : vector<8x128xbf16>, vector<128x384xbf16>, vector<8x384xf32> -> vector<8x384xf32>
    %130 = vector.extract_strided_slice %127 {offsets = [0, 0], sizes = [8, 128], strides = [1, 1]} : vector<8x384xf32> to vector<8x128xf32>
    %131 = vector.extract_strided_slice %129 {offsets = [0, 0], sizes = [8, 128], strides = [1, 1]} : vector<8x384xf32> to vector<8x128xf32>
    %132 = arith.addf %130, %131 : vector<8x128xf32>
    %133 = arith.negf %132 : vector<8x128xf32>
    %134 = math.exp %133 : vector<8x128xf32>
    %cst_44 = arith.constant 1.000000e+00 : f32
    %135 = vector.broadcast %cst_44 : f32 to vector<8x128xf32>
    %136 = arith.addf %135, %134 : vector<8x128xf32>
    %137 = arith.divf %135, %136 : vector<8x128xf32>
    %138 = vector.extract_strided_slice %127 {offsets = [0, 128], sizes = [8, 128], strides = [1, 1]} : vector<8x384xf32> to vector<8x128xf32>
    %139 = vector.extract_strided_slice %129 {offsets = [0, 128], sizes = [8, 128], strides = [1, 1]} : vector<8x384xf32> to vector<8x128xf32>
    %140 = arith.addf %138, %139 : vector<8x128xf32>
    %141 = arith.negf %140 : vector<8x128xf32>
    %142 = math.exp %141 : vector<8x128xf32>
    %cst_45 = arith.constant 1.000000e+00 : f32
    %143 = vector.broadcast %cst_45 : f32 to vector<8x128xf32>
    %144 = arith.addf %143, %142 : vector<8x128xf32>
    %145 = arith.divf %143, %144 : vector<8x128xf32>
    %146 = vector.extract_strided_slice %127 {offsets = [0, 256], sizes = [8, 128], strides = [1, 1]} : vector<8x384xf32> to vector<8x128xf32>
    %147 = vector.extract_strided_slice %129 {offsets = [0, 256], sizes = [8, 128], strides = [1, 1]} : vector<8x384xf32> to vector<8x128xf32>
    %148 = arith.addf %147, %6 : vector<8x128xf32>
    %149 = arith.mulf %137, %148 : vector<8x128xf32>
    %150 = arith.addf %146, %149 : vector<8x128xf32>
    %151 = math.tanh %150 : vector<8x128xf32>
    %cst_46 = arith.constant 1.000000e+00 : f32
    %152 = vector.broadcast %cst_46 : f32 to vector<8x128xf32>
    %153 = arith.subf %152, %145 : vector<8x128xf32>
    %154 = arith.mulf %153, %151 : vector<8x128xf32>
    %155 = arith.mulf %145, %120 : vector<8x128xf32>
    %156 = arith.addf %154, %155 : vector<8x128xf32>
    %157 = arith.index_cast %c3_i32 : i32 to index
    %c0_47 = arith.constant 0 : index
    %c0_48 = arith.constant 0 : index
    %158 = vector.load %arg11[%157, %c0_47, %c0_48] : memref<8x8x128xf32, #tpu.memory_space<vmem>>, vector<1x8x128xf32>
    %159 = vector.shape_cast %158 : vector<1x8x128xf32> to vector<8x128xf32>
    %160 = vector.shape_cast %156 : vector<8x128xf32> to vector<1x8x128xf32>
    tpu.vector_store %arg11[%157, %c0_47, %c0_48], %160 {strides = array<i32>} : memref<8x8x128xf32, #tpu.memory_space<vmem>>, vector<1x8x128xf32>,
    %c4_i32 = arith.constant 4 : i32
    %161 = arith.index_cast %c4_i32 : i32 to index
    %c0_49 = arith.constant 0 : index
    %c0_50 = arith.constant 0 : index
    %162 = vector.load %arg10[%161, %c0_49, %c0_50] : memref<8x8x384xf32, #tpu.memory_space<vmem>>, vector<1x8x384xf32>
    %163 = vector.shape_cast %162 : vector<1x8x384xf32> to vector<8x384xf32>
    %164 = arith.truncf %156 : vector<8x128xf32> to vector<8x128xbf16>
    %cst_51 = arith.constant dense<0.000000e+00> : vector<8x384xf32>
    %165 = tpu.matmul %164, %3, %cst_51 {dimension_numbers = #tpu.dot_dimension_numbers<[1], [0], [0], [1], [0, 0, 1, 1], [], []>} : vector<8x128xbf16>, vector<128x384xbf16>, vector<8x384xf32> -> vector<8x384xf32>
    %166 = vector.extract_strided_slice %163 {offsets = [0, 0], sizes = [8, 128], strides = [1, 1]} : vector<8x384xf32> to vector<8x128xf32>
    %167 = vector.extract_strided_slice %165 {offsets = [0, 0], sizes = [8, 128], strides = [1, 1]} : vector<8x384xf32> to vector<8x128xf32>
    %168 = arith.addf %166, %167 : vector<8x128xf32>
    %169 = arith.negf %168 : vector<8x128xf32>
    %170 = math.exp %169 : vector<8x128xf32>
    %cst_52 = arith.constant 1.000000e+00 : f32
    %171 = vector.broadcast %cst_52 : f32 to vector<8x128xf32>
    %172 = arith.addf %171, %170 : vector<8x128xf32>
    %173 = arith.divf %171, %172 : vector<8x128xf32>
    %174 = vector.extract_strided_slice %163 {offsets = [0, 128], sizes = [8, 128], strides = [1, 1]} : vector<8x384xf32> to vector<8x128xf32>
    %175 = vector.extract_strided_slice %165 {offsets = [0, 128], sizes = [8, 128], strides = [1, 1]} : vector<8x384xf32> to vector<8x128xf32>
    %176 = arith.addf %174, %175 : vector<8x128xf32>
    %177 = arith.negf %176 : vector<8x128xf32>
    %178 = math.exp %177 : vector<8x128xf32>
    %cst_53 = arith.constant 1.000000e+00 : f32
    %179 = vector.broadcast %cst_53 : f32 to vector<8x128xf32>
    %180 = arith.addf %179, %178 : vector<8x128xf32>
    %181 = arith.divf %179, %180 : vector<8x128xf32>
    %182 = vector.extract_strided_slice %163 {offsets = [0, 256], sizes = [8, 128], strides = [1, 1]} : vector<8x384xf32> to vector<8x128xf32>
    %183 = vector.extract_strided_slice %165 {offsets = [0, 256], sizes = [8, 128], strides = [1, 1]} : vector<8x384xf32> to vector<8x128xf32>
    %184 = arith.addf %183, %6 : vector<8x128xf32>
    %185 = arith.mulf %173, %184 : vector<8x128xf32>
    %186 = arith.addf %182, %185 : vector<8x128xf32>
    %187 = math.tanh %186 : vector<8x128xf32>
    %cst_54 = arith.constant 1.000000e+00 : f32
    %188 = vector.broadcast %cst_54 : f32 to vector<8x128xf32>
    %189 = arith.subf %188, %181 : vector<8x128xf32>
    %190 = arith.mulf %189, %187 : vector<8x128xf32>
    %191 = arith.mulf %181, %156 : vector<8x128xf32>
    %192 = arith.addf %190, %191 : vector<8x128xf32>
    %193 = arith.index_cast %c4_i32 : i32 to index
    %c0_55 = arith.constant 0 : index
    %c0_56 = arith.constant 0 : index
    %194 = vector.load %arg11[%193, %c0_55, %c0_56] : memref<8x8x128xf32, #tpu.memory_space<vmem>>, vector<1x8x128xf32>
    %195 = vector.shape_cast %194 : vector<1x8x128xf32> to vector<8x128xf32>
    %196 = vector.shape_cast %192 : vector<8x128xf32> to vector<1x8x128xf32>
    tpu.vector_store %arg11[%193, %c0_55, %c0_56], %196 {strides = array<i32>} : memref<8x8x128xf32, #tpu.memory_space<vmem>>, vector<1x8x128xf32>,
    %c5_i32 = arith.constant 5 : i32
    %197 = arith.index_cast %c5_i32 : i32 to index
    %c0_57 = arith.constant 0 : index
    %c0_58 = arith.constant 0 : index
    %198 = vector.load %arg10[%197, %c0_57, %c0_58] : memref<8x8x384xf32, #tpu.memory_space<vmem>>, vector<1x8x384xf32>
    %199 = vector.shape_cast %198 : vector<1x8x384xf32> to vector<8x384xf32>
    %200 = arith.truncf %192 : vector<8x128xf32> to vector<8x128xbf16>
    %cst_59 = arith.constant dense<0.000000e+00> : vector<8x384xf32>
    %201 = tpu.matmul %200, %3, %cst_59 {dimension_numbers = #tpu.dot_dimension_numbers<[1], [0], [0], [1], [0, 0, 1, 1], [], []>} : vector<8x128xbf16>, vector<128x384xbf16>, vector<8x384xf32> -> vector<8x384xf32>
    %202 = vector.extract_strided_slice %199 {offsets = [0, 0], sizes = [8, 128], strides = [1, 1]} : vector<8x384xf32> to vector<8x128xf32>
    %203 = vector.extract_strided_slice %201 {offsets = [0, 0], sizes = [8, 128], strides = [1, 1]} : vector<8x384xf32> to vector<8x128xf32>
    %204 = arith.addf %202, %203 : vector<8x128xf32>
    %205 = arith.negf %204 : vector<8x128xf32>
    %206 = math.exp %205 : vector<8x128xf32>
    %cst_60 = arith.constant 1.000000e+00 : f32
    %207 = vector.broadcast %cst_60 : f32 to vector<8x128xf32>
    %208 = arith.addf %207, %206 : vector<8x128xf32>
    %209 = arith.divf %207, %208 : vector<8x128xf32>
    %210 = vector.extract_strided_slice %199 {offsets = [0, 128], sizes = [8, 128], strides = [1, 1]} : vector<8x384xf32> to vector<8x128xf32>
    %211 = vector.extract_strided_slice %201 {offsets = [0, 128], sizes = [8, 128], strides = [1, 1]} : vector<8x384xf32> to vector<8x128xf32>
    %212 = arith.addf %210, %211 : vector<8x128xf32>
    %213 = arith.negf %212 : vector<8x128xf32>
    %214 = math.exp %213 : vector<8x128xf32>
    %cst_61 = arith.constant 1.000000e+00 : f32
    %215 = vector.broadcast %cst_61 : f32 to vector<8x128xf32>
    %216 = arith.addf %215, %214 : vector<8x128xf32>
    %217 = arith.divf %215, %216 : vector<8x128xf32>
    %218 = vector.extract_strided_slice %199 {offsets = [0, 256], sizes = [8, 128], strides = [1, 1]} : vector<8x384xf32> to vector<8x128xf32>
    %219 = vector.extract_strided_slice %201 {offsets = [0, 256], sizes = [8, 128], strides = [1, 1]} : vector<8x384xf32> to vector<8x128xf32>
    %220 = arith.addf %219, %6 : vector<8x128xf32>
    %221 = arith.mulf %209, %220 : vector<8x128xf32>
    %222 = arith.addf %218, %221 : vector<8x128xf32>
    %223 = math.tanh %222 : vector<8x128xf32>
    %cst_62 = arith.constant 1.000000e+00 : f32
    %224 = vector.broadcast %cst_62 : f32 to vector<8x128xf32>
    %225 = arith.subf %224, %217 : vector<8x128xf32>
    %226 = arith.mulf %225, %223 : vector<8x128xf32>
    %227 = arith.mulf %217, %192 : vector<8x128xf32>
    %228 = arith.addf %226, %227 : vector<8x128xf32>
    %229 = arith.index_cast %c5_i32 : i32 to index
    %c0_63 = arith.constant 0 : index
    %c0_64 = arith.constant 0 : index
    %230 = vector.load %arg11[%229, %c0_63, %c0_64] : memref<8x8x128xf32, #tpu.memory_space<vmem>>, vector<1x8x128xf32>
    %231 = vector.shape_cast %230 : vector<1x8x128xf32> to vector<8x128xf32>
    %232 = vector.shape_cast %228 : vector<8x128xf32> to vector<1x8x128xf32>
    tpu.vector_store %arg11[%229, %c0_63, %c0_64], %232 {strides = array<i32>} : memref<8x8x128xf32, #tpu.memory_space<vmem>>, vector<1x8x128xf32>,
    %c6_i32 = arith.constant 6 : i32
    %233 = arith.index_cast %c6_i32 : i32 to index
    %c0_65 = arith.constant 0 : index
    %c0_66 = arith.constant 0 : index
    %234 = vector.load %arg10[%233, %c0_65, %c0_66] : memref<8x8x384xf32, #tpu.memory_space<vmem>>, vector<1x8x384xf32>
    %235 = vector.shape_cast %234 : vector<1x8x384xf32> to vector<8x384xf32>
    %236 = arith.truncf %228 : vector<8x128xf32> to vector<8x128xbf16>
    %cst_67 = arith.constant dense<0.000000e+00> : vector<8x384xf32>
    %237 = tpu.matmul %236, %3, %cst_67 {dimension_numbers = #tpu.dot_dimension_numbers<[1], [0], [0], [1], [0, 0, 1, 1], [], []>} : vector<8x128xbf16>, vector<128x384xbf16>, vector<8x384xf32> -> vector<8x384xf32>
    %238 = vector.extract_strided_slice %235 {offsets = [0, 0], sizes = [8, 128], strides = [1, 1]} : vector<8x384xf32> to vector<8x128xf32>
    %239 = vector.extract_strided_slice %237 {offsets = [0, 0], sizes = [8, 128], strides = [1, 1]} : vector<8x384xf32> to vector<8x128xf32>
    %240 = arith.addf %238, %239 : vector<8x128xf32>
    %241 = arith.negf %240 : vector<8x128xf32>
    %242 = math.exp %241 : vector<8x128xf32>
    %cst_68 = arith.constant 1.000000e+00 : f32
    %243 = vector.broadcast %cst_68 : f32 to vector<8x128xf32>
    %244 = arith.addf %243, %242 : vector<8x128xf32>
    %245 = arith.divf %243, %244 : vector<8x128xf32>
    %246 = vector.extract_strided_slice %235 {offsets = [0, 128], sizes = [8, 128], strides = [1, 1]} : vector<8x384xf32> to vector<8x128xf32>
    %247 = vector.extract_strided_slice %237 {offsets = [0, 128], sizes = [8, 128], strides = [1, 1]} : vector<8x384xf32> to vector<8x128xf32>
    %248 = arith.addf %246, %247 : vector<8x128xf32>
    %249 = arith.negf %248 : vector<8x128xf32>
    %250 = math.exp %249 : vector<8x128xf32>
    %cst_69 = arith.constant 1.000000e+00 : f32
    %251 = vector.broadcast %cst_69 : f32 to vector<8x128xf32>
    %252 = arith.addf %251, %250 : vector<8x128xf32>
    %253 = arith.divf %251, %252 : vector<8x128xf32>
    %254 = vector.extract_strided_slice %235 {offsets = [0, 256], sizes = [8, 128], strides = [1, 1]} : vector<8x384xf32> to vector<8x128xf32>
    %255 = vector.extract_strided_slice %237 {offsets = [0, 256], sizes = [8, 128], strides = [1, 1]} : vector<8x384xf32> to vector<8x128xf32>
    %256 = arith.addf %255, %6 : vector<8x128xf32>
    %257 = arith.mulf %245, %256 : vector<8x128xf32>
    %258 = arith.addf %254, %257 : vector<8x128xf32>
    %259 = math.tanh %258 : vector<8x128xf32>
    %cst_70 = arith.constant 1.000000e+00 : f32
    %260 = vector.broadcast %cst_70 : f32 to vector<8x128xf32>
    %261 = arith.subf %260, %253 : vector<8x128xf32>
    %262 = arith.mulf %261, %259 : vector<8x128xf32>
    %263 = arith.mulf %253, %228 : vector<8x128xf32>
    %264 = arith.addf %262, %263 : vector<8x128xf32>
    %265 = arith.index_cast %c6_i32 : i32 to index
    %c0_71 = arith.constant 0 : index
    %c0_72 = arith.constant 0 : index
    %266 = vector.load %arg11[%265, %c0_71, %c0_72] : memref<8x8x128xf32, #tpu.memory_space<vmem>>, vector<1x8x128xf32>
    %267 = vector.shape_cast %266 : vector<1x8x128xf32> to vector<8x128xf32>
    %268 = vector.shape_cast %264 : vector<8x128xf32> to vector<1x8x128xf32>
    tpu.vector_store %arg11[%265, %c0_71, %c0_72], %268 {strides = array<i32>} : memref<8x8x128xf32, #tpu.memory_space<vmem>>, vector<1x8x128xf32>,
    %c7_i32 = arith.constant 7 : i32
    %269 = arith.index_cast %c7_i32 : i32 to index
    %c0_73 = arith.constant 0 : index
    %c0_74 = arith.constant 0 : index
    %270 = vector.load %arg10[%269, %c0_73, %c0_74] : memref<8x8x384xf32, #tpu.memory_space<vmem>>, vector<1x8x384xf32>
    %271 = vector.shape_cast %270 : vector<1x8x384xf32> to vector<8x384xf32>
    %272 = arith.truncf %264 : vector<8x128xf32> to vector<8x128xbf16>
    %cst_75 = arith.constant dense<0.000000e+00> : vector<8x384xf32>
    %273 = tpu.matmul %272, %3, %cst_75 {dimension_numbers = #tpu.dot_dimension_numbers<[1], [0], [0], [1], [0, 0, 1, 1], [], []>} : vector<8x128xbf16>, vector<128x384xbf16>, vector<8x384xf32> -> vector<8x384xf32>
    %274 = vector.extract_strided_slice %271 {offsets = [0, 0], sizes = [8, 128], strides = [1, 1]} : vector<8x384xf32> to vector<8x128xf32>
    %275 = vector.extract_strided_slice %273 {offsets = [0, 0], sizes = [8, 128], strides = [1, 1]} : vector<8x384xf32> to vector<8x128xf32>
    %276 = arith.addf %274, %275 : vector<8x128xf32>
    %277 = arith.negf %276 : vector<8x128xf32>
    %278 = math.exp %277 : vector<8x128xf32>
    %cst_76 = arith.constant 1.000000e+00 : f32
    %279 = vector.broadcast %cst_76 : f32 to vector<8x128xf32>
    %280 = arith.addf %279, %278 : vector<8x128xf32>
    %281 = arith.divf %279, %280 : vector<8x128xf32>
    %282 = vector.extract_strided_slice %271 {offsets = [0, 128], sizes = [8, 128], strides = [1, 1]} : vector<8x384xf32> to vector<8x128xf32>
    %283 = vector.extract_strided_slice %273 {offsets = [0, 128], sizes = [8, 128], strides = [1, 1]} : vector<8x384xf32> to vector<8x128xf32>
    %284 = arith.addf %282, %283 : vector<8x128xf32>
    %285 = arith.negf %284 : vector<8x128xf32>
    %286 = math.exp %285 : vector<8x128xf32>
    %cst_77 = arith.constant 1.000000e+00 : f32
    %287 = vector.broadcast %cst_77 : f32 to vector<8x128xf32>
    %288 = arith.addf %287, %286 : vector<8x128xf32>
    %289 = arith.divf %287, %288 : vector<8x128xf32>
    %290 = vector.extract_strided_slice %271 {offsets = [0, 256], sizes = [8, 128], strides = [1, 1]} : vector<8x384xf32> to vector<8x128xf32>
    %291 = vector.extract_strided_slice %273 {offsets = [0, 256], sizes = [8, 128], strides = [1, 1]} : vector<8x384xf32> to vector<8x128xf32>
    %292 = arith.addf %291, %6 : vector<8x128xf32>
    %293 = arith.mulf %281, %292 : vector<8x128xf32>
    %294 = arith.addf %290, %293 : vector<8x128xf32>
    %295 = math.tanh %294 : vector<8x128xf32>
    %cst_78 = arith.constant 1.000000e+00 : f32
    %296 = vector.broadcast %cst_78 : f32 to vector<8x128xf32>
    %297 = arith.subf %296, %289 : vector<8x128xf32>
    %298 = arith.mulf %297, %295 : vector<8x128xf32>
    %299 = arith.mulf %289, %264 : vector<8x128xf32>
    %300 = arith.addf %298, %299 : vector<8x128xf32>
    %301 = arith.index_cast %c7_i32 : i32 to index
    %c0_79 = arith.constant 0 : index
    %c0_80 = arith.constant 0 : index
    %302 = vector.load %arg11[%301, %c0_79, %c0_80] : memref<8x8x128xf32, #tpu.memory_space<vmem>>, vector<1x8x128xf32>
    %303 = vector.shape_cast %302 : vector<1x8x128xf32> to vector<8x128xf32>
    %304 = vector.shape_cast %300 : vector<8x128xf32> to vector<1x8x128xf32>
    tpu.vector_store %arg11[%301, %c0_79, %c0_80], %304 {strides = array<i32>} : memref<8x8x128xf32, #tpu.memory_space<vmem>>, vector<1x8x128xf32>,
    %c8_i32 = arith.constant 8 : i32
    %c0_81 = arith.constant 0 : index
    %c0_82 = arith.constant 0 : index
    %305 = vector.load %arg9[%c0_81, %c0_82] : memref<8x128xf32, #tpu.memory_space<vmem>>, vector<8x128xf32>
    tpu.vector_store %arg9[%c0_81, %c0_82], %300 {strides = array<i32>} : memref<8x128xf32, #tpu.memory_space<vmem>>, vector<8x128xf32>,
    %c0_83 = arith.constant 0 : index
    %c0_84 = arith.constant 0 : index
    %c0_85 = arith.constant 0 : index
    %306 = vector.load %arg11[%c0_83, %c0_84, %c0_85] : memref<8x8x128xf32, #tpu.memory_space<vmem>>, vector<8x8x128xf32>
    %307 = vector.shape_cast %306 : vector<8x8x128xf32> to vector<64x128xf32>
    %308 = arith.truncf %307 : vector<64x128xf32> to vector<64x128xbf16>
    %c0_86 = arith.constant 0 : index
    %c0_87 = arith.constant 0 : index
    %309 = vector.load %arg6[%c0_86, %c0_87] : memref<128x384xbf16, #tpu.memory_space<vmem>>, vector<128x384xbf16>
    %cst_88 = arith.constant dense<0.000000e+00> : vector<64x384xf32>
    %310 = tpu.matmul %308, %309, %cst_88 {dimension_numbers = #tpu.dot_dimension_numbers<[1], [0], [0], [1], [0, 0, 1, 1], [], []>} : vector<64x128xbf16>, vector<128x384xbf16>, vector<64x384xf32> -> vector<64x384xf32>
    %c0_89 = arith.constant 0 : index
    %c0_90 = arith.constant 0 : index
    %311 = vector.load %arg7[%c0_89, %c0_90] : memref<1x384xf32, #tpu.memory_space<vmem>>, vector<1x384xf32>
    %312 = vector.broadcast %311 : vector<1x384xf32> to vector<64x384xf32>
    %313 = arith.addf %310, %312 : vector<64x384xf32>
    %314 = vector.shape_cast %313 : vector<64x384xf32> to vector<8x8x384xf32>
    %315 = arith.truncf %314 : vector<8x8x384xf32> to vector<8x8x384xbf16>
    %c0_91 = arith.constant 0 : index
    %c0_92 = arith.constant 0 : index
    %c0_93 = arith.constant 0 : index
    %316 = vector.load %arg8[%c0_91, %c0_92, %c0_93] : memref<8x8x384xbf16, #tpu.memory_space<vmem>>, vector<8x8x384xbf16>
    tpu.vector_store %arg8[%c0_91, %c0_92, %c0_93], %315 {strides = array<i32>} : memref<8x8x384xbf16, #tpu.memory_space<vmem>>, vector<8x8x384xbf16>,
    return
  }
  func.func @transform_0(%arg0: i32) -> (i32, i32, i32) {
    %c0_i32 = arith.constant 0 : i32
    %c0_i32_0 = arith.constant 0 : i32
    %c0_i32_1 = arith.constant 0 : i32
    return %arg0, %c0_i32, %c0_i32_0 : i32, i32, i32
  }
  func.func @transform_1(%arg0: i32) -> (i32, i32) {
    %c0_i32 = arith.constant 0 : i32
    %c0_i32_0 = arith.constant 0 : i32
    %c0_i32_1 = arith.constant 0 : i32
    return %c0_i32, %c0_i32_0 : i32, i32
  }
  func.func @transform_2(%arg0: i32) -> (i32, i32) {
    %c0_i32 = arith.constant 0 : i32
    %c0_i32_0 = arith.constant 0 : i32
    %c0_i32_1 = arith.constant 0 : i32
    return %c0_i32, %c0_i32_0 : i32, i32
  }
  func.func @transform_3(%arg0: i32) -> (i32, i32) {
    %c0_i32 = arith.constant 0 : i32
    %c0_i32_0 = arith.constant 0 : i32
    %c0_i32_1 = arith.constant 0 : i32
    return %c0_i32, %c0_i32_0 : i32, i32
  }
  func.func @transform_4(%arg0: i32) -> (i32, i32) {
    %c0_i32 = arith.constant 0 : i32
    %c0_i32_0 = arith.constant 0 : i32
    %c0_i32_1 = arith.constant 0 : i32
    return %c0_i32, %c0_i32_0 : i32, i32
  }
  func.func @transform_5(%arg0: i32) -> (i32, i32) {
    %c0_i32 = arith.constant 0 : i32
    %c0_i32_0 = arith.constant 0 : i32
    %c0_i32_1 = arith.constant 0 : i32
    return %c0_i32, %c0_i32_0 : i32, i32
  }
  func.func @transform_6(%arg0: i32) -> (i32, i32) {
    %c0_i32 = arith.constant 0 : i32
    %c0_i32_0 = arith.constant 0 : i32
    %c0_i32_1 = arith.constant 0 : i32
    return %c0_i32, %c0_i32_0 : i32, i32
  }
  func.func @transform_7(%arg0: i32) -> (i32, i32, i32) {
    %c0_i32 = arith.constant 0 : i32
    %c0_i32_0 = arith.constant 0 : i32
    %c0_i32_1 = arith.constant 0 : i32
    return %arg0, %c0_i32, %c0_i32_0 : i32, i32, i32
  }
}

module attributes {stable_mosaic.version = 11 : i64} {
  func.func @_gru_layer_kernel(%arg0: i32, %arg1: memref<8x8x384xbf16, #tpu.memory_space<vmem>>, %arg2: memref<128x384xbf16, #tpu.memory_space<vmem>>, %arg3: memref<1x128xf32, #tpu.memory_space<vmem>>, %arg4: memref<128x128xbf16, #tpu.memory_space<vmem>>, %arg5: memref<1x128xf32, #tpu.memory_space<vmem>>, %arg6: memref<8x128xf32, #tpu.memory_space<vmem>>, %arg7: memref<8x128xf32, #tpu.memory_space<vmem>>) attributes {dimension_semantics = [#tpu.dimension_semantics<arbitrary>], iteration_bounds = array<i64: 1>, scalar_prefetch = 0 : i64, scratch_operands = 1 : i64, tpu.core_type = #tpu.core_type<tc>, window_params = [{transform_indices = @transform_0, window_bounds = array<i64: 8, 8, 384>}, {pipeline_mode = #tpu.pipeline_mode<synchronous>, transform_indices = @transform_1, window_bounds = array<i64: 128, 384>}, {pipeline_mode = #tpu.pipeline_mode<synchronous>, transform_indices = @transform_2, window_bounds = array<i64: 1, 128>}, {pipeline_mode = #tpu.pipeline_mode<synchronous>, transform_indices = @transform_3, window_bounds = array<i64: 128, 128>}, {pipeline_mode = #tpu.pipeline_mode<synchronous>, transform_indices = @transform_4, window_bounds = array<i64: 1, 128>}, {pipeline_mode = #tpu.pipeline_mode<synchronous>, transform_indices = @transform_5, window_bounds = array<i64: 8, 128>}]} {
    %c0_i32 = arith.constant 0 : i32
    %0 = arith.cmpi eq, %arg0, %c0_i32 : i32
    %1 = arith.extui %0 : i1 to i32
    %c0_i32_0 = arith.constant 0 : i32
    %2 = arith.cmpi ne, %1, %c0_i32_0 : i32
    scf.if %2 {
      %cst_58 = arith.constant 0.000000e+00 : f32
      %276 = vector.broadcast %cst_58 : f32 to vector<8x128xf32>
      %c0_59 = arith.constant 0 : index
      %c0_60 = arith.constant 0 : index
      %277 = vector.load %arg7[%c0_59, %c0_60] : memref<8x128xf32, #tpu.memory_space<vmem>>, vector<8x128xf32>
      tpu.vector_store %arg7[%c0_59, %c0_60], %276 {strides = array<i32>} : memref<8x128xf32, #tpu.memory_space<vmem>>, vector<8x128xf32>,
    } else {
    }
    %c0 = arith.constant 0 : index
    %c0_1 = arith.constant 0 : index
    %3 = vector.load %arg2[%c0, %c0_1] : memref<128x384xbf16, #tpu.memory_space<vmem>>, vector<128x384xbf16>
    %c0_2 = arith.constant 0 : index
    %c0_3 = arith.constant 0 : index
    %4 = vector.load %arg3[%c0_2, %c0_3] : memref<1x128xf32, #tpu.memory_space<vmem>>, vector<1x128xf32>
    %5 = vector.shape_cast %4 : vector<1x128xf32> to vector<1x128xf32>
    %6 = vector.broadcast %5 : vector<1x128xf32> to vector<8x128xf32>
    %c0_4 = arith.constant 0 : index
    %c0_5 = arith.constant 0 : index
    %7 = vector.load %arg7[%c0_4, %c0_5] : memref<8x128xf32, #tpu.memory_space<vmem>>, vector<8x128xf32>
    %c0_i32_6 = arith.constant 0 : i32
    %8 = arith.index_cast %c0_i32_6 : i32 to index
    %c0_7 = arith.constant 0 : index
    %c0_8 = arith.constant 0 : index
    %9 = vector.load %arg1[%8, %c0_7, %c0_8] : memref<8x8x384xbf16, #tpu.memory_space<vmem>>, vector<1x8x384xbf16>
    %10 = vector.shape_cast %9 : vector<1x8x384xbf16> to vector<8x384xbf16>
    %11 = arith.extf %10 : vector<8x384xbf16> to vector<8x384xf32>
    %12 = arith.truncf %7 : vector<8x128xf32> to vector<8x128xbf16>
    %cst = arith.constant dense<0.000000e+00> : vector<8x384xf32>
    %13 = tpu.matmul %12, %3, %cst {dimension_numbers = #tpu.dot_dimension_numbers<[1], [0], [0], [1], [0, 0, 1, 1], [], []>} : vector<8x128xbf16>, vector<128x384xbf16>, vector<8x384xf32> -> vector<8x384xf32>
    %14 = vector.extract_strided_slice %11 {offsets = [0, 0], sizes = [8, 128], strides = [1, 1]} : vector<8x384xf32> to vector<8x128xf32>
    %15 = vector.extract_strided_slice %13 {offsets = [0, 0], sizes = [8, 128], strides = [1, 1]} : vector<8x384xf32> to vector<8x128xf32>
    %16 = arith.addf %14, %15 : vector<8x128xf32>
    %17 = arith.negf %16 : vector<8x128xf32>
    %18 = math.exp %17 : vector<8x128xf32>
    %cst_9 = arith.constant 1.000000e+00 : f32
    %19 = vector.broadcast %cst_9 : f32 to vector<8x128xf32>
    %20 = arith.addf %19, %18 : vector<8x128xf32>
    %21 = arith.divf %19, %20 : vector<8x128xf32>
    %22 = vector.extract_strided_slice %11 {offsets = [0, 128], sizes = [8, 128], strides = [1, 1]} : vector<8x384xf32> to vector<8x128xf32>
    %23 = vector.extract_strided_slice %13 {offsets = [0, 128], sizes = [8, 128], strides = [1, 1]} : vector<8x384xf32> to vector<8x128xf32>
    %24 = arith.addf %22, %23 : vector<8x128xf32>
    %25 = arith.negf %24 : vector<8x128xf32>
    %26 = math.exp %25 : vector<8x128xf32>
    %cst_10 = arith.constant 1.000000e+00 : f32
    %27 = vector.broadcast %cst_10 : f32 to vector<8x128xf32>
    %28 = arith.addf %27, %26 : vector<8x128xf32>
    %29 = arith.divf %27, %28 : vector<8x128xf32>
    %30 = vector.extract_strided_slice %11 {offsets = [0, 256], sizes = [8, 128], strides = [1, 1]} : vector<8x384xf32> to vector<8x128xf32>
    %31 = vector.extract_strided_slice %13 {offsets = [0, 256], sizes = [8, 128], strides = [1, 1]} : vector<8x384xf32> to vector<8x128xf32>
    %32 = arith.addf %31, %6 : vector<8x128xf32>
    %33 = arith.mulf %21, %32 : vector<8x128xf32>
    %34 = arith.addf %30, %33 : vector<8x128xf32>
    %35 = math.tanh %34 : vector<8x128xf32>
    %cst_11 = arith.constant 1.000000e+00 : f32
    %36 = vector.broadcast %cst_11 : f32 to vector<8x128xf32>
    %37 = arith.subf %36, %29 : vector<8x128xf32>
    %38 = arith.mulf %37, %35 : vector<8x128xf32>
    %39 = arith.mulf %29, %7 : vector<8x128xf32>
    %40 = arith.addf %38, %39 : vector<8x128xf32>
    %c1_i32 = arith.constant 1 : i32
    %41 = arith.index_cast %c1_i32 : i32 to index
    %c0_12 = arith.constant 0 : index
    %c0_13 = arith.constant 0 : index
    %42 = vector.load %arg1[%41, %c0_12, %c0_13] : memref<8x8x384xbf16, #tpu.memory_space<vmem>>, vector<1x8x384xbf16>
    %43 = vector.shape_cast %42 : vector<1x8x384xbf16> to vector<8x384xbf16>
    %44 = arith.extf %43 : vector<8x384xbf16> to vector<8x384xf32>
    %45 = arith.truncf %40 : vector<8x128xf32> to vector<8x128xbf16>
    %cst_14 = arith.constant dense<0.000000e+00> : vector<8x384xf32>
    %46 = tpu.matmul %45, %3, %cst_14 {dimension_numbers = #tpu.dot_dimension_numbers<[1], [0], [0], [1], [0, 0, 1, 1], [], []>} : vector<8x128xbf16>, vector<128x384xbf16>, vector<8x384xf32> -> vector<8x384xf32>
    %47 = vector.extract_strided_slice %44 {offsets = [0, 0], sizes = [8, 128], strides = [1, 1]} : vector<8x384xf32> to vector<8x128xf32>
    %48 = vector.extract_strided_slice %46 {offsets = [0, 0], sizes = [8, 128], strides = [1, 1]} : vector<8x384xf32> to vector<8x128xf32>
    %49 = arith.addf %47, %48 : vector<8x128xf32>
    %50 = arith.negf %49 : vector<8x128xf32>
    %51 = math.exp %50 : vector<8x128xf32>
    %cst_15 = arith.constant 1.000000e+00 : f32
    %52 = vector.broadcast %cst_15 : f32 to vector<8x128xf32>
    %53 = arith.addf %52, %51 : vector<8x128xf32>
    %54 = arith.divf %52, %53 : vector<8x128xf32>
    %55 = vector.extract_strided_slice %44 {offsets = [0, 128], sizes = [8, 128], strides = [1, 1]} : vector<8x384xf32> to vector<8x128xf32>
    %56 = vector.extract_strided_slice %46 {offsets = [0, 128], sizes = [8, 128], strides = [1, 1]} : vector<8x384xf32> to vector<8x128xf32>
    %57 = arith.addf %55, %56 : vector<8x128xf32>
    %58 = arith.negf %57 : vector<8x128xf32>
    %59 = math.exp %58 : vector<8x128xf32>
    %cst_16 = arith.constant 1.000000e+00 : f32
    %60 = vector.broadcast %cst_16 : f32 to vector<8x128xf32>
    %61 = arith.addf %60, %59 : vector<8x128xf32>
    %62 = arith.divf %60, %61 : vector<8x128xf32>
    %63 = vector.extract_strided_slice %44 {offsets = [0, 256], sizes = [8, 128], strides = [1, 1]} : vector<8x384xf32> to vector<8x128xf32>
    %64 = vector.extract_strided_slice %46 {offsets = [0, 256], sizes = [8, 128], strides = [1, 1]} : vector<8x384xf32> to vector<8x128xf32>
    %65 = arith.addf %64, %6 : vector<8x128xf32>
    %66 = arith.mulf %54, %65 : vector<8x128xf32>
    %67 = arith.addf %63, %66 : vector<8x128xf32>
    %68 = math.tanh %67 : vector<8x128xf32>
    %cst_17 = arith.constant 1.000000e+00 : f32
    %69 = vector.broadcast %cst_17 : f32 to vector<8x128xf32>
    %70 = arith.subf %69, %62 : vector<8x128xf32>
    %71 = arith.mulf %70, %68 : vector<8x128xf32>
    %72 = arith.mulf %62, %40 : vector<8x128xf32>
    %73 = arith.addf %71, %72 : vector<8x128xf32>
    %c2_i32 = arith.constant 2 : i32
    %74 = arith.index_cast %c2_i32 : i32 to index
    %c0_18 = arith.constant 0 : index
    %c0_19 = arith.constant 0 : index
    %75 = vector.load %arg1[%74, %c0_18, %c0_19] : memref<8x8x384xbf16, #tpu.memory_space<vmem>>, vector<1x8x384xbf16>
    %76 = vector.shape_cast %75 : vector<1x8x384xbf16> to vector<8x384xbf16>
    %77 = arith.extf %76 : vector<8x384xbf16> to vector<8x384xf32>
    %78 = arith.truncf %73 : vector<8x128xf32> to vector<8x128xbf16>
    %cst_20 = arith.constant dense<0.000000e+00> : vector<8x384xf32>
    %79 = tpu.matmul %78, %3, %cst_20 {dimension_numbers = #tpu.dot_dimension_numbers<[1], [0], [0], [1], [0, 0, 1, 1], [], []>} : vector<8x128xbf16>, vector<128x384xbf16>, vector<8x384xf32> -> vector<8x384xf32>
    %80 = vector.extract_strided_slice %77 {offsets = [0, 0], sizes = [8, 128], strides = [1, 1]} : vector<8x384xf32> to vector<8x128xf32>
    %81 = vector.extract_strided_slice %79 {offsets = [0, 0], sizes = [8, 128], strides = [1, 1]} : vector<8x384xf32> to vector<8x128xf32>
    %82 = arith.addf %80, %81 : vector<8x128xf32>
    %83 = arith.negf %82 : vector<8x128xf32>
    %84 = math.exp %83 : vector<8x128xf32>
    %cst_21 = arith.constant 1.000000e+00 : f32
    %85 = vector.broadcast %cst_21 : f32 to vector<8x128xf32>
    %86 = arith.addf %85, %84 : vector<8x128xf32>
    %87 = arith.divf %85, %86 : vector<8x128xf32>
    %88 = vector.extract_strided_slice %77 {offsets = [0, 128], sizes = [8, 128], strides = [1, 1]} : vector<8x384xf32> to vector<8x128xf32>
    %89 = vector.extract_strided_slice %79 {offsets = [0, 128], sizes = [8, 128], strides = [1, 1]} : vector<8x384xf32> to vector<8x128xf32>
    %90 = arith.addf %88, %89 : vector<8x128xf32>
    %91 = arith.negf %90 : vector<8x128xf32>
    %92 = math.exp %91 : vector<8x128xf32>
    %cst_22 = arith.constant 1.000000e+00 : f32
    %93 = vector.broadcast %cst_22 : f32 to vector<8x128xf32>
    %94 = arith.addf %93, %92 : vector<8x128xf32>
    %95 = arith.divf %93, %94 : vector<8x128xf32>
    %96 = vector.extract_strided_slice %77 {offsets = [0, 256], sizes = [8, 128], strides = [1, 1]} : vector<8x384xf32> to vector<8x128xf32>
    %97 = vector.extract_strided_slice %79 {offsets = [0, 256], sizes = [8, 128], strides = [1, 1]} : vector<8x384xf32> to vector<8x128xf32>
    %98 = arith.addf %97, %6 : vector<8x128xf32>
    %99 = arith.mulf %87, %98 : vector<8x128xf32>
    %100 = arith.addf %96, %99 : vector<8x128xf32>
    %101 = math.tanh %100 : vector<8x128xf32>
    %cst_23 = arith.constant 1.000000e+00 : f32
    %102 = vector.broadcast %cst_23 : f32 to vector<8x128xf32>
    %103 = arith.subf %102, %95 : vector<8x128xf32>
    %104 = arith.mulf %103, %101 : vector<8x128xf32>
    %105 = arith.mulf %95, %73 : vector<8x128xf32>
    %106 = arith.addf %104, %105 : vector<8x128xf32>
    %c3_i32 = arith.constant 3 : i32
    %107 = arith.index_cast %c3_i32 : i32 to index
    %c0_24 = arith.constant 0 : index
    %c0_25 = arith.constant 0 : index
    %108 = vector.load %arg1[%107, %c0_24, %c0_25] : memref<8x8x384xbf16, #tpu.memory_space<vmem>>, vector<1x8x384xbf16>
    %109 = vector.shape_cast %108 : vector<1x8x384xbf16> to vector<8x384xbf16>
    %110 = arith.extf %109 : vector<8x384xbf16> to vector<8x384xf32>
    %111 = arith.truncf %106 : vector<8x128xf32> to vector<8x128xbf16>
    %cst_26 = arith.constant dense<0.000000e+00> : vector<8x384xf32>
    %112 = tpu.matmul %111, %3, %cst_26 {dimension_numbers = #tpu.dot_dimension_numbers<[1], [0], [0], [1], [0, 0, 1, 1], [], []>} : vector<8x128xbf16>, vector<128x384xbf16>, vector<8x384xf32> -> vector<8x384xf32>
    %113 = vector.extract_strided_slice %110 {offsets = [0, 0], sizes = [8, 128], strides = [1, 1]} : vector<8x384xf32> to vector<8x128xf32>
    %114 = vector.extract_strided_slice %112 {offsets = [0, 0], sizes = [8, 128], strides = [1, 1]} : vector<8x384xf32> to vector<8x128xf32>
    %115 = arith.addf %113, %114 : vector<8x128xf32>
    %116 = arith.negf %115 : vector<8x128xf32>
    %117 = math.exp %116 : vector<8x128xf32>
    %cst_27 = arith.constant 1.000000e+00 : f32
    %118 = vector.broadcast %cst_27 : f32 to vector<8x128xf32>
    %119 = arith.addf %118, %117 : vector<8x128xf32>
    %120 = arith.divf %118, %119 : vector<8x128xf32>
    %121 = vector.extract_strided_slice %110 {offsets = [0, 128], sizes = [8, 128], strides = [1, 1]} : vector<8x384xf32> to vector<8x128xf32>
    %122 = vector.extract_strided_slice %112 {offsets = [0, 128], sizes = [8, 128], strides = [1, 1]} : vector<8x384xf32> to vector<8x128xf32>
    %123 = arith.addf %121, %122 : vector<8x128xf32>
    %124 = arith.negf %123 : vector<8x128xf32>
    %125 = math.exp %124 : vector<8x128xf32>
    %cst_28 = arith.constant 1.000000e+00 : f32
    %126 = vector.broadcast %cst_28 : f32 to vector<8x128xf32>
    %127 = arith.addf %126, %125 : vector<8x128xf32>
    %128 = arith.divf %126, %127 : vector<8x128xf32>
    %129 = vector.extract_strided_slice %110 {offsets = [0, 256], sizes = [8, 128], strides = [1, 1]} : vector<8x384xf32> to vector<8x128xf32>
    %130 = vector.extract_strided_slice %112 {offsets = [0, 256], sizes = [8, 128], strides = [1, 1]} : vector<8x384xf32> to vector<8x128xf32>
    %131 = arith.addf %130, %6 : vector<8x128xf32>
    %132 = arith.mulf %120, %131 : vector<8x128xf32>
    %133 = arith.addf %129, %132 : vector<8x128xf32>
    %134 = math.tanh %133 : vector<8x128xf32>
    %cst_29 = arith.constant 1.000000e+00 : f32
    %135 = vector.broadcast %cst_29 : f32 to vector<8x128xf32>
    %136 = arith.subf %135, %128 : vector<8x128xf32>
    %137 = arith.mulf %136, %134 : vector<8x128xf32>
    %138 = arith.mulf %128, %106 : vector<8x128xf32>
    %139 = arith.addf %137, %138 : vector<8x128xf32>
    %c4_i32 = arith.constant 4 : i32
    %140 = arith.index_cast %c4_i32 : i32 to index
    %c0_30 = arith.constant 0 : index
    %c0_31 = arith.constant 0 : index
    %141 = vector.load %arg1[%140, %c0_30, %c0_31] : memref<8x8x384xbf16, #tpu.memory_space<vmem>>, vector<1x8x384xbf16>
    %142 = vector.shape_cast %141 : vector<1x8x384xbf16> to vector<8x384xbf16>
    %143 = arith.extf %142 : vector<8x384xbf16> to vector<8x384xf32>
    %144 = arith.truncf %139 : vector<8x128xf32> to vector<8x128xbf16>
    %cst_32 = arith.constant dense<0.000000e+00> : vector<8x384xf32>
    %145 = tpu.matmul %144, %3, %cst_32 {dimension_numbers = #tpu.dot_dimension_numbers<[1], [0], [0], [1], [0, 0, 1, 1], [], []>} : vector<8x128xbf16>, vector<128x384xbf16>, vector<8x384xf32> -> vector<8x384xf32>
    %146 = vector.extract_strided_slice %143 {offsets = [0, 0], sizes = [8, 128], strides = [1, 1]} : vector<8x384xf32> to vector<8x128xf32>
    %147 = vector.extract_strided_slice %145 {offsets = [0, 0], sizes = [8, 128], strides = [1, 1]} : vector<8x384xf32> to vector<8x128xf32>
    %148 = arith.addf %146, %147 : vector<8x128xf32>
    %149 = arith.negf %148 : vector<8x128xf32>
    %150 = math.exp %149 : vector<8x128xf32>
    %cst_33 = arith.constant 1.000000e+00 : f32
    %151 = vector.broadcast %cst_33 : f32 to vector<8x128xf32>
    %152 = arith.addf %151, %150 : vector<8x128xf32>
    %153 = arith.divf %151, %152 : vector<8x128xf32>
    %154 = vector.extract_strided_slice %143 {offsets = [0, 128], sizes = [8, 128], strides = [1, 1]} : vector<8x384xf32> to vector<8x128xf32>
    %155 = vector.extract_strided_slice %145 {offsets = [0, 128], sizes = [8, 128], strides = [1, 1]} : vector<8x384xf32> to vector<8x128xf32>
    %156 = arith.addf %154, %155 : vector<8x128xf32>
    %157 = arith.negf %156 : vector<8x128xf32>
    %158 = math.exp %157 : vector<8x128xf32>
    %cst_34 = arith.constant 1.000000e+00 : f32
    %159 = vector.broadcast %cst_34 : f32 to vector<8x128xf32>
    %160 = arith.addf %159, %158 : vector<8x128xf32>
    %161 = arith.divf %159, %160 : vector<8x128xf32>
    %162 = vector.extract_strided_slice %143 {offsets = [0, 256], sizes = [8, 128], strides = [1, 1]} : vector<8x384xf32> to vector<8x128xf32>
    %163 = vector.extract_strided_slice %145 {offsets = [0, 256], sizes = [8, 128], strides = [1, 1]} : vector<8x384xf32> to vector<8x128xf32>
    %164 = arith.addf %163, %6 : vector<8x128xf32>
    %165 = arith.mulf %153, %164 : vector<8x128xf32>
    %166 = arith.addf %162, %165 : vector<8x128xf32>
    %167 = math.tanh %166 : vector<8x128xf32>
    %cst_35 = arith.constant 1.000000e+00 : f32
    %168 = vector.broadcast %cst_35 : f32 to vector<8x128xf32>
    %169 = arith.subf %168, %161 : vector<8x128xf32>
    %170 = arith.mulf %169, %167 : vector<8x128xf32>
    %171 = arith.mulf %161, %139 : vector<8x128xf32>
    %172 = arith.addf %170, %171 : vector<8x128xf32>
    %c5_i32 = arith.constant 5 : i32
    %173 = arith.index_cast %c5_i32 : i32 to index
    %c0_36 = arith.constant 0 : index
    %c0_37 = arith.constant 0 : index
    %174 = vector.load %arg1[%173, %c0_36, %c0_37] : memref<8x8x384xbf16, #tpu.memory_space<vmem>>, vector<1x8x384xbf16>
    %175 = vector.shape_cast %174 : vector<1x8x384xbf16> to vector<8x384xbf16>
    %176 = arith.extf %175 : vector<8x384xbf16> to vector<8x384xf32>
    %177 = arith.truncf %172 : vector<8x128xf32> to vector<8x128xbf16>
    %cst_38 = arith.constant dense<0.000000e+00> : vector<8x384xf32>
    %178 = tpu.matmul %177, %3, %cst_38 {dimension_numbers = #tpu.dot_dimension_numbers<[1], [0], [0], [1], [0, 0, 1, 1], [], []>} : vector<8x128xbf16>, vector<128x384xbf16>, vector<8x384xf32> -> vector<8x384xf32>
    %179 = vector.extract_strided_slice %176 {offsets = [0, 0], sizes = [8, 128], strides = [1, 1]} : vector<8x384xf32> to vector<8x128xf32>
    %180 = vector.extract_strided_slice %178 {offsets = [0, 0], sizes = [8, 128], strides = [1, 1]} : vector<8x384xf32> to vector<8x128xf32>
    %181 = arith.addf %179, %180 : vector<8x128xf32>
    %182 = arith.negf %181 : vector<8x128xf32>
    %183 = math.exp %182 : vector<8x128xf32>
    %cst_39 = arith.constant 1.000000e+00 : f32
    %184 = vector.broadcast %cst_39 : f32 to vector<8x128xf32>
    %185 = arith.addf %184, %183 : vector<8x128xf32>
    %186 = arith.divf %184, %185 : vector<8x128xf32>
    %187 = vector.extract_strided_slice %176 {offsets = [0, 128], sizes = [8, 128], strides = [1, 1]} : vector<8x384xf32> to vector<8x128xf32>
    %188 = vector.extract_strided_slice %178 {offsets = [0, 128], sizes = [8, 128], strides = [1, 1]} : vector<8x384xf32> to vector<8x128xf32>
    %189 = arith.addf %187, %188 : vector<8x128xf32>
    %190 = arith.negf %189 : vector<8x128xf32>
    %191 = math.exp %190 : vector<8x128xf32>
    %cst_40 = arith.constant 1.000000e+00 : f32
    %192 = vector.broadcast %cst_40 : f32 to vector<8x128xf32>
    %193 = arith.addf %192, %191 : vector<8x128xf32>
    %194 = arith.divf %192, %193 : vector<8x128xf32>
    %195 = vector.extract_strided_slice %176 {offsets = [0, 256], sizes = [8, 128], strides = [1, 1]} : vector<8x384xf32> to vector<8x128xf32>
    %196 = vector.extract_strided_slice %178 {offsets = [0, 256], sizes = [8, 128], strides = [1, 1]} : vector<8x384xf32> to vector<8x128xf32>
    %197 = arith.addf %196, %6 : vector<8x128xf32>
    %198 = arith.mulf %186, %197 : vector<8x128xf32>
    %199 = arith.addf %195, %198 : vector<8x128xf32>
    %200 = math.tanh %199 : vector<8x128xf32>
    %cst_41 = arith.constant 1.000000e+00 : f32
    %201 = vector.broadcast %cst_41 : f32 to vector<8x128xf32>
    %202 = arith.subf %201, %194 : vector<8x128xf32>
    %203 = arith.mulf %202, %200 : vector<8x128xf32>
    %204 = arith.mulf %194, %172 : vector<8x128xf32>
    %205 = arith.addf %203, %204 : vector<8x128xf32>
    %c6_i32 = arith.constant 6 : i32
    %206 = arith.index_cast %c6_i32 : i32 to index
    %c0_42 = arith.constant 0 : index
    %c0_43 = arith.constant 0 : index
    %207 = vector.load %arg1[%206, %c0_42, %c0_43] : memref<8x8x384xbf16, #tpu.memory_space<vmem>>, vector<1x8x384xbf16>
    %208 = vector.shape_cast %207 : vector<1x8x384xbf16> to vector<8x384xbf16>
    %209 = arith.extf %208 : vector<8x384xbf16> to vector<8x384xf32>
    %210 = arith.truncf %205 : vector<8x128xf32> to vector<8x128xbf16>
    %cst_44 = arith.constant dense<0.000000e+00> : vector<8x384xf32>
    %211 = tpu.matmul %210, %3, %cst_44 {dimension_numbers = #tpu.dot_dimension_numbers<[1], [0], [0], [1], [0, 0, 1, 1], [], []>} : vector<8x128xbf16>, vector<128x384xbf16>, vector<8x384xf32> -> vector<8x384xf32>
    %212 = vector.extract_strided_slice %209 {offsets = [0, 0], sizes = [8, 128], strides = [1, 1]} : vector<8x384xf32> to vector<8x128xf32>
    %213 = vector.extract_strided_slice %211 {offsets = [0, 0], sizes = [8, 128], strides = [1, 1]} : vector<8x384xf32> to vector<8x128xf32>
    %214 = arith.addf %212, %213 : vector<8x128xf32>
    %215 = arith.negf %214 : vector<8x128xf32>
    %216 = math.exp %215 : vector<8x128xf32>
    %cst_45 = arith.constant 1.000000e+00 : f32
    %217 = vector.broadcast %cst_45 : f32 to vector<8x128xf32>
    %218 = arith.addf %217, %216 : vector<8x128xf32>
    %219 = arith.divf %217, %218 : vector<8x128xf32>
    %220 = vector.extract_strided_slice %209 {offsets = [0, 128], sizes = [8, 128], strides = [1, 1]} : vector<8x384xf32> to vector<8x128xf32>
    %221 = vector.extract_strided_slice %211 {offsets = [0, 128], sizes = [8, 128], strides = [1, 1]} : vector<8x384xf32> to vector<8x128xf32>
    %222 = arith.addf %220, %221 : vector<8x128xf32>
    %223 = arith.negf %222 : vector<8x128xf32>
    %224 = math.exp %223 : vector<8x128xf32>
    %cst_46 = arith.constant 1.000000e+00 : f32
    %225 = vector.broadcast %cst_46 : f32 to vector<8x128xf32>
    %226 = arith.addf %225, %224 : vector<8x128xf32>
    %227 = arith.divf %225, %226 : vector<8x128xf32>
    %228 = vector.extract_strided_slice %209 {offsets = [0, 256], sizes = [8, 128], strides = [1, 1]} : vector<8x384xf32> to vector<8x128xf32>
    %229 = vector.extract_strided_slice %211 {offsets = [0, 256], sizes = [8, 128], strides = [1, 1]} : vector<8x384xf32> to vector<8x128xf32>
    %230 = arith.addf %229, %6 : vector<8x128xf32>
    %231 = arith.mulf %219, %230 : vector<8x128xf32>
    %232 = arith.addf %228, %231 : vector<8x128xf32>
    %233 = math.tanh %232 : vector<8x128xf32>
    %cst_47 = arith.constant 1.000000e+00 : f32
    %234 = vector.broadcast %cst_47 : f32 to vector<8x128xf32>
    %235 = arith.subf %234, %227 : vector<8x128xf32>
    %236 = arith.mulf %235, %233 : vector<8x128xf32>
    %237 = arith.mulf %227, %205 : vector<8x128xf32>
    %238 = arith.addf %236, %237 : vector<8x128xf32>
    %c7_i32 = arith.constant 7 : i32
    %239 = arith.index_cast %c7_i32 : i32 to index
    %c0_48 = arith.constant 0 : index
    %c0_49 = arith.constant 0 : index
    %240 = vector.load %arg1[%239, %c0_48, %c0_49] : memref<8x8x384xbf16, #tpu.memory_space<vmem>>, vector<1x8x384xbf16>
    %241 = vector.shape_cast %240 : vector<1x8x384xbf16> to vector<8x384xbf16>
    %242 = arith.extf %241 : vector<8x384xbf16> to vector<8x384xf32>
    %243 = arith.truncf %238 : vector<8x128xf32> to vector<8x128xbf16>
    %cst_50 = arith.constant dense<0.000000e+00> : vector<8x384xf32>
    %244 = tpu.matmul %243, %3, %cst_50 {dimension_numbers = #tpu.dot_dimension_numbers<[1], [0], [0], [1], [0, 0, 1, 1], [], []>} : vector<8x128xbf16>, vector<128x384xbf16>, vector<8x384xf32> -> vector<8x384xf32>
    %245 = vector.extract_strided_slice %242 {offsets = [0, 0], sizes = [8, 128], strides = [1, 1]} : vector<8x384xf32> to vector<8x128xf32>
    %246 = vector.extract_strided_slice %244 {offsets = [0, 0], sizes = [8, 128], strides = [1, 1]} : vector<8x384xf32> to vector<8x128xf32>
    %247 = arith.addf %245, %246 : vector<8x128xf32>
    %248 = arith.negf %247 : vector<8x128xf32>
    %249 = math.exp %248 : vector<8x128xf32>
    %cst_51 = arith.constant 1.000000e+00 : f32
    %250 = vector.broadcast %cst_51 : f32 to vector<8x128xf32>
    %251 = arith.addf %250, %249 : vector<8x128xf32>
    %252 = arith.divf %250, %251 : vector<8x128xf32>
    %253 = vector.extract_strided_slice %242 {offsets = [0, 128], sizes = [8, 128], strides = [1, 1]} : vector<8x384xf32> to vector<8x128xf32>
    %254 = vector.extract_strided_slice %244 {offsets = [0, 128], sizes = [8, 128], strides = [1, 1]} : vector<8x384xf32> to vector<8x128xf32>
    %255 = arith.addf %253, %254 : vector<8x128xf32>
    %256 = arith.negf %255 : vector<8x128xf32>
    %257 = math.exp %256 : vector<8x128xf32>
    %cst_52 = arith.constant 1.000000e+00 : f32
    %258 = vector.broadcast %cst_52 : f32 to vector<8x128xf32>
    %259 = arith.addf %258, %257 : vector<8x128xf32>
    %260 = arith.divf %258, %259 : vector<8x128xf32>
    %261 = vector.extract_strided_slice %242 {offsets = [0, 256], sizes = [8, 128], strides = [1, 1]} : vector<8x384xf32> to vector<8x128xf32>
    %262 = vector.extract_strided_slice %244 {offsets = [0, 256], sizes = [8, 128], strides = [1, 1]} : vector<8x384xf32> to vector<8x128xf32>
    %263 = arith.addf %262, %6 : vector<8x128xf32>
    %264 = arith.mulf %252, %263 : vector<8x128xf32>
    %265 = arith.addf %261, %264 : vector<8x128xf32>
    %266 = math.tanh %265 : vector<8x128xf32>
    %cst_53 = arith.constant 1.000000e+00 : f32
    %267 = vector.broadcast %cst_53 : f32 to vector<8x128xf32>
    %268 = arith.subf %267, %260 : vector<8x128xf32>
    %269 = arith.mulf %268, %266 : vector<8x128xf32>
    %270 = arith.mulf %260, %238 : vector<8x128xf32>
    %271 = arith.addf %269, %270 : vector<8x128xf32>
    %c8_i32 = arith.constant 8 : i32
    %c0_54 = arith.constant 0 : index
    %c0_55 = arith.constant 0 : index
    %272 = vector.load %arg7[%c0_54, %c0_55] : memref<8x128xf32, #tpu.memory_space<vmem>>, vector<8x128xf32>
    tpu.vector_store %arg7[%c0_54, %c0_55], %271 {strides = array<i32>} : memref<8x128xf32, #tpu.memory_space<vmem>>, vector<8x128xf32>,
    %c0_i32_56 = arith.constant 0 : i32
    %273 = arith.cmpi eq, %arg0, %c0_i32_56 : i32
    %274 = arith.extui %273 : i1 to i32
    %c0_i32_57 = arith.constant 0 : i32
    %275 = arith.cmpi ne, %274, %c0_i32_57 : i32
    scf.if %275 {
      %276 = arith.truncf %271 : vector<8x128xf32> to vector<8x128xbf16>
      %c0_58 = arith.constant 0 : index
      %c0_59 = arith.constant 0 : index
      %277 = vector.load %arg4[%c0_58, %c0_59] : memref<128x128xbf16, #tpu.memory_space<vmem>>, vector<128x128xbf16>
      %cst_60 = arith.constant dense<0.000000e+00> : vector<8x128xf32>
      %278 = tpu.matmul %276, %277, %cst_60 {dimension_numbers = #tpu.dot_dimension_numbers<[1], [0], [0], [1], [0, 0, 1, 1], [], []>} : vector<8x128xbf16>, vector<128x128xbf16>, vector<8x128xf32> -> vector<8x128xf32>
      %c0_61 = arith.constant 0 : index
      %c0_62 = arith.constant 0 : index
      %279 = vector.load %arg5[%c0_61, %c0_62] : memref<1x128xf32, #tpu.memory_space<vmem>>, vector<1x128xf32>
      %280 = vector.broadcast %279 : vector<1x128xf32> to vector<8x128xf32>
      %281 = arith.addf %278, %280 : vector<8x128xf32>
      %c0_63 = arith.constant 0 : index
      %c0_64 = arith.constant 0 : index
      %282 = vector.load %arg6[%c0_63, %c0_64] : memref<8x128xf32, #tpu.memory_space<vmem>>, vector<8x128xf32>
      tpu.vector_store %arg6[%c0_63, %c0_64], %281 {strides = array<i32>} : memref<8x128xf32, #tpu.memory_space<vmem>>, vector<8x128xf32>,
    } else {
    }
    return
  }
  func.func @transform_0(%arg0: i32) -> (i32, i32, i32) {
    %c0_i32 = arith.constant 0 : i32
    %c0_i32_0 = arith.constant 0 : i32
    %c0_i32_1 = arith.constant 0 : i32
    return %arg0, %c0_i32, %c0_i32_0 : i32, i32, i32
  }
  func.func @transform_1(%arg0: i32) -> (i32, i32) {
    %c0_i32 = arith.constant 0 : i32
    %c0_i32_0 = arith.constant 0 : i32
    %c0_i32_1 = arith.constant 0 : i32
    return %c0_i32, %c0_i32_0 : i32, i32
  }
  func.func @transform_2(%arg0: i32) -> (i32, i32) {
    %c0_i32 = arith.constant 0 : i32
    %c0_i32_0 = arith.constant 0 : i32
    %c0_i32_1 = arith.constant 0 : i32
    return %c0_i32, %c0_i32_0 : i32, i32
  }
  func.func @transform_3(%arg0: i32) -> (i32, i32) {
    %c0_i32 = arith.constant 0 : i32
    %c0_i32_0 = arith.constant 0 : i32
    %c0_i32_1 = arith.constant 0 : i32
    return %c0_i32, %c0_i32_0 : i32, i32
  }
  func.func @transform_4(%arg0: i32) -> (i32, i32) {
    %c0_i32 = arith.constant 0 : i32
    %c0_i32_0 = arith.constant 0 : i32
    %c0_i32_1 = arith.constant 0 : i32
    return %c0_i32, %c0_i32_0 : i32, i32
  }
  func.func @transform_5(%arg0: i32) -> (i32, i32) {
    %c0_i32 = arith.constant 0 : i32
    %c0_i32_0 = arith.constant 0 : i32
    %c0_i32_1 = arith.constant 0 : i32
    return %c0_i32, %c0_i32_0 : i32, i32
  }
}

</mosaic_0001>

<llo_original>
// kernel: gru_forward.3
$region0: #{gru_forward.3}
  #allocation0 [shape = 'u32[]', space=smem, size = 0x4, offset = 0x4, fixed_abs, tag = 'smem constant byte address 0x4 - core index']
  #allocation1 [shape = 'u32[144,128]{1,0:T(1,128)}', space=vmem, size = 0x12000, scoped, tag = 'internal scratch']
  #allocation2 [shape = 'f32[8,128]{1,0:T(8,128)}', space=vmem, size = 0x1000, scoped, tag = 'scratch operand']
  %s0 = inlined_call_operand.vmem [shape: bf16[8,8,384], index: 0, kind: input, shape index: {}]
  %s1 = inlined_call_operand.vmem [shape: bf16[128,384], index: 1, kind: input, shape index: {}]
  %s2 = inlined_call_operand.vmem [shape: f32[1,128], index: 2, kind: input, shape index: {}]
  %s3 = inlined_call_operand.vmem [shape: bf16[128,128], index: 3, kind: input, shape index: {}]
  %s4 = inlined_call_operand.vmem [shape: f32[1,128], index: 4, kind: input, shape index: {}]
  %s5 = inlined_call_operand.vmem [shape: f32[8,128], index: 5, kind: output, shape index: {}]
  %s6 = sld [smem:[#allocation0]]
  $region38: #{gru_forward.3} parent=0
    _
  %s8 = ssub.s32 1, %s6
  %s9 = scalar_select 0, %s8, %s6
  // Predicated region
  $region2: #{gru_forward.3} parent=0 // pred_check
    _
  $region3: #{gru_forward.3} parent=0 // pred_check_branch
    %11 = sbr.rel (0) target = $region5
  $region4: #{gru_forward.3} parent=0 // pred_region
    _
  $region5: #{gru_forward.3} parent=0 // pred_fallthru
    _
  // Predicated region
  $region6: #{gru_forward.3} parent=0 // pred_check
    _
  $region7: #{gru_forward.3} parent=0 // pred_check_branch
    %13 = sbr.rel (0) target = $region9
  $region8: #{gru_forward.3} parent=0 // pred_region
    _
  $region9: #{gru_forward.3} parent=0 // pred_fallthru
    _
  // Predicated region
  $region10: #{gru_forward.3} parent=0 // pred_check
    _
  $region11: #{gru_forward.3} parent=0 // pred_check_branch
    %15 = sbr.rel (0) target = $region13
  $region12: #{gru_forward.3} parent=0 // pred_region
    _
  $region13: #{gru_forward.3} parent=0 // pred_fallthru
    _
  // Predicated region
  $region14: #{gru_forward.3} parent=0 // pred_check
    _
  $region15: #{gru_forward.3} parent=0 // pred_check_branch
    %17 = sbr.rel (0) target = $region17
  $region16: #{gru_forward.3} parent=0 // pred_region
    _
  $region17: #{gru_forward.3} parent=0 // pred_fallthru
    _
  // Predicated region
  $region18: #{gru_forward.3} parent=0 // pred_check
    _
  $region19: #{gru_forward.3} parent=0 // pred_check_branch
    %19 = sbr.rel (0) target = $region21
  $region20: #{gru_forward.3} parent=0 // pred_region
    _
  $region21: #{gru_forward.3} parent=0 // pred_fallthru
    _
  %p21 = scmp.eq.s32.totalorder 0, 0
  // Predicated region
  $region22: #{gru_forward.3} parent=0 // pred_check
    %p22 = pneg %p21
  $region23: #{gru_forward.3} parent=0 // pred_check_branch
    %24 = sbr.rel (%p22) target = $region25
  $region24: #{gru_forward.3} parent=0 // pred_region
    %25 = vst [vmem:[#allocation2] sm:$0xff] 0.0
  $region25: #{gru_forward.3} parent=0 // pred_fallthru
    _
  %v26 = vld [vmem:[%s1] sm:$0xff]
  %v27 = vld [vmem:[%s1 + $0x8] sm:$0xf]
  %v28 = vld [vmem:[%s1 + $0xc] sm:$0xff]
  %v29 = vld [vmem:[%s1 + $0x14] sm:$0xf]
  %v30 = vld [vmem:[%s1 + $0x18] sm:$0xff]
  %v31 = vld [vmem:[%s1 + $0x20] sm:$0xf]
  %v32 = vld [vmem:[%s1 + $0x24] sm:$0xff]
  %v33 = vld [vmem:[%s1 + $0x2c] sm:$0xf]
  %v34 = vld [vmem:[%s1 + $0x30] sm:$0xff]
  %v35 = vld [vmem:[%s1 + $0x38] sm:$0xf]
  %v36 = vld [vmem:[%s1 + $0x3c] sm:$0xff]
  %v37 = vld [vmem:[%s1 + $0x44] sm:$0xf]
  %v38 = vld [vmem:[%s1 + $0x48] sm:$0xff]
  %v39 = vld [vmem:[%s1 + $0x50] sm:$0xf]
  %v40 = vld [vmem:[%s1 + $0x54] sm:$0xff]
  %v41 = vld [vmem:[%s1 + $0x5c] sm:$0xf]
  %v42 = vld [vmem:[%s1 + $0x60] sm:$0xff]
  %v43 = vld [vmem:[%s1 + $0x68] sm:$0xf]
  %v44 = vld [vmem:[%s1 + $0x6c] sm:$0xff]
  %v45 = vld [vmem:[%s1 + $0x74] sm:$0xf]
  %v46 = vld [vmem:[%s1 + $0x78] sm:$0xff]
  %v47 = vld [vmem:[%s1 + $0x80] sm:$0xf]
  %v48 = vld [vmem:[%s1 + $0x84] sm:$0xff]
  %v49 = vld [vmem:[%s1 + $0x8c] sm:$0xf]
  %v50 = vld [vmem:[%s1 + $0x90] sm:$0xff]
  %v51 = vld [vmem:[%s1 + $0x98] sm:$0xf]
  %v52 = vld [vmem:[%s1 + $0x9c] sm:$0xff]
  %v53 = vld [vmem:[%s1 + $0xa4] sm:$0xf]
  %v54 = vld [vmem:[%s1 + $0xa8] sm:$0xff]
  %v55 = vld [vmem:[%s1 + $0xb0] sm:$0xf]
  %v56 = vld [vmem:[%s1 + $0xb4] sm:$0xff]
  %v57 = vld [vmem:[%s1 + $0xbc] sm:$0xf]
  %v58 = vld [vmem:[%s2] sm:$0x1]
  %v60 = vlaneseq
  %v61 = vshrl.u32 %v60, 7
  %v62 = vsub.s32 0, %v61
  %v63 = vrot.slane %v58, %v62
  %v65 = vld [vmem:[#allocation2] sm:$0xff]
  %v66 = vld [vmem:[%s0] sm:$0xff]
  %v67 = vld [vmem:[%s0 + $0x8] sm:$0xf]
  %v68 = vunpack.c.l.bf16 %v66
  %v69 = vunpack.c.h.bf16 %v66
  %v70 = vunpack.c.l.bf16 %v67
  %v71 = vpack.c.bf16 %v65, %v65
  %v104 = vunpack.c.l.b16 %v26
  %v105 = vunpack.c.h.b16 %v26
  %v106 = vunpack.c.l.b16 %v27
  %v107 = vunpack.c.l.b16 %v28
  %v108 = vunpack.c.h.b16 %v28
  %v109 = vunpack.c.l.b16 %v29
  %v110 = vunpack.c.l.b16 %v30
  %v111 = vunpack.c.h.b16 %v30
  %v112 = vunpack.c.l.b16 %v31
  %v113 = vunpack.c.l.b16 %v32
  %v114 = vunpack.c.h.b16 %v32
  %v115 = vunpack.c.l.b16 %v33
  %v116 = vunpack.c.l.b16 %v34
  %v117 = vunpack.c.h.b16 %v34
  %v118 = vunpack.c.l.b16 %v35
  %v119 = vunpack.c.l.b16 %v36
  %v120 = vunpack.c.h.b16 %v36
  %v121 = vunpack.c.l.b16 %v37
  %v122 = vunpack.c.l.b16 %v38
  %v123 = vunpack.c.h.b16 %v38
  %v124 = vunpack.c.l.b16 %v39
  %v125 = vunpack.c.l.b16 %v40
  %v126 = vunpack.c.h.b16 %v40
  %v127 = vunpack.c.l.b16 %v41
  %v128 = vunpack.c.l.b16 %v42
  %v129 = vunpack.c.h.b16 %v42
  %v130 = vunpack.c.l.b16 %v43
  %v131 = vunpack.c.l.b16 %v44
  %v132 = vunpack.c.h.b16 %v44
  %v133 = vunpack.c.l.b16 %v45
  %v134 = vunpack.c.l.b16 %v46
  %v135 = vunpack.c.h.b16 %v46
  %v136 = vunpack.c.l.b16 %v47
  %v137 = vunpack.c.l.b16 %v48
  %v138 = vunpack.c.h.b16 %v48
  %v139 = vunpack.c.l.b16 %v49
  %v140 = vunpack.c.l.b16 %v50
  %v141 = vunpack.c.h.b16 %v50
  %v142 = vunpack.c.l.b16 %v51
  %v143 = vunpack.c.l.b16 %v52
  %v144 = vunpack.c.h.b16 %v52
  %v145 = vunpack.c.l.b16 %v53
  %v146 = vunpack.c.l.b16 %v54
  %v147 = vunpack.c.h.b16 %v54
  %v148 = vunpack.c.l.b16 %v55
  %v149 = vunpack.c.l.b16 %v56
  %v150 = vunpack.c.h.b16 %v56
  %v151 = vunpack.c.l.b16 %v57
  %v152 = vpack.c.b16 %v107, %v104
  %v153 = vpack.c.b16 %v108, %v105
  %v154 = vpack.c.b16 %v109, %v106
  %v155 = vpack.c.b16 %v113, %v110
  %v156 = vpack.c.b16 %v114, %v111
  %v157 = vpack.c.b16 %v115, %v112
  %v158 = vpack.c.b16 %v119, %v116
  %v159 = vpack.c.b16 %v120, %v117
  %v160 = vpack.c.b16 %v121, %v118
  %v161 = vpack.c.b16 %v125, %v122
  %v162 = vpack.c.b16 %v126, %v123
  %v163 = vpack.c.b16 %v127, %v124
  %v164 = vpack.c.b16 %v131, %v128
  %v165 = vpack.c.b16 %v132, %v129
  %v166 = vpack.c.b16 %v133, %v130
  %v167 = vpack.c.b16 %v137, %v134
  %v168 = vpack.c.b16 %v138, %v135
  %v169 = vpack.c.b16 %v139, %v136
  %v170 = vpack.c.b16 %v143, %v140
  %v171 = vpack.c.b16 %v144, %v141
  %v172 = vpack.c.b16 %v145, %v142
  %v173 = vpack.c.b16 %v149, %v146
  %v174 = vpack.c.b16 %v150, %v147
  %v175 = vpack.c.b16 %v151, %v148
  %200 = vmatprep.subr.bf16.mxu0 %v153
  %201 = vmatpush1.bf16.msra.mxu0 %v152
  %202 = vmatprep.subr.bf16.mxu0 %v156
  %203 = vmatpush1.bf16.msra.mxu0 %v155
  %204 = vmatprep.subr.bf16.mxu0 %v159
  %205 = vmatpush1.bf16.msra.mxu0 %v158
  %206 = vmatprep.subr.bf16.mxu0 %v162
  %207 = vmatpush1.bf16.msra.mxu0 %v161
  %208 = vmatprep.subr.bf16.mxu0 %v165
  %209 = vmatpush1.bf16.msra.mxu0 %v164
  %210 = vmatprep.subr.bf16.mxu0 %v168
  %211 = vmatpush1.bf16.msra.mxu0 %v167
  %212 = vmatprep.subr.bf16.mxu0 %v171
  %213 = vmatpush1.bf16.msra.mxu0 %v170
  %214 = vmatprep.subr.bf16.mxu0 %v174
  %215 = vmatpush1.bf16.msra.mxu0 %v173
  %216 = vmatprep.subr.bf16.mxu0 0
  %217 = vmatpush1.bf16.msra.mxu0 0
  %218 = vmatprep.subr.bf16.mxu0 0
  %219 = vmatpush1.bf16.msra.mxu0 0
  %220 = vmatprep.subr.bf16.mxu0 0
  %221 = vmatpush1.bf16.msra.mxu0 0
  %222 = vmatprep.subr.bf16.mxu0 0
  %223 = vmatpush1.bf16.msra.mxu0 0
  %224 = vmatprep.subr.bf16.mxu0 0
  %225 = vmatpush1.bf16.msra.mxu0 0
  %226 = vmatprep.subr.bf16.mxu0 0
  %227 = vmatpush1.bf16.msra.mxu0 0
  %228 = vmatprep.subr.bf16.mxu0 0
  %229 = vmatpush1.bf16.msra.mxu0 0
  %230 = vmatprep.subr.bf16.mxu0 0
  %231 = vmatpush1.bf16.msra.mxu0 0
  %232 = vmatprep.mubr.bf16.mxu0 0
  %233 = vmatmul.mubr.bf16.gmra.mrb[0].mxu0 %v71
  %v234 = vpop.f32.mrb[0].mxu0
  %v235 = vadd.f32 0.0, %v234
  %v236 = vpop.f32.mrb[0].mxu0
  %v237 = vadd.f32 0.0, %v236
  %v238 = vpop.f32.mrb[0].mxu0
  %v239 = vpop.f32.mrb[0].mxu0
  %240 = vdwg.mxu0
  %241 = vmatprep.subr.bf16.mxu0 0
  %242 = vmatpush1.bf16.msra.mxu0 %v154
  %243 = vmatprep.subr.bf16.mxu0 0
  %244 = vmatpush1.bf16.msra.mxu0 %v157
  %245 = vmatprep.subr.bf16.mxu0 0
  %246 = vmatpush1.bf16.msra.mxu0 %v160
  %247 = vmatprep.subr.bf16.mxu0 0
  %248 = vmatpush1.bf16.msra.mxu0 %v163
  %249 = vmatprep.subr.bf16.mxu0 0
  %250 = vmatpush1.bf16.msra.mxu0 %v166
  %251 = vmatprep.subr.bf16.mxu0 0
  %252 = vmatpush1.bf16.msra.mxu0 %v169
  %253 = vmatprep.subr.bf16.mxu0 0
  %254 = vmatpush1.bf16.msra.mxu0 %v172
  %255 = vmatprep.subr.bf16.mxu0 0
  %256 = vmatpush1.bf16.msra.mxu0 %v175
  %257 = vmatprep.subr.bf16.mxu0 0
  %258 = vmatpush1.bf16.msra.mxu0 0
  %259 = vmatprep.subr.bf16.mxu0 0
  %260 = vmatpush1.bf16.msra.mxu0 0
  %261 = vmatprep.subr.bf16.mxu0 0
  %262 = vmatpush1.bf16.msra.mxu0 0
  %263 = vmatprep.subr.bf16.mxu0 0
  %264 = vmatpush1.bf16.msra.mxu0 0
  %265 = vmatprep.subr.bf16.mxu0 0
  %266 = vmatpush1.bf16.msra.mxu0 0
  %267 = vmatprep.subr.bf16.mxu0 0
  %268 = vmatpush1.bf16.msra.mxu0 0
  %269 = vmatprep.subr.bf16.mxu0 0
  %270 = vmatpush1.bf16.msra.mxu0 0
  %271 = vmatprep.subr.bf16.mxu0 0
  %272 = vmatpush1.bf16.msra.mxu0 0
  %273 = vmatprep.mubr.bf16.mxu0 0
  %274 = vmatmul.mubr.bf16.gmra.mrb[0].mxu0 %v71
  %v275 = vpop.f32.mrb[0].mxu0
  %v276 = vadd.f32 0.0, %v275
  %v277 = vpop.f32.mrb[0].mxu0
  %v278 = vpop.f32.mrb[0].mxu0
  %v279 = vpop.f32.mrb[0].mxu0
  %280 = vdwg.mxu0
  %v281 = vadd.f32 %v68, %v235
  %v282 = vxor.u32 %v281, 2147483648
  %v283 = vmul.f32 %v282, 1.442695
  %v284 = vpow.pop %v283
  %v285 = vadd.f32 %v284, 1.0
  %v286 = vrcp.pop %v285
  %v287 = vmul.f32 1.0, %v286
  %v288 = vadd.f32 %v69, %v237
  %v289 = vxor.u32 %v288, 2147483648
  %v290 = vmul.f32 %v289, 1.442695
  %v291 = vpow.pop %v290
  %v292 = vadd.f32 %v291, 1.0
  %v293 = vrcp.pop %v292
  %v294 = vmul.f32 1.0, %v293
  %v295 = vadd.f32 %v276, %v63
  %v296 = vmul.f32 %v287, %v295
  %v297 = vadd.f32 %v70, %v296
  %v298 = vtanh.pop %v297
  %v299 = vsub.f32 1.0, %v294
  %v300 = vmul.f32 %v299, %v298
  %v301 = vmul.f32 %v294, %v65
  %v302 = vadd.f32 %v300, %v301
  %s303 = scalar_lea.vmem %s0, 12
  %v304 = vld [vmem:[%s303] sm:$0xff]
  %v305 = vld [vmem:[%s303 + $0x8] sm:$0xf]
  %v306 = vunpack.c.l.bf16 %v304
  %v307 = vunpack.c.h.bf16 %v304
  %v308 = vunpack.c.l.bf16 %v305
  %v309 = vpack.c.bf16 %v302, %v302
  %310 = vmatprep.subr.bf16.mxu0 %v153
  %311 = vmatpush1.bf16.msra.mxu0 %v152
  %312 = vmatprep.subr.bf16.mxu0 %v156
  %313 = vmatpush1.bf16.msra.mxu0 %v155
  %314 = vmatprep.subr.bf16.mxu0 %v159
  %315 = vmatpush1.bf16.msra.mxu0 %v158
  %316 = vmatprep.subr.bf16.mxu0 %v162
  %317 = vmatpush1.bf16.msra.mxu0 %v161
  %318 = vmatprep.subr.bf16.mxu0 %v165
  %319 = vmatpush1.bf16.msra.mxu0 %v164
  %320 = vmatprep.subr.bf16.mxu0 %v168
  %321 = vmatpush1.bf16.msra.mxu0 %v167
  %322 = vmatprep.subr.bf16.mxu0 %v171
  %323 = vmatpush1.bf16.msra.mxu0 %v170
  %324 = vmatprep.subr.bf16.mxu0 %v174
  %325 = vmatpush1.bf16.msra.mxu0 %v173
  %326 = vmatprep.subr.bf16.mxu0 0
  %327 = vmatpush1.bf16.msra.mxu0 0
  %328 = vmatprep.subr.bf16.mxu0 0
  %329 = vmatpush1.bf16.msra.mxu0 0
  %330 = vmatprep.subr.bf16.mxu0 0
  %331 = vmatpush1.bf16.msra.mxu0 0
  %332 = vmatprep.subr.bf16.mxu0 0
  %333 = vmatpush1.bf16.msra.mxu0 0
  %334 = vmatprep.subr.bf16.mxu0 0
  %335 = vmatpush1.bf16.msra.mxu0 0
  %336 = vmatprep.subr.bf16.mxu0 0
  %337 = vmatpush1.bf16.msra.mxu0 0
  %338 = vmatprep.subr.bf16.mxu0 0
  %339 = vmatpush1.bf16.msra.mxu0 0
  %340 = vmatprep.subr.bf16.mxu0 0
  %341 = vmatpush1.bf16.msra.mxu0 0
  %342 = vmatprep.mubr.bf16.mxu0 0
  %343 = vmatmul.mubr.bf16.gmra.mrb[0].mxu0 %v309
  %v344 = vpop.f32.mrb[0].mxu0
  %v345 = vadd.f32 0.0, %v344
  %v346 = vpop.f32.mrb[0].mxu0
  %v347 = vadd.f32 0.0, %v346
  %v348 = vpop.f32.mrb[0].mxu0
  %v349 = vpop.f32.mrb[0].mxu0
  %350 = vdwg.mxu0
  %351 = vmatprep.subr.bf16.mxu0 0
  %352 = vmatpush1.bf16.msra.mxu0 %v154
  %353 = vmatprep.subr.bf16.mxu0 0
  %354 = vmatpush1.bf16.msra.mxu0 %v157
  %355 = vmatprep.subr.bf16.mxu0 0
  %356 = vmatpush1.bf16.msra.mxu0 %v160
  %357 = vmatprep.subr.bf16.mxu0 0
  %358 = vmatpush1.bf16.msra.mxu0 %v163
  %359 = vmatprep.subr.bf16.mxu0 0
  %360 = vmatpush1.bf16.msra.mxu0 %v166
  %361 = vmatprep.subr.bf16.mxu0 0
  %362 = vmatpush1.bf16.msra.mxu0 %v169
  %363 = vmatprep.subr.bf16.mxu0 0
  %364 = vmatpush1.bf16.msra.mxu0 %v172
  %365 = vmatprep.subr.bf16.mxu0 0
  %366 = vmatpush1.bf16.msra.mxu0 %v175
  %367 = vmatprep.subr.bf16.mxu0 0
  %368 = vmatpush1.bf16.msra.mxu0 0
  %369 = vmatprep.subr.bf16.mxu0 0
  %370 = vmatpush1.bf16.msra.mxu0 0
  %371 = vmatprep.subr.bf16.mxu0 0
  %372 = vmatpush1.bf16.msra.mxu0 0
  %373 = vmatprep.subr.bf16.mxu0 0
  %374 = vmatpush1.bf16.msra.mxu0 0
  %375 = vmatprep.subr.bf16.mxu0 0
  %376 = vmatpush1.bf16.msra.mxu0 0
  %377 = vmatprep.subr.bf16.mxu0 0
  %378 = vmatpush1.bf16.msra.mxu0 0
  %379 = vmatprep.subr.bf16.mxu0 0
  %380 = vmatpush1.bf16.msra.mxu0 0
  %381 = vmatprep.subr.bf16.mxu0 0
  %382 = vmatpush1.bf16.msra.mxu0 0
  %383 = vmatprep.mubr.bf16.mxu0 0
  %384 = vmatmul.mubr.bf16.gmra.mrb[0].mxu0 %v309
  %v385 = vpop.f32.mrb[0].mxu0
  %v386 = vadd.f32 0.0, %v385
  %v387 = vpop.f32.mrb[0].mxu0
  %v388 = vpop.f32.mrb[0].mxu0
  %v389 = vpop.f32.mrb[0].mxu0
  %390 = vdwg.mxu0
  %v391 = vadd.f32 %v306, %v345
  %v392 = vxor.u32 %v391, 2147483648
  %v393 = vmul.f32 %v392, 1.442695
  %v394 = vpow.pop %v393
  %v395 = vadd.f32 %v394, 1.0
  %v396 = vrcp.pop %v395
  %v397 = vmul.f32 1.0, %v396
  %v398 = vadd.f32 %v307, %v347
  %v399 = vxor.u32 %v398, 2147483648
  %v400 = vmul.f32 %v399, 1.442695
  %v401 = vpow.pop %v400
  %v402 = vadd.f32 %v401, 1.0
  %v403 = vrcp.pop %v402
  %v404 = vmul.f32 1.0, %v403
  %v405 = vadd.f32 %v386, %v63
  %v406 = vmul.f32 %v397, %v405
  %v407 = vadd.f32 %v308, %v406
  %v408 = vtanh.pop %v407
  %v409 = vsub.f32 1.0, %v404
  %v410 = vmul.f32 %v409, %v408
  %v411 = vmul.f32 %v404, %v302
  %v412 = vadd.f32 %v410, %v411
  %s413 = scalar_lea.vmem %s0, 24
  %v414 = vld [vmem:[%s413] sm:$0xff]
  %v415 = vld [vmem:[%s413 + $0x8] sm:$0xf]
  %v416 = vunpack.c.l.bf16 %v414
  %v417 = vunpack.c.h.bf16 %v414
  %v418 = vunpack.c.l.bf16 %v415
  %v419 = vpack.c.bf16 %v412, %v412
  %420 = vmatprep.subr.bf16.mxu0 %v153
  %421 = vmatpush1.bf16.msra.mxu0 %v152
  %422 = vmatprep.subr.bf16.mxu0 %v156
  %423 = vmatpush1.bf16.msra.mxu0 %v155
  %424 = vmatprep.subr.bf16.mxu0 %v159
  %425 = vmatpush1.bf16.msra.mxu0 %v158
  %426 = vmatprep.subr.bf16.mxu0 %v162
  %427 = vmatpush1.bf16.msra.mxu0 %v161
  %428 = vmatprep.subr.bf16.mxu0 %v165
  %429 = vmatpush1.bf16.msra.mxu0 %v164
  %430 = vmatprep.subr.bf16.mxu0 %v168
  %431 = vmatpush1.bf16.msra.mxu0 %v167
  %432 = vmatprep.subr.bf16.mxu0 %v171
  %433 = vmatpush1.bf16.msra.mxu0 %v170
  %434 = vmatprep.subr.bf16.mxu0 %v174
  %435 = vmatpush1.bf16.msra.mxu0 %v173
  %436 = vmatprep.subr.bf16.mxu0 0
  %437 = vmatpush1.bf16.msra.mxu0 0
  %438 = vmatprep.subr.bf16.mxu0 0
  %439 = vmatpush1.bf16.msra.mxu0 0
  %440 = vmatprep.subr.bf16.mxu0 0
  %441 = vmatpush1.bf16.msra.mxu0 0
  %442 = vmatprep.subr.bf16.mxu0 0
  %443 = vmatpush1.bf16.msra.mxu0 0
  %444 = vmatprep.subr.bf16.mxu0 0
  %445 = vmatpush1.bf16.msra.mxu0 0
  %446 = vmatprep.subr.bf16.mxu0 0
  %447 = vmatpush1.bf16.msra.mxu0 0
  %448 = vmatprep.subr.bf16.mxu0 0
  %449 = vmatpush1.bf16.msra.mxu0 0
  %450 = vmatprep.subr.bf16.mxu0 0
  %451 = vmatpush1.bf16.msra.mxu0 0
  %452 = vmatprep.mubr.bf16.mxu0 0
  %453 = vmatmul.mubr.bf16.gmra.mrb[0].mxu0 %v419
  %v454 = vpop.f32.mrb[0].mxu0
  %v455 = vadd.f32 0.0, %v454
  %v456 = vpop.f32.mrb[0].mxu0
  %v457 = vadd.f32 0.0, %v456
  %v458 = vpop.f32.mrb[0].mxu0
  %v459 = vpop.f32.mrb[0].mxu0
  %460 = vdwg.mxu0
  %461 = vmatprep.subr.bf16.mxu0 0
  %462 = vmatpush1.bf16.msra.mxu0 %v154
  %463 = vmatprep.subr.bf16.mxu0 0
  %464 = vmatpush1.bf16.msra.mxu0 %v157
  %465 = vmatprep.subr.bf16.mxu0 0
  %466 = vmatpush1.bf16.msra.mxu0 %v160
  %467 = vmatprep.subr.bf16.mxu0 0
  %468 = vmatpush1.bf16.msra.mxu0 %v163
  %469 = vmatprep.subr.bf16.mxu0 0
  %470 = vmatpush1.bf16.msra.mxu0 %v166
  %471 = vmatprep.subr.bf16.mxu0 0
  %472 = vmatpush1.bf16.msra.mxu0 %v169
  %473 = vmatprep.subr.bf16.mxu0 0
  %474 = vmatpush1.bf16.msra.mxu0 %v172
  %475 = vmatprep.subr.bf16.mxu0 0
  %476 = vmatpush1.bf16.msra.mxu0 %v175
  %477 = vmatprep.subr.bf16.mxu0 0
  %478 = vmatpush1.bf16.msra.mxu0 0
  %479 = vmatprep.subr.bf16.mxu0 0
  %480 = vmatpush1.bf16.msra.mxu0 0
  %481 = vmatprep.subr.bf16.mxu0 0
  %482 = vmatpush1.bf16.msra.mxu0 0
  %483 = vmatprep.subr.bf16.mxu0 0
  %484 = vmatpush1.bf16.msra.mxu0 0
  %485 = vmatprep.subr.bf16.mxu0 0
  %486 = vmatpush1.bf16.msra.mxu0 0
  %487 = vmatprep.subr.bf16.mxu0 0
  %488 = vmatpush1.bf16.msra.mxu0 0
  %489 = vmatprep.subr.bf16.mxu0 0
  %490 = vmatpush1.bf16.msra.mxu0 0
  %491 = vmatprep.subr.bf16.mxu0 0
  %492 = vmatpush1.bf16.msra.mxu0 0
  %493 = vmatprep.mubr.bf16.mxu0 0
  %494 = vmatmul.mubr.bf16.gmra.mrb[0].mxu0 %v419
  %v495 = vpop.f32.mrb[0].mxu0
  %v496 = vadd.f32 0.0, %v495
  %v497 = vpop.f32.mrb[0].mxu0
  %v498 = vpop.f32.mrb[0].mxu0
  %v499 = vpop.f32.mrb[0].mxu0
  %500 = vdwg.mxu0
  %v501 = vadd.f32 %v416, %v455
  %v502 = vxor.u32 %v501, 2147483648
  %v503 = vmul.f32 %v502, 1.442695
  %v504 = vpow.pop %v503
  %v505 = vadd.f32 %v504, 1.0
  %v506 = vrcp.pop %v505
  %v507 = vmul.f32 1.0, %v506
  %v508 = vadd.f32 %v417, %v457
  %v509 = vxor.u32 %v508, 2147483648
  %v510 = vmul.f32 %v509, 1.442695
  %v511 = vpow.pop %v510
  %v512 = vadd.f32 %v511, 1.0
  %v513 = vrcp.pop %v512
  %v514 = vmul.f32 1.0, %v513
  %v515 = vadd.f32 %v496, %v63
  %v516 = vmul.f32 %v507, %v515
  %v517 = vadd.f32 %v418, %v516
  %v518 = vtanh.pop %v517
  %v519 = vsub.f32 1.0, %v514
  %v520 = vmul.f32 %v519, %v518
  %v521 = vmul.f32 %v514, %v412
  %v522 = vadd.f32 %v520, %v521
  %s523 = scalar_lea.vmem %s0, 36
  %v524 = vld [vmem:[%s523] sm:$0xff]
  %v525 = vld [vmem:[%s523 + $0x8] sm:$0xf]
  %v526 = vunpack.c.l.bf16 %v524
  %v527 = vunpack.c.h.bf16 %v524
  %v528 = vunpack.c.l.bf16 %v525
  %v529 = vpack.c.bf16 %v522, %v522
  %530 = vmatprep.subr.bf16.mxu0 %v153
  %531 = vmatpush1.bf16.msra.mxu0 %v152
  %532 = vmatprep.subr.bf16.mxu0 %v156
  %533 = vmatpush1.bf16.msra.mxu0 %v155
  %534 = vmatprep.subr.bf16.mxu0 %v159
  %535 = vmatpush1.bf16.msra.mxu0 %v158
  %536 = vmatprep.subr.bf16.mxu0 %v162
  %537 = vmatpush1.bf16.msra.mxu0 %v161
  %538 = vmatprep.subr.bf16.mxu0 %v165
  %539 = vmatpush1.bf16.msra.mxu0 %v164
  %540 = vmatprep.subr.bf16.mxu0 %v168
  %541 = vmatpush1.bf16.msra.mxu0 %v167
  %542 = vmatprep.subr.bf16.mxu0 %v171
  %543 = vmatpush1.bf16.msra.mxu0 %v170
  %544 = vmatprep.subr.bf16.mxu0 %v174
  %545 = vmatpush1.bf16.msra.mxu0 %v173
  %546 = vmatprep.subr.bf16.mxu0 0
  %547 = vmatpush1.bf16.msra.mxu0 0
  %548 = vmatprep.subr.bf16.mxu0 0
  %549 = vmatpush1.bf16.msra.mxu0 0
  %550 = vmatprep.subr.bf16.mxu0 0
  %551 = vmatpush1.bf16.msra.mxu0 0
  %552 = vmatprep.subr.bf16.mxu0 0
  %553 = vmatpush1.bf16.msra.mxu0 0
  %554 = vmatprep.subr.bf16.mxu0 0
  %555 = vmatpush1.bf16.msra.mxu0 0
  %556 = vmatprep.subr.bf16.mxu0 0
  %557 = vmatpush1.bf16.msra.mxu0 0
  %558 = vmatprep.subr.bf16.mxu0 0
  %559 = vmatpush1.bf16.msra.mxu0 0
  %560 = vmatprep.subr.bf16.mxu0 0
  %561 = vmatpush1.bf16.msra.mxu0 0
  %562 = vmatprep.mubr.bf16.mxu0 0
  %563 = vmatmul.mubr.bf16.gmra.mrb[0].mxu0 %v529
  %v564 = vpop.f32.mrb[0].mxu0
  %v565 = vadd.f32 0.0, %v564
  %v566 = vpop.f32.mrb[0].mxu0
  %v567 = vadd.f32 0.0, %v566
  %v568 = vpop.f32.mrb[0].mxu0
  %v569 = vpop.f32.mrb[0].mxu0
  %570 = vdwg.mxu0
  %571 = vmatprep.subr.bf16.mxu0 0
  %572 = vmatpush1.bf16.msra.mxu0 %v154
  %573 = vmatprep.subr.bf16.mxu0 0
  %574 = vmatpush1.bf16.msra.mxu0 %v157
  %575 = vmatprep.subr.bf16.mxu0 0
  %576 = vmatpush1.bf16.msra.mxu0 %v160
  %577 = vmatprep.subr.bf16.mxu0 0
  %578 = vmatpush1.bf16.msra.mxu0 %v163
  %579 = vmatprep.subr.bf16.mxu0 0
  %580 = vmatpush1.bf16.msra.mxu0 %v166
  %581 = vmatprep.subr.bf16.mxu0 0
  %582 = vmatpush1.bf16.msra.mxu0 %v169
  %583 = vmatprep.subr.bf16.mxu0 0
  %584 = vmatpush1.bf16.msra.mxu0 %v172
  %585 = vmatprep.subr.bf16.mxu0 0
  %586 = vmatpush1.bf16.msra.mxu0 %v175
  %587 = vmatprep.subr.bf16.mxu0 0
  %588 = vmatpush1.bf16.msra.mxu0 0
  %589 = vmatprep.subr.bf16.mxu0 0
  %590 = vmatpush1.bf16.msra.mxu0 0
  %591 = vmatprep.subr.bf16.mxu0 0
  %592 = vmatpush1.bf16.msra.mxu0 0
  %593 = vmatprep.subr.bf16.mxu0 0
  %594 = vmatpush1.bf16.msra.mxu0 0
  %595 = vmatprep.subr.bf16.mxu0 0
  %596 = vmatpush1.bf16.msra.mxu0 0
  %597 = vmatprep.subr.bf16.mxu0 0
  %598 = vmatpush1.bf16.msra.mxu0 0
  %599 = vmatprep.subr.bf16.mxu0 0
  %600 = vmatpush1.bf16.msra.mxu0 0
  %601 = vmatprep.subr.bf16.mxu0 0
  %602 = vmatpush1.bf16.msra.mxu0 0
  %603 = vmatprep.mubr.bf16.mxu0 0
  %604 = vmatmul.mubr.bf16.gmra.mrb[0].mxu0 %v529
  %v605 = vpop.f32.mrb[0].mxu0
  %v606 = vadd.f32 0.0, %v605
  %v607 = vpop.f32.mrb[0].mxu0
  %v608 = vpop.f32.mrb[0].mxu0
  %v609 = vpop.f32.mrb[0].mxu0
  %610 = vdwg.mxu0
  %v611 = vadd.f32 %v526, %v565
  %v612 = vxor.u32 %v611, 2147483648
  %v613 = vmul.f32 %v612, 1.442695
  %v614 = vpow.pop %v613
  %v615 = vadd.f32 %v614, 1.0
  %v616 = vrcp.pop %v615
  %v617 = vmul.f32 1.0, %v616
  %v618 = vadd.f32 %v527, %v567
  %v619 = vxor.u32 %v618, 2147483648
  %v620 = vmul.f32 %v619, 1.442695
  %v621 = vpow.pop %v620
  %v622 = vadd.f32 %v621, 1.0
  %v623 = vrcp.pop %v622
  %v624 = vmul.f32 1.0, %v623
  %v625 = vadd.f32 %v606, %v63
  %v626 = vmul.f32 %v617, %v625
  %v627 = vadd.f32 %v528, %v626
  %v628 = vtanh.pop %v627
  %v629 = vsub.f32 1.0, %v624
  %v630 = vmul.f32 %v629, %v628
  %v631 = vmul.f32 %v624, %v522
  %v632 = vadd.f32 %v630, %v631
  %s633 = scalar_lea.vmem %s0, 48
  %v634 = vld [vmem:[%s633] sm:$0xff]
  %v635 = vld [vmem:[%s633 + $0x8] sm:$0xf]
  %v636 = vunpack.c.l.bf16 %v634
  %v637 = vunpack.c.h.bf16 %v634
  %v638 = vunpack.c.l.bf16 %v635
  %v639 = vpack.c.bf16 %v632, %v632
  %640 = vmatprep.subr.bf16.mxu0 %v153
  %641 = vmatpush1.bf16.msra.mxu0 %v152
  %642 = vmatprep.subr.bf16.mxu0 %v156
  %643 = vmatpush1.bf16.msra.mxu0 %v155
  %644 = vmatprep.subr.bf16.mxu0 %v159
  %645 = vmatpush1.bf16.msra.mxu0 %v158
  %646 = vmatprep.subr.bf16.mxu0 %v162
  %647 = vmatpush1.bf16.msra.mxu0 %v161
  %648 = vmatprep.subr.bf16.mxu0 %v165
  %649 = vmatpush1.bf16.msra.mxu0 %v164
  %650 = vmatprep.subr.bf16.mxu0 %v168
  %651 = vmatpush1.bf16.msra.mxu0 %v167
  %652 = vmatprep.subr.bf16.mxu0 %v171
  %653 = vmatpush1.bf16.msra.mxu0 %v170
  %654 = vmatprep.subr.bf16.mxu0 %v174
  %655 = vmatpush1.bf16.msra.mxu0 %v173
  %656 = vmatprep.subr.bf16.mxu0 0
  %657 = vmatpush1.bf16.msra.mxu0 0
  %658 = vmatprep.subr.bf16.mxu0 0
  %659 = vmatpush1.bf16.msra.mxu0 0
  %660 = vmatprep.subr.bf16.mxu0 0
  %661 = vmatpush1.bf16.msra.mxu0 0
  %662 = vmatprep.subr.bf16.mxu0 0
  %663 = vmatpush1.bf16.msra.mxu0 0
  %664 = vmatprep.subr.bf16.mxu0 0
  %665 = vmatpush1.bf16.msra.mxu0 0
  %666 = vmatprep.subr.bf16.mxu0 0
  %667 = vmatpush1.bf16.msra.mxu0 0
  %668 = vmatprep.subr.bf16.mxu0 0
  %669 = vmatpush1.bf16.msra.mxu0 0
  %670 = vmatprep.subr.bf16.mxu0 0
  %671 = vmatpush1.bf16.msra.mxu0 0
  %672 = vmatprep.mubr.bf16.mxu0 0
  %673 = vmatmul.mubr.bf16.gmra.mrb[0].mxu0 %v639
  %v674 = vpop.f32.mrb[0].mxu0
  %v675 = vadd.f32 0.0, %v674
  %v676 = vpop.f32.mrb[0].mxu0
  %v677 = vadd.f32 0.0, %v676
  %v678 = vpop.f32.mrb[0].mxu0
  %v679 = vpop.f32.mrb[0].mxu0
  %680 = vdwg.mxu0
  %681 = vmatprep.subr.bf16.mxu0 0
  %682 = vmatpush1.bf16.msra.mxu0 %v154
  %683 = vmatprep.subr.bf16.mxu0 0
  %684 = vmatpush1.bf16.msra.mxu0 %v157
  %685 = vmatprep.subr.bf16.mxu0 0
  %686 = vmatpush1.bf16.msra.mxu0 %v160
  %687 = vmatprep.subr.bf16.mxu0 0
  %688 = vmatpush1.bf16.msra.mxu0 %v163
  %689 = vmatprep.subr.bf16.mxu0 0
  %690 = vmatpush1.bf16.msra.mxu0 %v166
  %691 = vmatprep.subr.bf16.mxu0 0
  %692 = vmatpush1.bf16.msra.mxu0 %v169
  %693 = vmatprep.subr.bf16.mxu0 0
  %694 = vmatpush1.bf16.msra.mxu0 %v172
  %695 = vmatprep.subr.bf16.mxu0 0
  %696 = vmatpush1.bf16.msra.mxu0 %v175
  %697 = vmatprep.subr.bf16.mxu0 0
  %698 = vmatpush1.bf16.msra.mxu0 0
  %699 = vmatprep.subr.bf16.mxu0 0
  %700 = vmatpush1.bf16.msra.mxu0 0
  %701 = vmatprep.subr.bf16.mxu0 0
  %702 = vmatpush1.bf16.msra.mxu0 0
  %703 = vmatprep.subr.bf16.mxu0 0
  %704 = vmatpush1.bf16.msra.mxu0 0
  %705 = vmatprep.subr.bf16.mxu0 0
  %706 = vmatpush1.bf16.msra.mxu0 0
  %707 = vmatprep.subr.bf16.mxu0 0
  %708 = vmatpush1.bf16.msra.mxu0 0
  %709 = vmatprep.subr.bf16.mxu0 0
  %710 = vmatpush1.bf16.msra.mxu0 0
  %711 = vmatprep.subr.bf16.mxu0 0
  %712 = vmatpush1.bf16.msra.mxu0 0
  %713 = vmatprep.mubr.bf16.mxu0 0
  %714 = vmatmul.mubr.bf16.gmra.mrb[0].mxu0 %v639
  %v715 = vpop.f32.mrb[0].mxu0
  %v716 = vadd.f32 0.0, %v715
  %v717 = vpop.f32.mrb[0].mxu0
  %v718 = vpop.f32.mrb[0].mxu0
  %v719 = vpop.f32.mrb[0].mxu0
  %720 = vdwg.mxu0
  %v721 = vadd.f32 %v636, %v675
  %v722 = vxor.u32 %v721, 2147483648
  %v723 = vmul.f32 %v722, 1.442695
  %v724 = vpow.pop %v723
  %v725 = vadd.f32 %v724, 1.0
  %v726 = vrcp.pop %v725
  %v727 = vmul.f32 1.0, %v726
  %v728 = vadd.f32 %v637, %v677
  %v729 = vxor.u32 %v728, 2147483648
  %v730 = vmul.f32 %v729, 1.442695
  %v731 = vpow.pop %v730
  %v732 = vadd.f32 %v731, 1.0
  %v733 = vrcp.pop %v732
  %v734 = vmul.f32 1.0, %v733
  %v735 = vadd.f32 %v716, %v63
  %v736 = vmul.f32 %v727, %v735
  %v737 = vadd.f32 %v638, %v736
  %v738 = vtanh.pop %v737
  %v739 = vsub.f32 1.0, %v734
  %v740 = vmul.f32 %v739, %v738
  %v741 = vmul.f32 %v734, %v632
  %v742 = vadd.f32 %v740, %v741
  %s743 = scalar_lea.vmem %s0, 60
  %v744 = vld [vmem:[%s743] sm:$0xff]
  %v745 = vld [vmem:[%s743 + $0x8] sm:$0xf]
  %v746 = vunpack.c.l.bf16 %v744
  %v747 = vunpack.c.h.bf16 %v744
  %v748 = vunpack.c.l.bf16 %v745
  %v749 = vpack.c.bf16 %v742, %v742
  %750 = vmatprep.subr.bf16.mxu0 %v153
  %751 = vmatpush1.bf16.msra.mxu0 %v152
  %752 = vmatprep.subr.bf16.mxu0 %v156
  %753 = vmatpush1.bf16.msra.mxu0 %v155
  %754 = vmatprep.subr.bf16.mxu0 %v159
  %755 = vmatpush1.bf16.msra.mxu0 %v158
  %756 = vmatprep.subr.bf16.mxu0 %v162
  %757 = vmatpush1.bf16.msra.mxu0 %v161
  %758 = vmatprep.subr.bf16.mxu0 %v165
  %759 = vmatpush1.bf16.msra.mxu0 %v164
  %760 = vmatprep.subr.bf16.mxu0 %v168
  %761 = vmatpush1.bf16.msra.mxu0 %v167
  %762 = vmatprep.subr.bf16.mxu0 %v171
  %763 = vmatpush1.bf16.msra.mxu0 %v170
  %764 = vmatprep.subr.bf16.mxu0 %v174
  %765 = vmatpush1.bf16.msra.mxu0 %v173
  %766 = vmatprep.subr.bf16.mxu0 0
  %767 = vmatpush1.bf16.msra.mxu0 0
  %768 = vmatprep.subr.bf16.mxu0 0
  %769 = vmatpush1.bf16.msra.mxu0 0
  %770 = vmatprep.subr.bf16.mxu0 0
  %771 = vmatpush1.bf16.msra.mxu0 0
  %772 = vmatprep.subr.bf16.mxu0 0
  %773 = vmatpush1.bf16.msra.mxu0 0
  %774 = vmatprep.subr.bf16.mxu0 0
  %775 = vmatpush1.bf16.msra.mxu0 0
  %776 = vmatprep.subr.bf16.mxu0 0
  %777 = vmatpush1.bf16.msra.mxu0 0
  %778 = vmatprep.subr.bf16.mxu0 0
  %779 = vmatpush1.bf16.msra.mxu0 0
  %780 = vmatprep.subr.bf16.mxu0 0
  %781 = vmatpush1.bf16.msra.mxu0 0
  %782 = vmatprep.mubr.bf16.mxu0 0
  %783 = vmatmul.mubr.bf16.gmra.mrb[0].mxu0 %v749
  %v784 = vpop.f32.mrb[0].mxu0
  %v785 = vadd.f32 0.0, %v784
  %v786 = vpop.f32.mrb[0].mxu0
  %v787 = vadd.f32 0.0, %v786
  %v788 = vpop.f32.mrb[0].mxu0
  %v789 = vpop.f32.mrb[0].mxu0
  %790 = vdwg.mxu0
  %791 = vmatprep.subr.bf16.mxu0 0
  %792 = vmatpush1.bf16.msra.mxu0 %v154
  %793 = vmatprep.subr.bf16.mxu0 0
  %794 = vmatpush1.bf16.msra.mxu0 %v157
  %795 = vmatprep.subr.bf16.mxu0 0
  %796 = vmatpush1.bf16.msra.mxu0 %v160
  %797 = vmatprep.subr.bf16.mxu0 0
  %798 = vmatpush1.bf16.msra.mxu0 %v163
  %799 = vmatprep.subr.bf16.mxu0 0
  %800 = vmatpush1.bf16.msra.mxu0 %v166
  %801 = vmatprep.subr.bf16.mxu0 0
  %802 = vmatpush1.bf16.msra.mxu0 %v169
  %803 = vmatprep.subr.bf16.mxu0 0
  %804 = vmatpush1.bf16.msra.mxu0 %v172
  %805 = vmatprep.subr.bf16.mxu0 0
  %806 = vmatpush1.bf16.msra.mxu0 %v175
  %807 = vmatprep.subr.bf16.mxu0 0
  %808 = vmatpush1.bf16.msra.mxu0 0
  %809 = vmatprep.subr.bf16.mxu0 0
  %810 = vmatpush1.bf16.msra.mxu0 0
  %811 = vmatprep.subr.bf16.mxu0 0
  %812 = vmatpush1.bf16.msra.mxu0 0
  %813 = vmatprep.subr.bf16.mxu0 0
  %814 = vmatpush1.bf16.msra.mxu0 0
  %815 = vmatprep.subr.bf16.mxu0 0
  %816 = vmatpush1.bf16.msra.mxu0 0
  %817 = vmatprep.subr.bf16.mxu0 0
  %818 = vmatpush1.bf16.msra.mxu0 0
  %819 = vmatprep.subr.bf16.mxu0 0
  %820 = vmatpush1.bf16.msra.mxu0 0
  %821 = vmatprep.subr.bf16.mxu0 0
  %822 = vmatpush1.bf16.msra.mxu0 0
  %823 = vmatprep.mubr.bf16.mxu0 0
  %824 = vmatmul.mubr.bf16.gmra.mrb[0].mxu0 %v749
  %v825 = vpop.f32.mrb[0].mxu0
  %v826 = vadd.f32 0.0, %v825
  %v827 = vpop.f32.mrb[0].mxu0
  %v828 = vpop.f32.mrb[0].mxu0
  %v829 = vpop.f32.mrb[0].mxu0
  %830 = vdwg.mxu0
  %v831 = vadd.f32 %v746, %v785
  %v832 = vxor.u32 %v831, 2147483648
  %v833 = vmul.f32 %v832, 1.442695
  %v834 = vpow.pop %v833
  %v835 = vadd.f32 %v834, 1.0
  %v836 = vrcp.pop %v835
  %v837 = vmul.f32 1.0, %v836
  %v838 = vadd.f32 %v747, %v787
  %v839 = vxor.u32 %v838, 2147483648
  %v840 = vmul.f32 %v839, 1.442695
  %v841 = vpow.pop %v840
  %v842 = vadd.f32 %v841, 1.0
  %v843 = vrcp.pop %v842
  %v844 = vmul.f32 1.0, %v843
  %v845 = vadd.f32 %v826, %v63
  %v846 = vmul.f32 %v837, %v845
  %v847 = vadd.f32 %v748, %v846
  %v848 = vtanh.pop %v847
  %v849 = vsub.f32 1.0, %v844
  %v850 = vmul.f32 %v849, %v848
  %v851 = vmul.f32 %v844, %v742
  %v852 = vadd.f32 %v850, %v851
  %s853 = scalar_lea.vmem %s0, 72
  %v854 = vld [vmem:[%s853] sm:$0xff]
  %v855 = vld [vmem:[%s853 + $0x8] sm:$0xf]
  %v856 = vunpack.c.l.bf16 %v854
  %v857 = vunpack.c.h.bf16 %v854
  %v858 = vunpack.c.l.bf16 %v855
  %v859 = vpack.c.bf16 %v852, %v852
  %860 = vmatprep.subr.bf16.mxu0 %v153
  %861 = vmatpush1.bf16.msra.mxu0 %v152
  %862 = vmatprep.subr.bf16.mxu0 %v156
  %863 = vmatpush1.bf16.msra.mxu0 %v155
  %864 = vmatprep.subr.bf16.mxu0 %v159
  %865 = vmatpush1.bf16.msra.mxu0 %v158
  %866 = vmatprep.subr.bf16.mxu0 %v162
  %867 = vmatpush1.bf16.msra.mxu0 %v161
  %868 = vmatprep.subr.bf16.mxu0 %v165
  %869 = vmatpush1.bf16.msra.mxu0 %v164
  %870 = vmatprep.subr.bf16.mxu0 %v168
  %871 = vmatpush1.bf16.msra.mxu0 %v167
  %872 = vmatprep.subr.bf16.mxu0 %v171
  %873 = vmatpush1.bf16.msra.mxu0 %v170
  %874 = vmatprep.subr.bf16.mxu0 %v174
  %875 = vmatpush1.bf16.msra.mxu0 %v173
  %876 = vmatprep.subr.bf16.mxu0 0
  %877 = vmatpush1.bf16.msra.mxu0 0
  %878 = vmatprep.subr.bf16.mxu0 0
  %879 = vmatpush1.bf16.msra.mxu0 0
  %880 = vmatprep.subr.bf16.mxu0 0
  %881 = vmatpush1.bf16.msra.mxu0 0
  %882 = vmatprep.subr.bf16.mxu0 0
  %883 = vmatpush1.bf16.msra.mxu0 0
  %884 = vmatprep.subr.bf16.mxu0 0
  %885 = vmatpush1.bf16.msra.mxu0 0
  %886 = vmatprep.subr.bf16.mxu0 0
  %887 = vmatpush1.bf16.msra.mxu0 0
  %888 = vmatprep.subr.bf16.mxu0 0
  %889 = vmatpush1.bf16.msra.mxu0 0
  %890 = vmatprep.subr.bf16.mxu0 0
  %891 = vmatpush1.bf16.msra.mxu0 0
  %892 = vmatprep.mubr.bf16.mxu0 0
  %893 = vmatmul.mubr.bf16.gmra.mrb[0].mxu0 %v859
  %v894 = vpop.f32.mrb[0].mxu0
  %v895 = vadd.f32 0.0, %v894
  %v896 = vpop.f32.mrb[0].mxu0
  %v897 = vadd.f32 0.0, %v896
  %v898 = vpop.f32.mrb[0].mxu0
  %v899 = vpop.f32.mrb[0].mxu0
  %900 = vdwg.mxu0
  %901 = vmatprep.subr.bf16.mxu0 0
  %902 = vmatpush1.bf16.msra.mxu0 %v154
  %903 = vmatprep.subr.bf16.mxu0 0
  %904 = vmatpush1.bf16.msra.mxu0 %v157
  %905 = vmatprep.subr.bf16.mxu0 0
  %906 = vmatpush1.bf16.msra.mxu0 %v160
  %907 = vmatprep.subr.bf16.mxu0 0
  %908 = vmatpush1.bf16.msra.mxu0 %v163
  %909 = vmatprep.subr.bf16.mxu0 0
  %910 = vmatpush1.bf16.msra.mxu0 %v166
  %911 = vmatprep.subr.bf16.mxu0 0
  %912 = vmatpush1.bf16.msra.mxu0 %v169
  %913 = vmatprep.subr.bf16.mxu0 0
  %914 = vmatpush1.bf16.msra.mxu0 %v172
  %915 = vmatprep.subr.bf16.mxu0 0
  %916 = vmatpush1.bf16.msra.mxu0 %v175
  %917 = vmatprep.subr.bf16.mxu0 0
  %918 = vmatpush1.bf16.msra.mxu0 0
  %919 = vmatprep.subr.bf16.mxu0 0
  %920 = vmatpush1.bf16.msra.mxu0 0
  %921 = vmatprep.subr.bf16.mxu0 0
  %922 = vmatpush1.bf16.msra.mxu0 0
  %923 = vmatprep.subr.bf16.mxu0 0
  %924 = vmatpush1.bf16.msra.mxu0 0
  %925 = vmatprep.subr.bf16.mxu0 0
  %926 = vmatpush1.bf16.msra.mxu0 0
  %927 = vmatprep.subr.bf16.mxu0 0
  %928 = vmatpush1.bf16.msra.mxu0 0
  %929 = vmatprep.subr.bf16.mxu0 0
  %930 = vmatpush1.bf16.msra.mxu0 0
  %931 = vmatprep.subr.bf16.mxu0 0
  %932 = vmatpush1.bf16.msra.mxu0 0
  %933 = vmatprep.mubr.bf16.mxu0 0
  %934 = vmatmul.mubr.bf16.gmra.mrb[0].mxu0 %v859
  %v935 = vpop.f32.mrb[0].mxu0
  %v936 = vadd.f32 0.0, %v935
  %v937 = vpop.f32.mrb[0].mxu0
  %v938 = vpop.f32.mrb[0].mxu0
  %v939 = vpop.f32.mrb[0].mxu0
  %940 = vdwg.mxu0
  %v941 = vadd.f32 %v856, %v895
  %v942 = vxor.u32 %v941, 2147483648
  %v943 = vmul.f32 %v942, 1.442695
  %v944 = vpow.pop %v943
  %v945 = vadd.f32 %v944, 1.0
  %v946 = vrcp.pop %v945
  %v947 = vmul.f32 1.0, %v946
  %v948 = vadd.f32 %v857, %v897
  %v949 = vxor.u32 %v948, 2147483648
  %v950 = vmul.f32 %v949, 1.442695
  %v951 = vpow.pop %v950
  %v952 = vadd.f32 %v951, 1.0
  %v953 = vrcp.pop %v952
  %v954 = vmul.f32 1.0, %v953
  %v955 = vadd.f32 %v936, %v63
  %v956 = vmul.f32 %v947, %v955
  %v957 = vadd.f32 %v858, %v956
  %v958 = vtanh.pop %v957
  %v959 = vsub.f32 1.0, %v954
  %v960 = vmul.f32 %v959, %v958
  %v961 = vmul.f32 %v954, %v852
  %v962 = vadd.f32 %v960, %v961
  %s963 = scalar_lea.vmem %s0, 84
  %v964 = vld [vmem:[%s963] sm:$0xff]
  %v965 = vld [vmem:[%s963 + $0x8] sm:$0xf]
  %v966 = vunpack.c.l.bf16 %v964
  %v967 = vunpack.c.h.bf16 %v964
  %v968 = vunpack.c.l.bf16 %v965
  %v969 = vpack.c.bf16 %v962, %v962
  %970 = vmatprep.subr.bf16.mxu0 %v153
  %971 = vmatpush1.bf16.msra.mxu0 %v152
  %972 = vmatprep.subr.bf16.mxu0 %v156
  %973 = vmatpush1.bf16.msra.mxu0 %v155
  %974 = vmatprep.subr.bf16.mxu0 %v159
  %975 = vmatpush1.bf16.msra.mxu0 %v158
  %976 = vmatprep.subr.bf16.mxu0 %v162
  %977 = vmatpush1.bf16.msra.mxu0 %v161
  %978 = vmatprep.subr.bf16.mxu0 %v165
  %979 = vmatpush1.bf16.msra.mxu0 %v164
  %980 = vmatprep.subr.bf16.mxu0 %v168
  %981 = vmatpush1.bf16.msra.mxu0 %v167
  %982 = vmatprep.subr.bf16.mxu0 %v171
  %983 = vmatpush1.bf16.msra.mxu0 %v170
  %984 = vmatprep.subr.bf16.mxu0 %v174
  %985 = vmatpush1.bf16.msra.mxu0 %v173
  %986 = vmatprep.subr.bf16.mxu0 0
  %987 = vmatpush1.bf16.msra.mxu0 0
  %988 = vmatprep.subr.bf16.mxu0 0
  %989 = vmatpush1.bf16.msra.mxu0 0
  %990 = vmatprep.subr.bf16.mxu0 0
  %991 = vmatpush1.bf16.msra.mxu0 0
  %992 = vmatprep.subr.bf16.mxu0 0
  %993 = vmatpush1.bf16.msra.mxu0 0
  %994 = vmatprep.subr.bf16.mxu0 0
  %995 = vmatpush1.bf16.msra.mxu0 0
  %996 = vmatprep.subr.bf16.mxu0 0
  %997 = vmatpush1.bf16.msra.mxu0 0
  %998 = vmatprep.subr.bf16.mxu0 0
  %999 = vmatpush1.bf16.msra.mxu0 0
  %1000 = vmatprep.subr.bf16.mxu0 0
  %1001 = vmatpush1.bf16.msra.mxu0 0
  %1002 = vmatprep.mubr.bf16.mxu0 0
  %1003 = vmatmul.mubr.bf16.gmra.mrb[0].mxu0 %v969
  %v1004 = vpop.f32.mrb[0].mxu0
  %v1005 = vadd.f32 0.0, %v1004
  %v1006 = vpop.f32.mrb[0].mxu0
  %v1007 = vadd.f32 0.0, %v1006
  %v1008 = vpop.f32.mrb[0].mxu0
  %v1009 = vpop.f32.mrb[0].mxu0
  %1010 = vdwg.mxu0
  %1011 = vmatprep.subr.bf16.mxu0 0
  %1012 = vmatpush1.bf16.msra.mxu0 %v154
  %1013 = vmatprep.subr.bf16.mxu0 0
  %1014 = vmatpush1.bf16.msra.mxu0 %v157
  %1015 = vmatprep.subr.bf16.mxu0 0
  %1016 = vmatpush1.bf16.msra.mxu0 %v160
  %1017 = vmatprep.subr.bf16.mxu0 0
  %1018 = vmatpush1.bf16.msra.mxu0 %v163
  %1019 = vmatprep.subr.bf16.mxu0 0
  %1020 = vmatpush1.bf16.msra.mxu0 %v166
  %1021 = vmatprep.subr.bf16.mxu0 0
  %1022 = vmatpush1.bf16.msra.mxu0 %v169
  %1023 = vmatprep.subr.bf16.mxu0 0
  %1024 = vmatpush1.bf16.msra.mxu0 %v172
  %1025 = vmatprep.subr.bf16.mxu0 0
  %1026 = vmatpush1.bf16.msra.mxu0 %v175
  %1027 = vmatprep.subr.bf16.mxu0 0
  %1028 = vmatpush1.bf16.msra.mxu0 0
  %1029 = vmatprep.subr.bf16.mxu0 0
  %1030 = vmatpush1.bf16.msra.mxu0 0
  %1031 = vmatprep.subr.bf16.mxu0 0
  %1032 = vmatpush1.bf16.msra.mxu0 0
  %1033 = vmatprep.subr.bf16.mxu0 0
  %1034 = vmatpush1.bf16.msra.mxu0 0
  %1035 = vmatprep.subr.bf16.mxu0 0
  %1036 = vmatpush1.bf16.msra.mxu0 0
  %1037 = vmatprep.subr.bf16.mxu0 0
  %1038 = vmatpush1.bf16.msra.mxu0 0
  %1039 = vmatprep.subr.bf16.mxu0 0
  %1040 = vmatpush1.bf16.msra.mxu0 0
  %1041 = vmatprep.subr.bf16.mxu0 0
  %1042 = vmatpush1.bf16.msra.mxu0 0
  %1043 = vmatprep.mubr.bf16.mxu0 0
  %1044 = vmatmul.mubr.bf16.gmra.mrb[0].mxu0 %v969
  %v1045 = vpop.f32.mrb[0].mxu0
  %v1046 = vadd.f32 0.0, %v1045
  %v1047 = vpop.f32.mrb[0].mxu0
  %v1048 = vpop.f32.mrb[0].mxu0
  %v1049 = vpop.f32.mrb[0].mxu0
  %1050 = vdwg.mxu0
  %v1051 = vadd.f32 %v966, %v1005
  %v1052 = vxor.u32 %v1051, 2147483648
  %v1053 = vmul.f32 %v1052, 1.442695
  %v1054 = vpow.pop %v1053
  %v1055 = vadd.f32 %v1054, 1.0
  %v1056 = vrcp.pop %v1055
  %v1057 = vmul.f32 1.0, %v1056
  %v1058 = vadd.f32 %v967, %v1007
  %v1059 = vxor.u32 %v1058, 2147483648
  %v1060 = vmul.f32 %v1059, 1.442695
  %v1061 = vpow.pop %v1060
  %v1062 = vadd.f32 %v1061, 1.0
  %v1063 = vrcp.pop %v1062
  %v1064 = vmul.f32 1.0, %v1063
  %v1065 = vadd.f32 %v1046, %v63
  %v1066 = vmul.f32 %v1057, %v1065
  %v1067 = vadd.f32 %v968, %v1066
  %v1068 = vtanh.pop %v1067
  %v1069 = vsub.f32 1.0, %v1064
  %v1070 = vmul.f32 %v1069, %v1068
  %v1071 = vmul.f32 %v1064, %v962
  %v1072 = vadd.f32 %v1070, %v1071
  %1073 = vst [vmem:[#allocation2] sm:$0xff] %v1072
  // Predicated region
  $region26: #{gru_forward.3} parent=0 // pred_check
    %p1074 = pneg %p21
  $region27: #{gru_forward.3} parent=0 // pred_check_branch
    %1076 = sbr.rel (%p1074) target = $region29
  $region28: #{gru_forward.3} parent=0 // pred_region
    %v1077 = vpack.c.bf16 %v1072, %v1072
    %v1078 = vld [vmem:[%s3] sm:$0xf]
    %v1079 = vld [vmem:[%s3 + $0x4] sm:$0xf]
    %v1080 = vld [vmem:[%s3 + $0x8] sm:$0xf]
    %v1081 = vld [vmem:[%s3 + $0xc] sm:$0xf]
    %v1082 = vld [vmem:[%s3 + $0x10] sm:$0xf]
    %v1083 = vld [vmem:[%s3 + $0x14] sm:$0xf]
    %v1084 = vld [vmem:[%s3 + $0x18] sm:$0xf]
    %v1085 = vld [vmem:[%s3 + $0x1c] sm:$0xf]
    %v1086 = vld [vmem:[%s3 + $0x20] sm:$0xf]
    %v1087 = vld [vmem:[%s3 + $0x24] sm:$0xf]
    %v1088 = vld [vmem:[%s3 + $0x28] sm:$0xf]
    %v1089 = vld [vmem:[%s3 + $0x2c] sm:$0xf]
    %v1090 = vld [vmem:[%s3 + $0x30] sm:$0xf]
    %v1091 = vld [vmem:[%s3 + $0x34] sm:$0xf]
    %v1092 = vld [vmem:[%s3 + $0x38] sm:$0xf]
    %v1093 = vld [vmem:[%s3 + $0x3c] sm:$0xf]
    %v1094 = vld [vmem:[%s4] sm:$0x1]
    %v1096 = vlaneseq
    %v1097 = vshrl.u32 %v1096, 7
    %v1098 = vsub.s32 0, %v1097
    %v1099 = vrot.slane %v1094, %v1098
    %v1117 = vunpack.c.l.b16 %v1078
    %v1118 = vunpack.c.l.b16 %v1079
    %v1119 = vunpack.c.l.b16 %v1080
    %v1120 = vunpack.c.l.b16 %v1081
    %v1121 = vunpack.c.l.b16 %v1082
    %v1122 = vunpack.c.l.b16 %v1083
    %v1123 = vunpack.c.l.b16 %v1084
    %v1124 = vunpack.c.l.b16 %v1085
    %v1125 = vunpack.c.l.b16 %v1086
    %v1126 = vunpack.c.l.b16 %v1087
    %v1127 = vunpack.c.l.b16 %v1088
    %v1128 = vunpack.c.l.b16 %v1089
    %v1129 = vunpack.c.l.b16 %v1090
    %v1130 = vunpack.c.l.b16 %v1091
    %v1131 = vunpack.c.l.b16 %v1092
    %v1132 = vunpack.c.l.b16 %v1093
    %v1133 = vpack.c.b16 %v1118, %v1117
    %v1134 = vpack.c.b16 %v1120, %v1119
    %v1135 = vpack.c.b16 %v1122, %v1121
    %v1136 = vpack.c.b16 %v1124, %v1123
    %v1137 = vpack.c.b16 %v1126, %v1125
    %v1138 = vpack.c.b16 %v1128, %v1127
    %v1139 = vpack.c.b16 %v1130, %v1129
    %v1140 = vpack.c.b16 %v1132, %v1131
    %1149 = vmatprep.subr.bf16.mxu0 0
    %1150 = vmatpush1.bf16.msra.mxu0 %v1133
    %1151 = vmatprep.subr.bf16.mxu0 0
    %1152 = vmatpush1.bf16.msra.mxu0 %v1134
    %1153 = vmatprep.subr.bf16.mxu0 0
    %1154 = vmatpush1.bf16.msra.mxu0 %v1135
    %1155 = vmatprep.subr.bf16.mxu0 0
    %1156 = vmatpush1.bf16.msra.mxu0 %v1136
    %1157 = vmatprep.subr.bf16.mxu0 0
    %1158 = vmatpush1.bf16.msra.mxu0 %v1137
    %1159 = vmatprep.subr.bf16.mxu0 0
    %1160 = vmatpush1.bf16.msra.mxu0 %v1138
    %1161 = vmatprep.subr.bf16.mxu0 0
    %1162 = vmatpush1.bf16.msra.mxu0 %v1139
    %1163 = vmatprep.subr.bf16.mxu0 0
    %1164 = vmatpush1.bf16.msra.mxu0 %v1140
    %1165 = vmatprep.subr.bf16.mxu0 0
    %1166 = vmatpush1.bf16.msra.mxu0 0
    %1167 = vmatprep.subr.bf16.mxu0 0
    %1168 = vmatpush1.bf16.msra.mxu0 0
    %1169 = vmatprep.subr.bf16.mxu0 0
    %1170 = vmatpush1.bf16.msra.mxu0 0
    %1171 = vmatprep.subr.bf16.mxu0 0
    %1172 = vmatpush1.bf16.msra.mxu0 0
    %1173 = vmatprep.subr.bf16.mxu0 0
    %1174 = vmatpush1.bf16.msra.mxu0 0
    %1175 = vmatprep.subr.bf16.mxu0 0
    %1176 = vmatpush1.bf16.msra.mxu0 0
    %1177 = vmatprep.subr.bf16.mxu0 0
    %1178 = vmatpush1.bf16.msra.mxu0 0
    %1179 = vmatprep.subr.bf16.mxu0 0
    %1180 = vmatpush1.bf16.msra.mxu0 0
    %1181 = vmatprep.mubr.bf16.mxu0 0
    %1182 = vmatmul.mubr.bf16.gmra.mrb[0].mxu0 %v1077
    %v1183 = vpop.f32.mrb[0].mxu0
    %v1184 = vadd.f32 %v1099, %v1183
    %v1185 = vpop.f32.mrb[0].mxu0
    %v1186 = vpop.f32.mrb[0].mxu0
    %v1187 = vpop.f32.mrb[0].mxu0
    %1188 = vdwg.mxu0
    %1189 = vst [vmem:[%s5] sm:$0xff] %v1184
  $region29: #{gru_forward.3} parent=0 // pred_fallthru
    _
  // Predicated region
  $region30: #{gru_forward.3} parent=0 // pred_check
    _
  $region31: #{gru_forward.3} parent=0 // pred_check_branch
    %1191 = sbr.rel (0) target = $region33
  $region32: #{gru_forward.3} parent=0 // pred_region
    _
  $region33: #{gru_forward.3} parent=0 // pred_fallthru
    _
  // Predicated region
  $region34: #{gru_forward.3} parent=0 // pred_check
    _
  $region35: #{gru_forward.3} parent=0 // pred_check_branch
    %1193 = sbr.rel (0) target = $region37
  $region36: #{gru_forward.3} parent=0 // pred_region
    _
  $region37: #{gru_forward.3} parent=0 // pred_fallthru
    _

// kernel: gru_forward.2
$region0: #{gru_forward.2}
  #allocation0 [shape = 'u32[]', space=smem, size = 0x4, offset = 0x4, fixed_abs, tag = 'smem constant byte address 0x4 - core index']
  #allocation1 [shape = 'u32[144,128]{1,0:T(1,128)}', space=vmem, size = 0x12000, scoped, tag = 'internal scratch']
  #allocation2 [shape = 'f32[8,128]{1,0:T(8,128)}', space=vmem, size = 0x1000, scoped, tag = 'scratch operand']
  #allocation3 [shape = 'f32[8,8,384]{2,1,0:T(8,128)}', space=vmem, size = 0x18000, scoped, tag = 'scratch operand']
  #allocation4 [shape = 'f32[8,8,128]{2,1,0:T(8,128)}', space=vmem, size = 0x8000, scoped, tag = 'scratch operand']
  %s0 = inlined_call_operand.vmem [shape: bf16[8,8,16], index: 0, kind: input, shape index: {}]
  %s1 = inlined_call_operand.vmem [shape: bf16[16,384], index: 1, kind: input, shape index: {}]
  %s2 = inlined_call_operand.vmem [shape: f32[1,384], index: 2, kind: input, shape index: {}]
  %s3 = inlined_call_operand.hbm [shape: bf16[128,384], index: 3, kind: input, shape index: {}]
  %s4 = inlined_call_operand.vmem [shape: f32[1,128], index: 4, kind: input, shape index: {}]
  %s5 = inlined_call_operand.hbm [shape: bf16[128,384], index: 5, kind: input, shape index: {}]
  %s6 = inlined_call_operand.vmem [shape: f32[1,384], index: 6, kind: input, shape index: {}]
  %s7 = inlined_call_operand.vmem [shape: bf16[8,8,384], index: 7, kind: output, shape index: {}]
  %s8 = sld [smem:[#allocation0]]
  $region50: #{gru_forward.2} parent=0
    _
  %s10 = ssub.s32 1, %s8
  %s11 = scalar_select 0, %s10, %s8
  $region1: #{gru_forward.2} parent=0
    #allocation5 [shape = 'u8[98304]{0}', space=vmem, size = 0x18000, scoped, tag = 'input window, operand 3, single buffered']
    #allocation6 [shape = 's32[1]{0}', space=sflag, size = 0x4, scoped, tag = 'scoped memory for gru_forward.2']
    #allocation7 [shape = 'u8[98304]{0}', space=vmem, size = 0x18000, scoped, tag = 'input window, operand 5, single buffered']
    #allocation8 [shape = 's32[1]{0}', space=sflag, size = 0x4, scoped, tag = 'scoped memory for gru_forward.2']
    %12 = vsyncpa [#allocation6], 0
    %13 = vsyncpa [#allocation8], 0
    // Predicated region
    $region2: #{gru_forward.2} parent=1 // pred_check
      _
    $region3: #{gru_forward.2} parent=1 // pred_check_branch
      %15 = sbr.rel (0) target = $region5
    $region4: #{gru_forward.2} parent=1 // pred_region
      _
    $region5: #{gru_forward.2} parent=1 // pred_fallthru
      _
    // Predicated region
    $region6: #{gru_forward.2} parent=1 // pred_check
      _
    $region7: #{gru_forward.2} parent=1 // pred_check_branch
      %17 = sbr.rel (0) target = $region9
    $region8: #{gru_forward.2} parent=1 // pred_region
      _
    $region9: #{gru_forward.2} parent=1 // pred_fallthru
      _
    // Predicated region
    $region10: #{gru_forward.2} parent=1 // pred_check
      _
    $region11: #{gru_forward.2} parent=1 // pred_check_branch
      %19 = sbr.rel (0) target = $region13
    $region12: #{gru_forward.2} parent=1 // pred_region
      _
    $region13: #{gru_forward.2} parent=1 // pred_fallthru
      _
    // Predicated region
    $region14: #{gru_forward.2} parent=1 // pred_check
      _
    $region15: #{gru_forward.2} parent=1 // pred_check_branch
      %21 = sbr.rel (0) target = $region17
    $region16: #{gru_forward.2} parent=1 // pred_region
      %s23 = ssub.s32 3072, 3072
      %24 = vsyncadd [#allocation6], %s23
      %s25 = sshll.u32 [#allocation5], 4
      %s26 = int_to_ptr.vmem [resolvable:$true] %s25
      %31 = dma.hbm_to_vmem [thread:$0]  %s3, 3072, %s26, [#allocation6], 192, 192, 12
    $region17: #{gru_forward.2} parent=1 // pred_fallthru
      _
    // Predicated region
    $region18: #{gru_forward.2} parent=1 // pred_check
      _
    $region19: #{gru_forward.2} parent=1 // pred_check_branch
      %33 = sbr.rel (0) target = $region21
    $region20: #{gru_forward.2} parent=1 // pred_region
      _
    $region21: #{gru_forward.2} parent=1 // pred_fallthru
      _
    // Predicated region
    $region22: #{gru_forward.2} parent=1 // pred_check
      _
    $region23: #{gru_forward.2} parent=1 // pred_check_branch
      %35 = sbr.rel (0) target = $region25
    $region24: #{gru_forward.2} parent=1 // pred_region
      %s37 = ssub.s32 3072, 3072
      %38 = vsyncadd [#allocation8], %s37
      %s39 = sshll.u32 [#allocation7], 4
      %s40 = int_to_ptr.vmem [resolvable:$true] %s39
      %45 = dma.hbm_to_vmem [thread:$0]  %s5, 3072, %s40, [#allocation8], 192, 192, 12
    $region25: #{gru_forward.2} parent=1 // pred_fallthru
      _
    // Predicated region
    $region26: #{gru_forward.2} parent=1 // pred_check
      _
    $region27: #{gru_forward.2} parent=1 // pred_check_branch
      %47 = sbr.rel (0) target = $region29
    $region28: #{gru_forward.2} parent=1 // pred_region
      _
    $region29: #{gru_forward.2} parent=1 // pred_fallthru
      _
    // Predicated region
    $region30: #{gru_forward.2} parent=1 // pred_check
      _
    $region31: #{gru_forward.2} parent=1 // pred_check_branch
      %49 = sbr.rel (0) target = $region33
    $region32: #{gru_forward.2} parent=1 // pred_region
      %50 = dma.done [#allocation6], 3072
    $region33: #{gru_forward.2} parent=1 // pred_fallthru
      _
    // Predicated region
    $region34: #{gru_forward.2} parent=1 // pred_check
      _
    $region35: #{gru_forward.2} parent=1 // pred_check_branch
      %52 = sbr.rel (0) target = $region37
    $region36: #{gru_forward.2} parent=1 // pred_region
      %53 = dma.done [#allocation8], 3072
    $region37: #{gru_forward.2} parent=1 // pred_fallthru
      _
    %p55 = scmp.eq.s32.totalorder 0, 0
    // Predicated region
    $region38: #{gru_forward.2} parent=1 // pred_check
      %p56 = pneg %p55
    $region39: #{gru_forward.2} parent=1 // pred_check_branch
      %58 = sbr.rel (%p56) target = $region41
    $region40: #{gru_forward.2} parent=1 // pred_region
      %59 = vst [vmem:[#allocation2] sm:$0xff] 0.0
    $region41: #{gru_forward.2} parent=1 // pred_fallthru
      _
    %v60 = vld [vmem:[#allocation5] sm:$0xff]
    %v61 = vld [vmem:[#allocation5 + $0x8] sm:$0xf]
    %v62 = vld [vmem:[#allocation5 + $0xc] sm:$0xff]
    %v63 = vld [vmem:[#allocation5 + $0x14] sm:$0xf]
    %v64 = vld [vmem:[#allocation5 + $0x18] sm:$0xff]
    %v65 = vld [vmem:[#allocation5 + $0x20] sm:$0xf]
    %v66 = vld [vmem:[#allocation5 + $0x24] sm:$0xff]
    %v67 = vld [vmem:[#allocation5 + $0x2c] sm:$0xf]
    %v68 = vld [vmem:[#allocation5 + $0x30] sm:$0xff]
    %v69 = vld [vmem:[#allocation5 + $0x38] sm:$0xf]
    %v70 = vld [vmem:[#allocation5 + $0x3c] sm:$0xff]
    %v71 = vld [vmem:[#allocation5 + $0x44] sm:$0xf]
    %v72 = vld [vmem:[#allocation5 + $0x48] sm:$0xff]
    %v73 = vld [vmem:[#allocation5 + $0x50] sm:$0xf]
    %v74 = vld [vmem:[#allocation5 + $0x54] sm:$0xff]
    %v75 = vld [vmem:[#allocation5 + $0x5c] sm:$0xf]
    %v76 = vld [vmem:[#allocation5 + $0x60] sm:$0xff]
    %v77 = vld [vmem:[#allocation5 + $0x68] sm:$0xf]
    %v78 = vld [vmem:[#allocation5 + $0x6c] sm:$0xff]
    %v79 = vld [vmem:[#allocation5 + $0x74] sm:$0xf]
    %v80 = vld [vmem:[#allocation5 + $0x78] sm:$0xff]
    %v81 = vld [vmem:[#allocation5 + $0x80] sm:$0xf]
    %v82 = vld [vmem:[#allocation5 + $0x84] sm:$0xff]
    %v83 = vld [vmem:[#allocation5 + $0x8c] sm:$0xf]
    %v84 = vld [vmem:[#allocation5 + $0x90] sm:$0xff]
    %v85 = vld [vmem:[#allocation5 + $0x98] sm:$0xf]
    %v86 = vld [vmem:[#allocation5 + $0x9c] sm:$0xff]
    %v87 = vld [vmem:[#allocation5 + $0xa4] sm:$0xf]
    %v88 = vld [vmem:[#allocation5 + $0xa8] sm:$0xff]
    %v89 = vld [vmem:[#allocation5 + $0xb0] sm:$0xf]
    %v90 = vld [vmem:[#allocation5 + $0xb4] sm:$0xff]
    %v91 = vld [vmem:[#allocation5 + $0xbc] sm:$0xf]
    %v92 = vld [vmem:[%s4] sm:$0x1]
    %v94 = vlaneseq
    %v95 = vshrl.u32 %v94, 7
    %v96 = vsub.s32 0, %v95
    %v97 = vrot.slane %v92, %v96
    %v99 = vld [vmem:[%s0] sm:$0xf]
    %v100 = vld [vmem:[%s0 + $0x4] sm:$0xf]
    %v101 = vld [vmem:[%s0 + $0x8] sm:$0xf]
    %v102 = vld [vmem:[%s0 + $0xc] sm:$0xf]
    %v103 = vld [vmem:[%s0 + $0x10] sm:$0xf]
    %v104 = vld [vmem:[%s0 + $0x14] sm:$0xf]
    %v105 = vld [vmem:[%s0 + $0x18] sm:$0xf]
    %v106 = vld [vmem:[%s0 + $0x1c] sm:$0xf]
    %v107 = vld [vmem:[%s1] sm:$0xff]
    %v108 = vld [vmem:[%s1 + $0x8] sm:$0xf]
    %v109 = vld [vmem:[%s1 + $0xc] sm:$0xff]
    %v110 = vld [vmem:[%s1 + $0x14] sm:$0xf]
    %v111 = vld [vmem:[%s2] sm:$0x7]
    %v113 = vlaneseq
    %v114 = vshrl.u32 %v113, 7
    %v115 = vsub.s32 0, %v114
    %v116 = vrot.slane %v111, %v115
    %v117 = vlaneseq
    %v118 = vshrl.u32 %v117, 7
    %v119 = vsub.s32 1, %v118
    %v120 = vrot.slane %v111, %v119
    %v121 = vlaneseq
    %v122 = vshrl.u32 %v121, 7
    %v123 = vsub.s32 2, %v122
    %v124 = vrot.slane %v111, %v123
    %v136 = vunpack.c.l.b16 %v99
    %v137 = vunpack.c.l.b16 %v100
    %v138 = vunpack.c.l.b16 %v101
    %v139 = vunpack.c.l.b16 %v102
    %v140 = vunpack.c.l.b16 %v103
    %v141 = vunpack.c.l.b16 %v104
    %v142 = vunpack.c.l.b16 %v105
    %v143 = vunpack.c.l.b16 %v106
    %v144 = vpack.c.b16 %v137, %v136
    %v145 = vpack.c.b16 %v139, %v138
    %v146 = vpack.c.b16 %v141, %v140
    %v147 = vpack.c.b16 %v143, %v142
    %v152 = vunpack.c.l.b16 %v107
    %v153 = vunpack.c.h.b16 %v107
    %v154 = vunpack.c.l.b16 %v108
    %v155 = vunpack.c.l.b16 %v109
    %v156 = vunpack.c.h.b16 %v109
    %v157 = vunpack.c.l.b16 %v110
    %v158 = vpack.c.b16 %v155, %v152
    %v159 = vpack.c.b16 %v156, %v153
    %v160 = vpack.c.b16 %v157, %v154
    %vm164 = vcmask 130048
    %v166 = vsel %vm164, %v144, 0
    %v169 = vsel %vm164, %v145, 0
    %v172 = vsel %vm164, %v146, 0
    %v175 = vsel %vm164, %v147, 0
    %177 = vmatprep.subr.bf16.mxu0 %v159
    %178 = vmatpush1.bf16.msra.mxu0 %v158
    %179 = vmatprep.subr.bf16.mxu0 0
    %180 = vmatpush1.bf16.msra.mxu0 0
    %181 = vmatprep.subr.bf16.mxu0 0
    %182 = vmatpush1.bf16.msra.mxu0 0
    %183 = vmatprep.subr.bf16.mxu0 0
    %184 = vmatpush1.bf16.msra.mxu0 0
    %185 = vmatprep.subr.bf16.mxu0 0
    %186 = vmatpush1.bf16.msra.mxu0 0
    %187 = vmatprep.subr.bf16.mxu0 0
    %188 = vmatpush1.bf16.msra.mxu0 0
    %189 = vmatprep.subr.bf16.mxu0 0
    %190 = vmatpush1.bf16.msra.mxu0 0
    %191 = vmatprep.subr.bf16.mxu0 0
    %192 = vmatpush1.bf16.msra.mxu0 0
    %193 = vmatprep.subr.bf16.mxu0 0
    %194 = vmatpush1.bf16.msra.mxu0 0
    %195 = vmatprep.subr.bf16.mxu0 0
    %196 = vmatpush1.bf16.msra.mxu0 0
    %197 = vmatprep.subr.bf16.mxu0 0
    %198 = vmatpush1.bf16.msra.mxu0 0
    %199 = vmatprep.subr.bf16.mxu0 0
    %200 = vmatpush1.bf16.msra.mxu0 0
    %201 = vmatprep.subr.bf16.mxu0 0
    %202 = vmatpush1.bf16.msra.mxu0 0
    %203 = vmatprep.subr.bf16.mxu0 0
    %204 = vmatpush1.bf16.msra.mxu0 0
    %205 = vmatprep.subr.bf16.mxu0 0
    %206 = vmatpush1.bf16.msra.mxu0 0
    %207 = vmatprep.subr.bf16.mxu0 0
    %208 = vmatpush1.bf16.msra.mxu0 0
    %209 = vmatprep.mubr.bf16.mxu0 0
    %210 = vmatmul.mubr.bf16.gmra.mrb[0].mxu0 %v166
    %v211 = vpop.f32.mrb[0].mxu0
    %v212 = vadd.f32 %v116, %v211
    %v213 = vpop.f32.mrb[0].mxu0
    %v214 = vadd.f32 %v120, %v213
    %v215 = vpop.f32.mrb[0].mxu0
    %v216 = vadd.f32 %v116, %v215
    %v217 = vpop.f32.mrb[0].mxu0
    %v218 = vadd.f32 %v120, %v217
    %219 = vmatprep.mubr.bf16.mxu0 0
    %220 = vmatmul.mubr.bf16.gmra.mrb[0].mxu0 %v169
    %v221 = vpop.f32.mrb[0].mxu0
    %v222 = vadd.f32 %v116, %v221
    %v223 = vpop.f32.mrb[0].mxu0
    %v224 = vadd.f32 %v120, %v223
    %v225 = vpop.f32.mrb[0].mxu0
    %v226 = vadd.f32 %v116, %v225
    %v227 = vpop.f32.mrb[0].mxu0
    %v228 = vadd.f32 %v120, %v227
    %229 = vmatprep.mubr.bf16.mxu0 0
    %230 = vmatmul.mubr.bf16.gmra.mrb[0].mxu0 %v172
    %v231 = vpop.f32.mrb[0].mxu0
    %v232 = vadd.f32 %v116, %v231
    %v233 = vpop.f32.mrb[0].mxu0
    %v234 = vadd.f32 %v120, %v233
    %v235 = vpop.f32.mrb[0].mxu0
    %v236 = vadd.f32 %v116, %v235
    %v237 = vpop.f32.mrb[0].mxu0
    %v238 = vadd.f32 %v120, %v237
    %239 = vmatprep.mubr.bf16.mxu0 0
    %240 = vmatmul.mubr.bf16.gmra.mrb[0].mxu0 %v175
    %v241 = vpop.f32.mrb[0].mxu0
    %v242 = vadd.f32 %v116, %v241
    %v243 = vpop.f32.mrb[0].mxu0
    %v244 = vadd.f32 %v120, %v243
    %v245 = vpop.f32.mrb[0].mxu0
    %v246 = vadd.f32 %v116, %v245
    %v247 = vpop.f32.mrb[0].mxu0
    %v248 = vadd.f32 %v120, %v247
    %249 = vdwg.mxu0
    %250 = vmatprep.subr.bf16.mxu0 0
    %251 = vmatpush1.bf16.msra.mxu0 %v160
    %252 = vmatprep.subr.bf16.mxu0 0
    %253 = vmatpush1.bf16.msra.mxu0 0
    %254 = vmatprep.subr.bf16.mxu0 0
    %255 = vmatpush1.bf16.msra.mxu0 0
    %256 = vmatprep.subr.bf16.mxu0 0
    %257 = vmatpush1.bf16.msra.mxu0 0
    %258 = vmatprep.subr.bf16.mxu0 0
    %259 = vmatpush1.bf16.msra.mxu0 0
    %260 = vmatprep.subr.bf16.mxu0 0
    %261 = vmatpush1.bf16.msra.mxu0 0
    %262 = vmatprep.subr.bf16.mxu0 0
    %263 = vmatpush1.bf16.msra.mxu0 0
    %264 = vmatprep.subr.bf16.mxu0 0
    %265 = vmatpush1.bf16.msra.mxu0 0
    %266 = vmatprep.subr.bf16.mxu0 0
    %267 = vmatpush1.bf16.msra.mxu0 0
    %268 = vmatprep.subr.bf16.mxu0 0
    %269 = vmatpush1.bf16.msra.mxu0 0
    %270 = vmatprep.subr.bf16.mxu0 0
    %271 = vmatpush1.bf16.msra.mxu0 0
    %272 = vmatprep.subr.bf16.mxu0 0
    %273 = vmatpush1.bf16.msra.mxu0 0
    %274 = vmatprep.subr.bf16.mxu0 0
    %275 = vmatpush1.bf16.msra.mxu0 0
    %276 = vmatprep.subr.bf16.mxu0 0
    %277 = vmatpush1.bf16.msra.mxu0 0
    %278 = vmatprep.subr.bf16.mxu0 0
    %279 = vmatpush1.bf16.msra.mxu0 0
    %280 = vmatprep.subr.bf16.mxu0 0
    %281 = vmatpush1.bf16.msra.mxu0 0
    %282 = vmatprep.mubr.bf16.mxu0 0
    %283 = vmatmul.mubr.bf16.gmra.mrb[0].mxu0 %v166
    %v284 = vpop.f32.mrb[0].mxu0
    %v285 = vadd.f32 %v124, %v284
    %v286 = vpop.f32.mrb[0].mxu0
    %v287 = vpop.f32.mrb[0].mxu0
    %v288 = vadd.f32 %v124, %v287
    %v289 = vpop.f32.mrb[0].mxu0
    %290 = vmatprep.mubr.bf16.mxu0 0
    %291 = vmatmul.mubr.bf16.gmra.mrb[0].mxu0 %v169
    %v292 = vpop.f32.mrb[0].mxu0
    %v293 = vadd.f32 %v124, %v292
    %v294 = vpop.f32.mrb[0].mxu0
    %v295 = vpop.f32.mrb[0].mxu0
    %v296 = vadd.f32 %v124, %v295
    %v297 = vpop.f32.mrb[0].mxu0
    %298 = vmatprep.mubr.bf16.mxu0 0
    %299 = vmatmul.mubr.bf16.gmra.mrb[0].mxu0 %v172
    %v300 = vpop.f32.mrb[0].mxu0
    %v301 = vadd.f32 %v124, %v300
    %v302 = vpop.f32.mrb[0].mxu0
    %v303 = vpop.f32.mrb[0].mxu0
    %v304 = vadd.f32 %v124, %v303
    %v305 = vpop.f32.mrb[0].mxu0
    %306 = vmatprep.mubr.bf16.mxu0 0
    %307 = vmatmul.mubr.bf16.gmra.mrb[0].mxu0 %v175
    %v308 = vpop.f32.mrb[0].mxu0
    %v309 = vadd.f32 %v124, %v308
    %v310 = vpop.f32.mrb[0].mxu0
    %v311 = vpop.f32.mrb[0].mxu0
    %v312 = vadd.f32 %v124, %v311
    %v313 = vpop.f32.mrb[0].mxu0
    %314 = vdwg.mxu0
    %315 = vst [vmem:[#allocation3] sm:$0xff] %v212
    %316 = vst [vmem:[#allocation3 + $0x8] sm:$0xff] %v214
    %317 = vst [vmem:[#allocation3 + $0x10] sm:$0xff] %v285
    %318 = vst [vmem:[#allocation3 + $0x18] sm:$0xff] %v216
    %319 = vst [vmem:[#allocation3 + $0x20] sm:$0xff] %v218
    %320 = vst [vmem:[#allocation3 + $0x28] sm:$0xff] %v288
    %321 = vst [vmem:[#allocation3 + $0x30] sm:$0xff] %v222
    %322 = vst [vmem:[#allocation3 + $0x38] sm:$0xff] %v224
    %323 = vst [vmem:[#allocation3 + $0x40] sm:$0xff] %v293
    %324 = vst [vmem:[#allocation3 + $0x48] sm:$0xff] %v226
    %325 = vst [vmem:[#allocation3 + $0x50] sm:$0xff] %v228
    %326 = vst [vmem:[#allocation3 + $0x58] sm:$0xff] %v296
    %327 = vst [vmem:[#allocation3 + $0x60] sm:$0xff] %v232
    %328 = vst [vmem:[#allocation3 + $0x68] sm:$0xff] %v234
    %329 = vst [vmem:[#allocation3 + $0x70] sm:$0xff] %v301
    %330 = vst [vmem:[#allocation3 + $0x78] sm:$0xff] %v236
    %331 = vst [vmem:[#allocation3 + $0x80] sm:$0xff] %v238
    %332 = vst [vmem:[#allocation3 + $0x88] sm:$0xff] %v304
    %333 = vst [vmem:[#allocation3 + $0x90] sm:$0xff] %v242
    %334 = vst [vmem:[#allocation3 + $0x98] sm:$0xff] %v244
    %335 = vst [vmem:[#allocation3 + $0xa0] sm:$0xff] %v309
    %336 = vst [vmem:[#allocation3 + $0xa8] sm:$0xff] %v246
    %337 = vst [vmem:[#allocation3 + $0xb0] sm:$0xff] %v248
    %338 = vst [vmem:[#allocation3 + $0xb8] sm:$0xff] %v312
    %v339 = vld [vmem:[#allocation2] sm:$0xff]
    %v340 = vld [vmem:[#allocation3] sm:$0xff]
    %v341 = vld [vmem:[#allocation3 + $0x8] sm:$0xff]
    %v342 = vld [vmem:[#allocation3 + $0x10] sm:$0xff]
    %v343 = vpack.c.bf16 %v339, %v339
    %v376 = vunpack.c.l.b16 %v60
    %v377 = vunpack.c.h.b16 %v60
    %v378 = vunpack.c.l.b16 %v61
    %v379 = vunpack.c.l.b16 %v62
    %v380 = vunpack.c.h.b16 %v62
    %v381 = vunpack.c.l.b16 %v63
    %v382 = vunpack.c.l.b16 %v64
    %v383 = vunpack.c.h.b16 %v64
    %v384 = vunpack.c.l.b16 %v65
    %v385 = vunpack.c.l.b16 %v66
    %v386 = vunpack.c.h.b16 %v66
    %v387 = vunpack.c.l.b16 %v67
    %v388 = vunpack.c.l.b16 %v68
    %v389 = vunpack.c.h.b16 %v68
    %v390 = vunpack.c.l.b16 %v69
    %v391 = vunpack.c.l.b16 %v70
    %v392 = vunpack.c.h.b16 %v70
    %v393 = vunpack.c.l.b16 %v71
    %v394 = vunpack.c.l.b16 %v72
    %v395 = vunpack.c.h.b16 %v72
    %v396 = vunpack.c.l.b16 %v73
    %v397 = vunpack.c.l.b16 %v74
    %v398 = vunpack.c.h.b16 %v74
    %v399 = vunpack.c.l.b16 %v75
    %v400 = vunpack.c.l.b16 %v76
    %v401 = vunpack.c.h.b16 %v76
    %v402 = vunpack.c.l.b16 %v77
    %v403 = vunpack.c.l.b16 %v78
    %v404 = vunpack.c.h.b16 %v78
    %v405 = vunpack.c.l.b16 %v79
    %v406 = vunpack.c.l.b16 %v80
    %v407 = vunpack.c.h.b16 %v80
    %v408 = vunpack.c.l.b16 %v81
    %v409 = vunpack.c.l.b16 %v82
    %v410 = vunpack.c.h.b16 %v82
    %v411 = vunpack.c.l.b16 %v83
    %v412 = vunpack.c.l.b16 %v84
    %v413 = vunpack.c.h.b16 %v84
    %v414 = vunpack.c.l.b16 %v85
    %v415 = vunpack.c.l.b16 %v86
    %v416 = vunpack.c.h.b16 %v86
    %v417 = vunpack.c.l.b16 %v87
    %v418 = vunpack.c.l.b16 %v88
    %v419 = vunpack.c.h.b16 %v88
    %v420 = vunpack.c.l.b16 %v89
    %v421 = vunpack.c.l.b16 %v90
    %v422 = vunpack.c.h.b16 %v90
    %v423 = vunpack.c.l.b16 %v91
    %v424 = vpack.c.b16 %v379, %v376
    %v425 = vpack.c.b16 %v380, %v377
    %v426 = vpack.c.b16 %v381, %v378
    %v427 = vpack.c.b16 %v385, %v382
    %v428 = vpack.c.b16 %v386, %v383
    %v429 = vpack.c.b16 %v387, %v384
    %v430 = vpack.c.b16 %v391, %v388
    %v431 = vpack.c.b16 %v392, %v389
    %v432 = vpack.c.b16 %v393, %v390
    %v433 = vpack.c.b16 %v397, %v394
    %v434 = vpack.c.b16 %v398, %v395
    %v435 = vpack.c.b16 %v399, %v396
    %v436 = vpack.c.b16 %v403, %v400
    %v437 = vpack.c.b16 %v404, %v401
    %v438 = vpack.c.b16 %v405, %v402
    %v439 = vpack.c.b16 %v409, %v406
    %v440 = vpack.c.b16 %v410, %v407
    %v441 = vpack.c.b16 %v411, %v408
    %v442 = vpack.c.b16 %v415, %v412
    %v443 = vpack.c.b16 %v416, %v413
    %v444 = vpack.c.b16 %v417, %v414
    %v445 = vpack.c.b16 %v421, %v418
    %v446 = vpack.c.b16 %v422, %v419
    %v447 = vpack.c.b16 %v423, %v420
    %472 = vmatprep.subr.bf16.mxu0 %v425
    %473 = vmatpush1.bf16.msra.mxu0 %v424
    %474 = vmatprep.subr.bf16.mxu0 %v428
    %475 = vmatpush1.bf16.msra.mxu0 %v427
    %476 = vmatprep.subr.bf16.mxu0 %v431
    %477 = vmatpush1.bf16.msra.mxu0 %v430
    %478 = vmatprep.subr.bf16.mxu0 %v434
    %479 = vmatpush1.bf16.msra.mxu0 %v433
    %480 = vmatprep.subr.bf16.mxu0 %v437
    %481 = vmatpush1.bf16.msra.mxu0 %v436
    %482 = vmatprep.subr.bf16.mxu0 %v440
    %483 = vmatpush1.bf16.msra.mxu0 %v439
    %484 = vmatprep.subr.bf16.mxu0 %v443
    %485 = vmatpush1.bf16.msra.mxu0 %v442
    %486 = vmatprep.subr.bf16.mxu0 %v446
    %487 = vmatpush1.bf16.msra.mxu0 %v445
    %488 = vmatprep.subr.bf16.mxu0 0
    %489 = vmatpush1.bf16.msra.mxu0 0
    %490 = vmatprep.subr.bf16.mxu0 0
    %491 = vmatpush1.bf16.msra.mxu0 0
    %492 = vmatprep.subr.bf16.mxu0 0
    %493 = vmatpush1.bf16.msra.mxu0 0
    %494 = vmatprep.subr.bf16.mxu0 0
    %495 = vmatpush1.bf16.msra.mxu0 0
    %496 = vmatprep.subr.bf16.mxu0 0
    %497 = vmatpush1.bf16.msra.mxu0 0
    %498 = vmatprep.subr.bf16.mxu0 0
    %499 = vmatpush1.bf16.msra.mxu0 0
    %500 = vmatprep.subr.bf16.mxu0 0
    %501 = vmatpush1.bf16.msra.mxu0 0
    %502 = vmatprep.subr.bf16.mxu0 0
    %503 = vmatpush1.bf16.msra.mxu0 0
    %504 = vmatprep.mubr.bf16.mxu0 0
    %505 = vmatmul.mubr.bf16.gmra.mrb[0].mxu0 %v343
    %v506 = vpop.f32.mrb[0].mxu0
    %v507 = vadd.f32 0.0, %v506
    %v508 = vpop.f32.mrb[0].mxu0
    %v509 = vadd.f32 0.0, %v508
    %v510 = vpop.f32.mrb[0].mxu0
    %v511 = vpop.f32.mrb[0].mxu0
    %512 = vdwg.mxu0
    %513 = vmatprep.subr.bf16.mxu0 0
    %514 = vmatpush1.bf16.msra.mxu0 %v426
    %515 = vmatprep.subr.bf16.mxu0 0
    %516 = vmatpush1.bf16.msra.mxu0 %v429
    %517 = vmatprep.subr.bf16.mxu0 0
    %518 = vmatpush1.bf16.msra.mxu0 %v432
    %519 = vmatprep.subr.bf16.mxu0 0
    %520 = vmatpush1.bf16.msra.mxu0 %v435
    %521 = vmatprep.subr.bf16.mxu0 0
    %522 = vmatpush1.bf16.msra.mxu0 %v438
    %523 = vmatprep.subr.bf16.mxu0 0
    %524 = vmatpush1.bf16.msra.mxu0 %v441
    %525 = vmatprep.subr.bf16.mxu0 0
    %526 = vmatpush1.bf16.msra.mxu0 %v444
    %527 = vmatprep.subr.bf16.mxu0 0
    %528 = vmatpush1.bf16.msra.mxu0 %v447
    %529 = vmatprep.subr.bf16.mxu0 0
    %530 = vmatpush1.bf16.msra.mxu0 0
    %531 = vmatprep.subr.bf16.mxu0 0
    %532 = vmatpush1.bf16.msra.mxu0 0
    %533 = vmatprep.subr.bf16.mxu0 0
    %534 = vmatpush1.bf16.msra.mxu0 0
    %535 = vmatprep.subr.bf16.mxu0 0
    %536 = vmatpush1.bf16.msra.mxu0 0
    %537 = vmatprep.subr.bf16.mxu0 0
    %538 = vmatpush1.bf16.msra.mxu0 0
    %539 = vmatprep.subr.bf16.mxu0 0
    %540 = vmatpush1.bf16.msra.mxu0 0
    %541 = vmatprep.subr.bf16.mxu0 0
    %542 = vmatpush1.bf16.msra.mxu0 0
    %543 = vmatprep.subr.bf16.mxu0 0
    %544 = vmatpush1.bf16.msra.mxu0 0
    %545 = vmatprep.mubr.bf16.mxu0 0
    %546 = vmatmul.mubr.bf16.gmra.mrb[0].mxu0 %v343
    %v547 = vpop.f32.mrb[0].mxu0
    %v548 = vadd.f32 0.0, %v547
    %v549 = vpop.f32.mrb[0].mxu0
    %v550 = vpop.f32.mrb[0].mxu0
    %v551 = vpop.f32.mrb[0].mxu0
    %552 = vdwg.mxu0
    %v553 = vadd.f32 %v340, %v507
    %v554 = vxor.u32 %v553, 2147483648
    %v555 = vmul.f32 %v554, 1.442695
    %v556 = vpow.pop %v555
    %v557 = vadd.f32 %v556, 1.0
    %v558 = vrcp.pop %v557
    %v559 = vmul.f32 1.0, %v558
    %v560 = vadd.f32 %v341, %v509
    %v561 = vxor.u32 %v560, 2147483648
    %v562 = vmul.f32 %v561, 1.442695
    %v563 = vpow.pop %v562
    %v564 = vadd.f32 %v563, 1.0
    %v565 = vrcp.pop %v564
    %v566 = vmul.f32 1.0, %v565
    %v567 = vadd.f32 %v548, %v97
    %v568 = vmul.f32 %v559, %v567
    %v569 = vadd.f32 %v342, %v568
    %v570 = vtanh.pop %v569
    %v571 = vsub.f32 1.0, %v566
    %v572 = vmul.f32 %v571, %v570
    %v573 = vmul.f32 %v566, %v339
    %v574 = vadd.f32 %v572, %v573
    %575 = vst [vmem:[#allocation4] sm:$0xff] %v574
    %s576 = scalar_lea.vmem [#allocation3], 24
    %v577 = vld [vmem:[%s576] sm:$0xff]
    %v578 = vld [vmem:[%s576 + $0x8] sm:$0xff]
    %v579 = vld [vmem:[%s576 + $0x10] sm:$0xff]
    %v580 = vpack.c.bf16 %v574, %v574
    %581 = vmatprep.subr.bf16.mxu0 %v425
    %582 = vmatpush1.bf16.msra.mxu0 %v424
    %583 = vmatprep.subr.bf16.mxu0 %v428
    %584 = vmatpush1.bf16.msra.mxu0 %v427
    %585 = vmatprep.subr.bf16.mxu0 %v431
    %586 = vmatpush1.bf16.msra.mxu0 %v430
    %587 = vmatprep.subr.bf16.mxu0 %v434
    %588 = vmatpush1.bf16.msra.mxu0 %v433
    %589 = vmatprep.subr.bf16.mxu0 %v437
    %590 = vmatpush1.bf16.msra.mxu0 %v436
    %591 = vmatprep.subr.bf16.mxu0 %v440
    %592 = vmatpush1.bf16.msra.mxu0 %v439
    %593 = vmatprep.subr.bf16.mxu0 %v443
    %594 = vmatpush1.bf16.msra.mxu0 %v442
    %595 = vmatprep.subr.bf16.mxu0 %v446
    %596 = vmatpush1.bf16.msra.mxu0 %v445
    %597 = vmatprep.subr.bf16.mxu0 0
    %598 = vmatpush1.bf16.msra.mxu0 0
    %599 = vmatprep.subr.bf16.mxu0 0
    %600 = vmatpush1.bf16.msra.mxu0 0
    %601 = vmatprep.subr.bf16.mxu0 0
    %602 = vmatpush1.bf16.msra.mxu0 0
    %603 = vmatprep.subr.bf16.mxu0 0
    %604 = vmatpush1.bf16.msra.mxu0 0
    %605 = vmatprep.subr.bf16.mxu0 0
    %606 = vmatpush1.bf16.msra.mxu0 0
    %607 = vmatprep.subr.bf16.mxu0 0
    %608 = vmatpush1.bf16.msra.mxu0 0
    %609 = vmatprep.subr.bf16.mxu0 0
    %610 = vmatpush1.bf16.msra.mxu0 0
    %611 = vmatprep.subr.bf16.mxu0 0
    %612 = vmatpush1.bf16.msra.mxu0 0
    %613 = vmatprep.mubr.bf16.mxu0 0
    %614 = vmatmul.mubr.bf16.gmra.mrb[0].mxu0 %v580
    %v615 = vpop.f32.mrb[0].mxu0
    %v616 = vadd.f32 0.0, %v615
    %v617 = vpop.f32.mrb[0].mxu0
    %v618 = vadd.f32 0.0, %v617
    %v619 = vpop.f32.mrb[0].mxu0
    %v620 = vpop.f32.mrb[0].mxu0
    %621 = vdwg.mxu0
    %622 = vmatprep.subr.bf16.mxu0 0
    %623 = vmatpush1.bf16.msra.mxu0 %v426
    %624 = vmatprep.subr.bf16.mxu0 0
    %625 = vmatpush1.bf16.msra.mxu0 %v429
    %626 = vmatprep.subr.bf16.mxu0 0
    %627 = vmatpush1.bf16.msra.mxu0 %v432
    %628 = vmatprep.subr.bf16.mxu0 0
    %629 = vmatpush1.bf16.msra.mxu0 %v435
    %630 = vmatprep.subr.bf16.mxu0 0
    %631 = vmatpush1.bf16.msra.mxu0 %v438
    %632 = vmatprep.subr.bf16.mxu0 0
    %633 = vmatpush1.bf16.msra.mxu0 %v441
    %634 = vmatprep.subr.bf16.mxu0 0
    %635 = vmatpush1.bf16.msra.mxu0 %v444
    %636 = vmatprep.subr.bf16.mxu0 0
    %637 = vmatpush1.bf16.msra.mxu0 %v447
    %638 = vmatprep.subr.bf16.mxu0 0
    %639 = vmatpush1.bf16.msra.mxu0 0
    %640 = vmatprep.subr.bf16.mxu0 0
    %641 = vmatpush1.bf16.msra.mxu0 0
    %642 = vmatprep.subr.bf16.mxu0 0
    %643 = vmatpush1.bf16.msra.mxu0 0
    %644 = vmatprep.subr.bf16.mxu0 0
    %645 = vmatpush1.bf16.msra.mxu0 0
    %646 = vmatprep.subr.bf16.mxu0 0
    %647 = vmatpush1.bf16.msra.mxu0 0
    %648 = vmatprep.subr.bf16.mxu0 0
    %649 = vmatpush1.bf16.msra.mxu0 0
    %650 = vmatprep.subr.bf16.mxu0 0
    %651 = vmatpush1.bf16.msra.mxu0 0
    %652 = vmatprep.subr.bf16.mxu0 0
    %653 = vmatpush1.bf16.msra.mxu0 0
    %654 = vmatprep.mubr.bf16.mxu0 0
    %655 = vmatmul.mubr.bf16.gmra.mrb[0].mxu0 %v580
    %v656 = vpop.f32.mrb[0].mxu0
    %v657 = vadd.f32 0.0, %v656
    %v658 = vpop.f32.mrb[0].mxu0
    %v659 = vpop.f32.mrb[0].mxu0
    %v660 = vpop.f32.mrb[0].mxu0
    %661 = vdwg.mxu0
    %v662 = vadd.f32 %v577, %v616
    %v663 = vxor.u32 %v662, 2147483648
    %v664 = vmul.f32 %v663, 1.442695
    %v665 = vpow.pop %v664
    %v666 = vadd.f32 %v665, 1.0
    %v667 = vrcp.pop %v666
    %v668 = vmul.f32 1.0, %v667
    %v669 = vadd.f32 %v578, %v618
    %v670 = vxor.u32 %v669, 2147483648
    %v671 = vmul.f32 %v670, 1.442695
    %v672 = vpow.pop %v671
    %v673 = vadd.f32 %v672, 1.0
    %v674 = vrcp.pop %v673
    %v675 = vmul.f32 1.0, %v674
    %v676 = vadd.f32 %v657, %v97
    %v677 = vmul.f32 %v668, %v676
    %v678 = vadd.f32 %v579, %v677
    %v679 = vtanh.pop %v678
    %v680 = vsub.f32 1.0, %v675
    %v681 = vmul.f32 %v680, %v679
    %v682 = vmul.f32 %v675, %v574
    %v683 = vadd.f32 %v681, %v682
    %s684 = scalar_lea.vmem [#allocation4], 8
    %685 = vst [vmem:[%s684] sm:$0xff] %v683
    %s686 = scalar_lea.vmem [#allocation3], 48
    %v687 = vld [vmem:[%s686] sm:$0xff]
    %v688 = vld [vmem:[%s686 + $0x8] sm:$0xff]
    %v689 = vld [vmem:[%s686 + $0x10] sm:$0xff]
    %v690 = vpack.c.bf16 %v683, %v683
    %691 = vmatprep.subr.bf16.mxu0 %v425
    %692 = vmatpush1.bf16.msra.mxu0 %v424
    %693 = vmatprep.subr.bf16.mxu0 %v428
    %694 = vmatpush1.bf16.msra.mxu0 %v427
    %695 = vmatprep.subr.bf16.mxu0 %v431
    %696 = vmatpush1.bf16.msra.mxu0 %v430
    %697 = vmatprep.subr.bf16.mxu0 %v434
    %698 = vmatpush1.bf16.msra.mxu0 %v433
    %699 = vmatprep.subr.bf16.mxu0 %v437
    %700 = vmatpush1.bf16.msra.mxu0 %v436
    %701 = vmatprep.subr.bf16.mxu0 %v440
    %702 = vmatpush1.bf16.msra.mxu0 %v439
    %703 = vmatprep.subr.bf16.mxu0 %v443
    %704 = vmatpush1.bf16.msra.mxu0 %v442
    %705 = vmatprep.subr.bf16.mxu0 %v446
    %706 = vmatpush1.bf16.msra.mxu0 %v445
    %707 = vmatprep.subr.bf16.mxu0 0
    %708 = vmatpush1.bf16.msra.mxu0 0
    %709 = vmatprep.subr.bf16.mxu0 0
    %710 = vmatpush1.bf16.msra.mxu0 0
    %711 = vmatprep.subr.bf16.mxu0 0
    %712 = vmatpush1.bf16.msra.mxu0 0
    %713 = vmatprep.subr.bf16.mxu0 0
    %714 = vmatpush1.bf16.msra.mxu0 0
    %715 = vmatprep.subr.bf16.mxu0 0
    %716 = vmatpush1.bf16.msra.mxu0 0
    %717 = vmatprep.subr.bf16.mxu0 0
    %718 = vmatpush1.bf16.msra.mxu0 0
    %719 = vmatprep.subr.bf16.mxu0 0
    %720 = vmatpush1.bf16.msra.mxu0 0
    %721 = vmatprep.subr.bf16.mxu0 0
    %722 = vmatpush1.bf16.msra.mxu0 0
    %723 = vmatprep.mubr.bf16.mxu0 0
    %724 = vmatmul.mubr.bf16.gmra.mrb[0].mxu0 %v690
    %v725 = vpop.f32.mrb[0].mxu0
    %v726 = vadd.f32 0.0, %v725
    %v727 = vpop.f32.mrb[0].mxu0
    %v728 = vadd.f32 0.0, %v727
    %v729 = vpop.f32.mrb[0].mxu0
    %v730 = vpop.f32.mrb[0].mxu0
    %731 = vdwg.mxu0
    %732 = vmatprep.subr.bf16.mxu0 0
    %733 = vmatpush1.bf16.msra.mxu0 %v426
    %734 = vmatprep.subr.bf16.mxu0 0
    %735 = vmatpush1.bf16.msra.mxu0 %v429
    %736 = vmatprep.subr.bf16.mxu0 0
    %737 = vmatpush1.bf16.msra.mxu0 %v432
    %738 = vmatprep.subr.bf16.mxu0 0
    %739 = vmatpush1.bf16.msra.mxu0 %v435
    %740 = vmatprep.subr.bf16.mxu0 0
    %741 = vmatpush1.bf16.msra.mxu0 %v438
    %742 = vmatprep.subr.bf16.mxu0 0
    %743 = vmatpush1.bf16.msra.mxu0 %v441
    %744 = vmatprep.subr.bf16.mxu0 0
    %745 = vmatpush1.bf16.msra.mxu0 %v444
    %746 = vmatprep.subr.bf16.mxu0 0
    %747 = vmatpush1.bf16.msra.mxu0 %v447
    %748 = vmatprep.subr.bf16.mxu0 0
    %749 = vmatpush1.bf16.msra.mxu0 0
    %750 = vmatprep.subr.bf16.mxu0 0
    %751 = vmatpush1.bf16.msra.mxu0 0
    %752 = vmatprep.subr.bf16.mxu0 0
    %753 = vmatpush1.bf16.msra.mxu0 0
    %754 = vmatprep.subr.bf16.mxu0 0
    %755 = vmatpush1.bf16.msra.mxu0 0
    %756 = vmatprep.subr.bf16.mxu0 0
    %757 = vmatpush1.bf16.msra.mxu0 0
    %758 = vmatprep.subr.bf16.mxu0 0
    %759 = vmatpush1.bf16.msra.mxu0 0
    %760 = vmatprep.subr.bf16.mxu0 0
    %761 = vmatpush1.bf16.msra.mxu0 0
    %762 = vmatprep.subr.bf16.mxu0 0
    %763 = vmatpush1.bf16.msra.mxu0 0
    %764 = vmatprep.mubr.bf16.mxu0 0
    %765 = vmatmul.mubr.bf16.gmra.mrb[0].mxu0 %v690
    %v766 = vpop.f32.mrb[0].mxu0
    %v767 = vadd.f32 0.0, %v766
    %v768 = vpop.f32.mrb[0].mxu0
    %v769 = vpop.f32.mrb[0].mxu0
    %v770 = vpop.f32.mrb[0].mxu0
    %771 = vdwg.mxu0
    %v772 = vadd.f32 %v687, %v726
    %v773 = vxor.u32 %v772, 2147483648
    %v774 = vmul.f32 %v773, 1.442695
    %v775 = vpow.pop %v774
    %v776 = vadd.f32 %v775, 1.0
    %v777 = vrcp.pop %v776
    %v778 = vmul.f32 1.0, %v777
    %v779 = vadd.f32 %v688, %v728
    %v780 = vxor.u32 %v779, 2147483648
    %v781 = vmul.f32 %v780, 1.442695
    %v782 = vpow.pop %v781
    %v783 = vadd.f32 %v782, 1.0
    %v784 = vrcp.pop %v783
    %v785 = vmul.f32 1.0, %v784
    %v786 = vadd.f32 %v767, %v97
    %v787 = vmul.f32 %v778, %v786
    %v788 = vadd.f32 %v689, %v787
    %v789 = vtanh.pop %v788
    %v790 = vsub.f32 1.0, %v785
    %v791 = vmul.f32 %v790, %v789
    %v792 = vmul.f32 %v785, %v683
    %v793 = vadd.f32 %v791, %v792
    %s794 = scalar_lea.vmem [#allocation4], 16
    %795 = vst [vmem:[%s794] sm:$0xff] %v793
    %s796 = scalar_lea.vmem [#allocation3], 72
    %v797 = vld [vmem:[%s796] sm:$0xff]
    %v798 = vld [vmem:[%s796 + $0x8] sm:$0xff]
    %v799 = vld [vmem:[%s796 + $0x10] sm:$0xff]
    %v800 = vpack.c.bf16 %v793, %v793
    %801 = vmatprep.subr.bf16.mxu0 %v425
    %802 = vmatpush1.bf16.msra.mxu0 %v424
    %803 = vmatprep.subr.bf16.mxu0 %v428
    %804 = vmatpush1.bf16.msra.mxu0 %v427
    %805 = vmatprep.subr.bf16.mxu0 %v431
    %806 = vmatpush1.bf16.msra.mxu0 %v430
    %807 = vmatprep.subr.bf16.mxu0 %v434
    %808 = vmatpush1.bf16.msra.mxu0 %v433
    %809 = vmatprep.subr.bf16.mxu0 %v437
    %810 = vmatpush1.bf16.msra.mxu0 %v436
    %811 = vmatprep.subr.bf16.mxu0 %v440
    %812 = vmatpush1.bf16.msra.mxu0 %v439
    %813 = vmatprep.subr.bf16.mxu0 %v443
    %814 = vmatpush1.bf16.msra.mxu0 %v442
    %815 = vmatprep.subr.bf16.mxu0 %v446
    %816 = vmatpush1.bf16.msra.mxu0 %v445
    %817 = vmatprep.subr.bf16.mxu0 0
    %818 = vmatpush1.bf16.msra.mxu0 0
    %819 = vmatprep.subr.bf16.mxu0 0
    %820 = vmatpush1.bf16.msra.mxu0 0
    %821 = vmatprep.subr.bf16.mxu0 0
    %822 = vmatpush1.bf16.msra.mxu0 0
    %823 = vmatprep.subr.bf16.mxu0 0
    %824 = vmatpush1.bf16.msra.mxu0 0
    %825 = vmatprep.subr.bf16.mxu0 0
    %826 = vmatpush1.bf16.msra.mxu0 0
    %827 = vmatprep.subr.bf16.mxu0 0
    %828 = vmatpush1.bf16.msra.mxu0 0
    %829 = vmatprep.subr.bf16.mxu0 0
    %830 = vmatpush1.bf16.msra.mxu0 0
    %831 = vmatprep.subr.bf16.mxu0 0
    %832 = vmatpush1.bf16.msra.mxu0 0
    %833 = vmatprep.mubr.bf16.mxu0 0
    %834 = vmatmul.mubr.bf16.gmra.mrb[0].mxu0 %v800
    %v835 = vpop.f32.mrb[0].mxu0
    %v836 = vadd.f32 0.0, %v835
    %v837 = vpop.f32.mrb[0].mxu0
    %v838 = vadd.f32 0.0, %v837
    %v839 = vpop.f32.mrb[0].mxu0
    %v840 = vpop.f32.mrb[0].mxu0
    %841 = vdwg.mxu0
    %842 = vmatprep.subr.bf16.mxu0 0
    %843 = vmatpush1.bf16.msra.mxu0 %v426
    %844 = vmatprep.subr.bf16.mxu0 0
    %845 = vmatpush1.bf16.msra.mxu0 %v429
    %846 = vmatprep.subr.bf16.mxu0 0
    %847 = vmatpush1.bf16.msra.mxu0 %v432
    %848 = vmatprep.subr.bf16.mxu0 0
    %849 = vmatpush1.bf16.msra.mxu0 %v435
    %850 = vmatprep.subr.bf16.mxu0 0
    %851 = vmatpush1.bf16.msra.mxu0 %v438
    %852 = vmatprep.subr.bf16.mxu0 0
    %853 = vmatpush1.bf16.msra.mxu0 %v441
    %854 = vmatprep.subr.bf16.mxu0 0
    %855 = vmatpush1.bf16.msra.mxu0 %v444
    %856 = vmatprep.subr.bf16.mxu0 0
    %857 = vmatpush1.bf16.msra.mxu0 %v447
    %858 = vmatprep.subr.bf16.mxu0 0
    %859 = vmatpush1.bf16.msra.mxu0 0
    %860 = vmatprep.subr.bf16.mxu0 0
    %861 = vmatpush1.bf16.msra.mxu0 0
    %862 = vmatprep.subr.bf16.mxu0 0
    %863 = vmatpush1.bf16.msra.mxu0 0
    %864 = vmatprep.subr.bf16.mxu0 0
    %865 = vmatpush1.bf16.msra.mxu0 0
    %866 = vmatprep.subr.bf16.mxu0 0
    %867 = vmatpush1.bf16.msra.mxu0 0
    %868 = vmatprep.subr.bf16.mxu0 0
    %869 = vmatpush1.bf16.msra.mxu0 0
    %870 = vmatprep.subr.bf16.mxu0 0
    %871 = vmatpush1.bf16.msra.mxu0 0
    %872 = vmatprep.subr.bf16.mxu0 0
    %873 = vmatpush1.bf16.msra.mxu0 0
    %874 = vmatprep.mubr.bf16.mxu0 0
    %875 = vmatmul.mubr.bf16.gmra.mrb[0].mxu0 %v800
    %v876 = vpop.f32.mrb[0].mxu0
    %v877 = vadd.f32 0.0, %v876
    %v878 = vpop.f32.mrb[0].mxu0
    %v879 = vpop.f32.mrb[0].mxu0
    %v880 = vpop.f32.mrb[0].mxu0
    %881 = vdwg.mxu0
    %v882 = vadd.f32 %v797, %v836
    %v883 = vxor.u32 %v882, 2147483648
    %v884 = vmul.f32 %v883, 1.442695
    %v885 = vpow.pop %v884
    %v886 = vadd.f32 %v885, 1.0
    %v887 = vrcp.pop %v886
    %v888 = vmul.f32 1.0, %v887
    %v889 = vadd.f32 %v798, %v838
    %v890 = vxor.u32 %v889, 2147483648
    %v891 = vmul.f32 %v890, 1.442695
    %v892 = vpow.pop %v891
    %v893 = vadd.f32 %v892, 1.0
    %v894 = vrcp.pop %v893
    %v895 = vmul.f32 1.0, %v894
    %v896 = vadd.f32 %v877, %v97
    %v897 = vmul.f32 %v888, %v896
    %v898 = vadd.f32 %v799, %v897
    %v899 = vtanh.pop %v898
    %v900 = vsub.f32 1.0, %v895
    %v901 = vmul.f32 %v900, %v899
    %v902 = vmul.f32 %v895, %v793
    %v903 = vadd.f32 %v901, %v902
    %s904 = scalar_lea.vmem [#allocation4], 24
    %905 = vst [vmem:[%s904] sm:$0xff] %v903
    %s906 = scalar_lea.vmem [#allocation3], 96
    %v907 = vld [vmem:[%s906] sm:$0xff]
    %v908 = vld [vmem:[%s906 + $0x8] sm:$0xff]
    %v909 = vld [vmem:[%s906 + $0x10] sm:$0xff]
    %v910 = vpack.c.bf16 %v903, %v903
    %911 = vmatprep.subr.bf16.mxu0 %v425
    %912 = vmatpush1.bf16.msra.mxu0 %v424
    %913 = vmatprep.subr.bf16.mxu0 %v428
    %914 = vmatpush1.bf16.msra.mxu0 %v427
    %915 = vmatprep.subr.bf16.mxu0 %v431
    %916 = vmatpush1.bf16.msra.mxu0 %v430
    %917 = vmatprep.subr.bf16.mxu0 %v434
    %918 = vmatpush1.bf16.msra.mxu0 %v433
    %919 = vmatprep.subr.bf16.mxu0 %v437
    %920 = vmatpush1.bf16.msra.mxu0 %v436
    %921 = vmatprep.subr.bf16.mxu0 %v440
    %922 = vmatpush1.bf16.msra.mxu0 %v439
    %923 = vmatprep.subr.bf16.mxu0 %v443
    %924 = vmatpush1.bf16.msra.mxu0 %v442
    %925 = vmatprep.subr.bf16.mxu0 %v446
    %926 = vmatpush1.bf16.msra.mxu0 %v445
    %927 = vmatprep.subr.bf16.mxu0 0
    %928 = vmatpush1.bf16.msra.mxu0 0
    %929 = vmatprep.subr.bf16.mxu0 0
    %930 = vmatpush1.bf16.msra.mxu0 0
    %931 = vmatprep.subr.bf16.mxu0 0
    %932 = vmatpush1.bf16.msra.mxu0 0
    %933 = vmatprep.subr.bf16.mxu0 0
    %934 = vmatpush1.bf16.msra.mxu0 0
    %935 = vmatprep.subr.bf16.mxu0 0
    %936 = vmatpush1.bf16.msra.mxu0 0
    %937 = vmatprep.subr.bf16.mxu0 0
    %938 = vmatpush1.bf16.msra.mxu0 0
    %939 = vmatprep.subr.bf16.mxu0 0
    %940 = vmatpush1.bf16.msra.mxu0 0
    %941 = vmatprep.subr.bf16.mxu0 0
    %942 = vmatpush1.bf16.msra.mxu0 0
    %943 = vmatprep.mubr.bf16.mxu0 0
    %944 = vmatmul.mubr.bf16.gmra.mrb[0].mxu0 %v910
    %v945 = vpop.f32.mrb[0].mxu0
    %v946 = vadd.f32 0.0, %v945
    %v947 = vpop.f32.mrb[0].mxu0
    %v948 = vadd.f32 0.0, %v947
    %v949 = vpop.f32.mrb[0].mxu0
    %v950 = vpop.f32.mrb[0].mxu0
    %951 = vdwg.mxu0
    %952 = vmatprep.subr.bf16.mxu0 0
    %953 = vmatpush1.bf16.msra.mxu0 %v426
    %954 = vmatprep.subr.bf16.mxu0 0
    %955 = vmatpush1.bf16.msra.mxu0 %v429
    %956 = vmatprep.subr.bf16.mxu0 0
    %957 = vmatpush1.bf16.msra.mxu0 %v432
    %958 = vmatprep.subr.bf16.mxu0 0
    %959 = vmatpush1.bf16.msra.mxu0 %v435
    %960 = vmatprep.subr.bf16.mxu0 0
    %961 = vmatpush1.bf16.msra.mxu0 %v438
    %962 = vmatprep.subr.bf16.mxu0 0
    %963 = vmatpush1.bf16.msra.mxu0 %v441
    %964 = vmatprep.subr.bf16.mxu0 0
    %965 = vmatpush1.bf16.msra.mxu0 %v444
    %966 = vmatprep.subr.bf16.mxu0 0
    %967 = vmatpush1.bf16.msra.mxu0 %v447
    %968 = vmatprep.subr.bf16.mxu0 0
    %969 = vmatpush1.bf16.msra.mxu0 0
    %970 = vmatprep.subr.bf16.mxu0 0
    %971 = vmatpush1.bf16.msra.mxu0 0
    %972 = vmatprep.subr.bf16.mxu0 0
    %973 = vmatpush1.bf16.msra.mxu0 0
    %974 = vmatprep.subr.bf16.mxu0 0
    %975 = vmatpush1.bf16.msra.mxu0 0
    %976 = vmatprep.subr.bf16.mxu0 0
    %977 = vmatpush1.bf16.msra.mxu0 0
    %978 = vmatprep.subr.bf16.mxu0 0
    %979 = vmatpush1.bf16.msra.mxu0 0
    %980 = vmatprep.subr.bf16.mxu0 0
    %981 = vmatpush1.bf16.msra.mxu0 0
    %982 = vmatprep.subr.bf16.mxu0 0
    %983 = vmatpush1.bf16.msra.mxu0 0
    %984 = vmatprep.mubr.bf16.mxu0 0
    %985 = vmatmul.mubr.bf16.gmra.mrb[0].mxu0 %v910
    %v986 = vpop.f32.mrb[0].mxu0
    %v987 = vadd.f32 0.0, %v986
    %v988 = vpop.f32.mrb[0].mxu0
    %v989 = vpop.f32.mrb[0].mxu0
    %v990 = vpop.f32.mrb[0].mxu0
    %991 = vdwg.mxu0
    %v992 = vadd.f32 %v907, %v946
    %v993 = vxor.u32 %v992, 2147483648
    %v994 = vmul.f32 %v993, 1.442695
    %v995 = vpow.pop %v994
    %v996 = vadd.f32 %v995, 1.0
    %v997 = vrcp.pop %v996
    %v998 = vmul.f32 1.0, %v997
    %v999 = vadd.f32 %v908, %v948
    %v1000 = vxor.u32 %v999, 2147483648
    %v1001 = vmul.f32 %v1000, 1.442695
    %v1002 = vpow.pop %v1001
    %v1003 = vadd.f32 %v1002, 1.0
    %v1004 = vrcp.pop %v1003
    %v1005 = vmul.f32 1.0, %v1004
    %v1006 = vadd.f32 %v987, %v97
    %v1007 = vmul.f32 %v998, %v1006
    %v1008 = vadd.f32 %v909, %v1007
    %v1009 = vtanh.pop %v1008
    %v1010 = vsub.f32 1.0, %v1005
    %v1011 = vmul.f32 %v1010, %v1009
    %v1012 = vmul.f32 %v1005, %v903
    %v1013 = vadd.f32 %v1011, %v1012
    %s1014 = scalar_lea.vmem [#allocation4], 32
    %1015 = vst [vmem:[%s1014] sm:$0xff] %v1013
    %s1016 = scalar_lea.vmem [#allocation3], 120
    %v1017 = vld [vmem:[%s1016] sm:$0xff]
    %v1018 = vld [vmem:[%s1016 + $0x8] sm:$0xff]
    %v1019 = vld [vmem:[%s1016 + $0x10] sm:$0xff]
    %v1020 = vpack.c.bf16 %v1013, %v1013
    %1021 = vmatprep.subr.bf16.mxu0 %v425
    %1022 = vmatpush1.bf16.msra.mxu0 %v424
    %1023 = vmatprep.subr.bf16.mxu0 %v428
    %1024 = vmatpush1.bf16.msra.mxu0 %v427
    %1025 = vmatprep.subr.bf16.mxu0 %v431
    %1026 = vmatpush1.bf16.msra.mxu0 %v430
    %1027 = vmatprep.subr.bf16.mxu0 %v434
    %1028 = vmatpush1.bf16.msra.mxu0 %v433
    %1029 = vmatprep.subr.bf16.mxu0 %v437
    %1030 = vmatpush1.bf16.msra.mxu0 %v436
    %1031 = vmatprep.subr.bf16.mxu0 %v440
    %1032 = vmatpush1.bf16.msra.mxu0 %v439
    %1033 = vmatprep.subr.bf16.mxu0 %v443
    %1034 = vmatpush1.bf16.msra.mxu0 %v442
    %1035 = vmatprep.subr.bf16.mxu0 %v446
    %1036 = vmatpush1.bf16.msra.mxu0 %v445
    %1037 = vmatprep.subr.bf16.mxu0 0
    %1038 = vmatpush1.bf16.msra.mxu0 0
    %1039 = vmatprep.subr.bf16.mxu0 0
    %1040 = vmatpush1.bf16.msra.mxu0 0
    %1041 = vmatprep.subr.bf16.mxu0 0
    %1042 = vmatpush1.bf16.msra.mxu0 0
    %1043 = vmatprep.subr.bf16.mxu0 0
    %1044 = vmatpush1.bf16.msra.mxu0 0
    %1045 = vmatprep.subr.bf16.mxu0 0
    %1046 = vmatpush1.bf16.msra.mxu0 0
    %1047 = vmatprep.subr.bf16.mxu0 0
    %1048 = vmatpush1.bf16.msra.mxu0 0
    %1049 = vmatprep.subr.bf16.mxu0 0
    %1050 = vmatpush1.bf16.msra.mxu0 0
    %1051 = vmatprep.subr.bf16.mxu0 0
    %1052 = vmatpush1.bf16.msra.mxu0 0
    %1053 = vmatprep.mubr.bf16.mxu0 0
    %1054 = vmatmul.mubr.bf16.gmra.mrb[0].mxu0 %v1020
    %v1055 = vpop.f32.mrb[0].mxu0
    %v1056 = vadd.f32 0.0, %v1055
    %v1057 = vpop.f32.mrb[0].mxu0
    %v1058 = vadd.f32 0.0, %v1057
    %v1059 = vpop.f32.mrb[0].mxu0
    %v1060 = vpop.f32.mrb[0].mxu0
    %1061 = vdwg.mxu0
    %1062 = vmatprep.subr.bf16.mxu0 0
    %1063 = vmatpush1.bf16.msra.mxu0 %v426
    %1064 = vmatprep.subr.bf16.mxu0 0
    %1065 = vmatpush1.bf16.msra.mxu0 %v429
    %1066 = vmatprep.subr.bf16.mxu0 0
    %1067 = vmatpush1.bf16.msra.mxu0 %v432
    %1068 = vmatprep.subr.bf16.mxu0 0
    %1069 = vmatpush1.bf16.msra.mxu0 %v435
    %1070 = vmatprep.subr.bf16.mxu0 0
    %1071 = vmatpush1.bf16.msra.mxu0 %v438
    %1072 = vmatprep.subr.bf16.mxu0 0
    %1073 = vmatpush1.bf16.msra.mxu0 %v441
    %1074 = vmatprep.subr.bf16.mxu0 0
    %1075 = vmatpush1.bf16.msra.mxu0 %v444
    %1076 = vmatprep.subr.bf16.mxu0 0
    %1077 = vmatpush1.bf16.msra.mxu0 %v447
    %1078 = vmatprep.subr.bf16.mxu0 0
    %1079 = vmatpush1.bf16.msra.mxu0 0
    %1080 = vmatprep.subr.bf16.mxu0 0
    %1081 = vmatpush1.bf16.msra.mxu0 0
    %1082 = vmatprep.subr.bf16.mxu0 0
    %1083 = vmatpush1.bf16.msra.mxu0 0
    %1084 = vmatprep.subr.bf16.mxu0 0
    %1085 = vmatpush1.bf16.msra.mxu0 0
    %1086 = vmatprep.subr.bf16.mxu0 0
    %1087 = vmatpush1.bf16.msra.mxu0 0
    %1088 = vmatprep.subr.bf16.mxu0 0
    %1089 = vmatpush1.bf16.msra.mxu0 0
    %1090 = vmatprep.subr.bf16.mxu0 0
    %1091 = vmatpush1.bf16.msra.mxu0 0
    %1092 = vmatprep.subr.bf16.mxu0 0
    %1093 = vmatpush1.bf16.msra.mxu0 0
    %1094 = vmatprep.mubr.bf16.mxu0 0
    %1095 = vmatmul.mubr.bf16.gmra.mrb[0].mxu0 %v1020
    %v1096 = vpop.f32.mrb[0].mxu0
    %v1097 = vadd.f32 0.0, %v1096
    %v1098 = vpop.f32.mrb[0].mxu0
    %v1099 = vpop.f32.mrb[0].mxu0
    %v1100 = vpop.f32.mrb[0].mxu0
    %1101 = vdwg.mxu0
    %v1102 = vadd.f32 %v1017, %v1056
    %v1103 = vxor.u32 %v1102, 2147483648
    %v1104 = vmul.f32 %v1103, 1.442695
    %v1105 = vpow.pop %v1104
    %v1106 = vadd.f32 %v1105, 1.0
    %v1107 = vrcp.pop %v1106
    %v1108 = vmul.f32 1.0, %v1107
    %v1109 = vadd.f32 %v1018, %v1058
    %v1110 = vxor.u32 %v1109, 2147483648
    %v1111 = vmul.f32 %v1110, 1.442695
    %v1112 = vpow.pop %v1111
    %v1113 = vadd.f32 %v1112, 1.0
    %v1114 = vrcp.pop %v1113
    %v1115 = vmul.f32 1.0, %v1114
    %v1116 = vadd.f32 %v1097, %v97
    %v1117 = vmul.f32 %v1108, %v1116
    %v1118 = vadd.f32 %v1019, %v1117
    %v1119 = vtanh.pop %v1118
    %v1120 = vsub.f32 1.0, %v1115
    %v1121 = vmul.f32 %v1120, %v1119
    %v1122 = vmul.f32 %v1115, %v1013
    %v1123 = vadd.f32 %v1121, %v1122
    %s1124 = scalar_lea.vmem [#allocation4], 40
    %1125 = vst [vmem:[%s1124] sm:$0xff] %v1123
    %s1126 = scalar_lea.vmem [#allocation3], 144
    %v1127 = vld [vmem:[%s1126] sm:$0xff]
    %v1128 = vld [vmem:[%s1126 + $0x8] sm:$0xff]
    %v1129 = vld [vmem:[%s1126 + $0x10] sm:$0xff]
    %v1130 = vpack.c.bf16 %v1123, %v1123
    %1131 = vmatprep.subr.bf16.mxu0 %v425
    %1132 = vmatpush1.bf16.msra.mxu0 %v424
    %1133 = vmatprep.subr.bf16.mxu0 %v428
    %1134 = vmatpush1.bf16.msra.mxu0 %v427
    %1135 = vmatprep.subr.bf16.mxu0 %v431
    %1136 = vmatpush1.bf16.msra.mxu0 %v430
    %1137 = vmatprep.subr.bf16.mxu0 %v434
    %1138 = vmatpush1.bf16.msra.mxu0 %v433
    %1139 = vmatprep.subr.bf16.mxu0 %v437
    %1140 = vmatpush1.bf16.msra.mxu0 %v436
    %1141 = vmatprep.subr.bf16.mxu0 %v440
    %1142 = vmatpush1.bf16.msra.mxu0 %v439
    %1143 = vmatprep.subr.bf16.mxu0 %v443
    %1144 = vmatpush1.bf16.msra.mxu0 %v442
    %1145 = vmatprep.subr.bf16.mxu0 %v446
    %1146 = vmatpush1.bf16.msra.mxu0 %v445
    %1147 = vmatprep.subr.bf16.mxu0 0
    %1148 = vmatpush1.bf16.msra.mxu0 0
    %1149 = vmatprep.subr.bf16.mxu0 0
    %1150 = vmatpush1.bf16.msra.mxu0 0
    %1151 = vmatprep.subr.bf16.mxu0 0
    %1152 = vmatpush1.bf16.msra.mxu0 0
    %1153 = vmatprep.subr.bf16.mxu0 0
    %1154 = vmatpush1.bf16.msra.mxu0 0
    %1155 = vmatprep.subr.bf16.mxu0 0
    %1156 = vmatpush1.bf16.msra.mxu0 0
    %1157 = vmatprep.subr.bf16.mxu0 0
    %1158 = vmatpush1.bf16.msra.mxu0 0
    %1159 = vmatprep.subr.bf16.mxu0 0
    %1160 = vmatpush1.bf16.msra.mxu0 0
    %1161 = vmatprep.subr.bf16.mxu0 0
    %1162 = vmatpush1.bf16.msra.mxu0 0
    %1163 = vmatprep.mubr.bf16.mxu0 0
    %1164 = vmatmul.mubr.bf16.gmra.mrb[0].mxu0 %v1130
    %v1165 = vpop.f32.mrb[0].mxu0
    %v1166 = vadd.f32 0.0, %v1165
    %v1167 = vpop.f32.mrb[0].mxu0
    %v1168 = vadd.f32 0.0, %v1167
    %v1169 = vpop.f32.mrb[0].mxu0
    %v1170 = vpop.f32.mrb[0].mxu0
    %1171 = vdwg.mxu0
    %1172 = vmatprep.subr.bf16.mxu0 0
    %1173 = vmatpush1.bf16.msra.mxu0 %v426
    %1174 = vmatprep.subr.bf16.mxu0 0
    %1175 = vmatpush1.bf16.msra.mxu0 %v429
    %1176 = vmatprep.subr.bf16.mxu0 0
    %1177 = vmatpush1.bf16.msra.mxu0 %v432
    %1178 = vmatprep.subr.bf16.mxu0 0
    %1179 = vmatpush1.bf16.msra.mxu0 %v435
    %1180 = vmatprep.subr.bf16.mxu0 0
    %1181 = vmatpush1.bf16.msra.mxu0 %v438
    %1182 = vmatprep.subr.bf16.mxu0 0
    %1183 = vmatpush1.bf16.msra.mxu0 %v441
    %1184 = vmatprep.subr.bf16.mxu0 0
    %1185 = vmatpush1.bf16.msra.mxu0 %v444
    %1186 = vmatprep.subr.bf16.mxu0 0
    %1187 = vmatpush1.bf16.msra.mxu0 %v447
    %1188 = vmatprep.subr.bf16.mxu0 0
    %1189 = vmatpush1.bf16.msra.mxu0 0
    %1190 = vmatprep.subr.bf16.mxu0 0
    %1191 = vmatpush1.bf16.msra.mxu0 0
    %1192 = vmatprep.subr.bf16.mxu0 0
    %1193 = vmatpush1.bf16.msra.mxu0 0
    %1194 = vmatprep.subr.bf16.mxu0 0
    %1195 = vmatpush1.bf16.msra.mxu0 0
    %1196 = vmatprep.subr.bf16.mxu0 0
    %1197 = vmatpush1.bf16.msra.mxu0 0
    %1198 = vmatprep.subr.bf16.mxu0 0
    %1199 = vmatpush1.bf16.msra.mxu0 0
    %1200 = vmatprep.subr.bf16.mxu0 0
    %1201 = vmatpush1.bf16.msra.mxu0 0
    %1202 = vmatprep.subr.bf16.mxu0 0
    %1203 = vmatpush1.bf16.msra.mxu0 0
    %1204 = vmatprep.mubr.bf16.mxu0 0
    %1205 = vmatmul.mubr.bf16.gmra.mrb[0].mxu0 %v1130
    %v1206 = vpop.f32.mrb[0].mxu0
    %v1207 = vadd.f32 0.0, %v1206
    %v1208 = vpop.f32.mrb[0].mxu0
    %v1209 = vpop.f32.mrb[0].mxu0
    %v1210 = vpop.f32.mrb[0].mxu0
    %1211 = vdwg.mxu0
    %v1212 = vadd.f32 %v1127, %v1166
    %v1213 = vxor.u32 %v1212, 2147483648
    %v1214 = vmul.f32 %v1213, 1.442695
    %v1215 = vpow.pop %v1214
    %v1216 = vadd.f32 %v1215, 1.0
    %v1217 = vrcp.pop %v1216
    %v1218 = vmul.f32 1.0, %v1217
    %v1219 = vadd.f32 %v1128, %v1168
    %v1220 = vxor.u32 %v1219, 2147483648
    %v1221 = vmul.f32 %v1220, 1.442695
    %v1222 = vpow.pop %v1221
    %v1223 = vadd.f32 %v1222, 1.0
    %v1224 = vrcp.pop %v1223
    %v1225 = vmul.f32 1.0, %v1224
    %v1226 = vadd.f32 %v1207, %v97
    %v1227 = vmul.f32 %v1218, %v1226
    %v1228 = vadd.f32 %v1129, %v1227
    %v1229 = vtanh.pop %v1228
    %v1230 = vsub.f32 1.0, %v1225
    %v1231 = vmul.f32 %v1230, %v1229
    %v1232 = vmul.f32 %v1225, %v1123
    %v1233 = vadd.f32 %v1231, %v1232
    %s1234 = scalar_lea.vmem [#allocation4], 48
    %1235 = vst [vmem:[%s1234] sm:$0xff] %v1233
    %s1236 = scalar_lea.vmem [#allocation3], 168
    %v1237 = vld [vmem:[%s1236] sm:$0xff]
    %v1238 = vld [vmem:[%s1236 + $0x8] sm:$0xff]
    %v1239 = vld [vmem:[%s1236 + $0x10] sm:$0xff]
    %v1240 = vpack.c.bf16 %v1233, %v1233
    %1241 = vmatprep.subr.bf16.mxu0 %v425
    %1242 = vmatpush1.bf16.msra.mxu0 %v424
    %1243 = vmatprep.subr.bf16.mxu0 %v428
    %1244 = vmatpush1.bf16.msra.mxu0 %v427
    %1245 = vmatprep.subr.bf16.mxu0 %v431
    %1246 = vmatpush1.bf16.msra.mxu0 %v430
    %1247 = vmatprep.subr.bf16.mxu0 %v434
    %1248 = vmatpush1.bf16.msra.mxu0 %v433
    %1249 = vmatprep.subr.bf16.mxu0 %v437
    %1250 = vmatpush1.bf16.msra.mxu0 %v436
    %1251 = vmatprep.subr.bf16.mxu0 %v440
    %1252 = vmatpush1.bf16.msra.mxu0 %v439
    %1253 = vmatprep.subr.bf16.mxu0 %v443
    %1254 = vmatpush1.bf16.msra.mxu0 %v442
    %1255 = vmatprep.subr.bf16.mxu0 %v446
    %1256 = vmatpush1.bf16.msra.mxu0 %v445
    %1257 = vmatprep.subr.bf16.mxu0 0
    %1258 = vmatpush1.bf16.msra.mxu0 0
    %1259 = vmatprep.subr.bf16.mxu0 0
    %1260 = vmatpush1.bf16.msra.mxu0 0
    %1261 = vmatprep.subr.bf16.mxu0 0
    %1262 = vmatpush1.bf16.msra.mxu0 0
    %1263 = vmatprep.subr.bf16.mxu0 0
    %1264 = vmatpush1.bf16.msra.mxu0 0
    %1265 = vmatprep.subr.bf16.mxu0 0
    %1266 = vmatpush1.bf16.msra.mxu0 0
    %1267 = vmatprep.subr.bf16.mxu0 0
    %1268 = vmatpush1.bf16.msra.mxu0 0
    %1269 = vmatprep.subr.bf16.mxu0 0
    %1270 = vmatpush1.bf16.msra.mxu0 0
    %1271 = vmatprep.subr.bf16.mxu0 0
    %1272 = vmatpush1.bf16.msra.mxu0 0
    %1273 = vmatprep.mubr.bf16.mxu0 0
    %1274 = vmatmul.mubr.bf16.gmra.mrb[0].mxu0 %v1240
    %v1275 = vpop.f32.mrb[0].mxu0
    %v1276 = vadd.f32 0.0, %v1275
    %v1277 = vpop.f32.mrb[0].mxu0
    %v1278 = vadd.f32 0.0, %v1277
    %v1279 = vpop.f32.mrb[0].mxu0
    %v1280 = vpop.f32.mrb[0].mxu0
    %1281 = vdwg.mxu0
    %1282 = vmatprep.subr.bf16.mxu0 0
    %1283 = vmatpush1.bf16.msra.mxu0 %v426
    %1284 = vmatprep.subr.bf16.mxu0 0
    %1285 = vmatpush1.bf16.msra.mxu0 %v429
    %1286 = vmatprep.subr.bf16.mxu0 0
    %1287 = vmatpush1.bf16.msra.mxu0 %v432
    %1288 = vmatprep.subr.bf16.mxu0 0
    %1289 = vmatpush1.bf16.msra.mxu0 %v435
    %1290 = vmatprep.subr.bf16.mxu0 0
    %1291 = vmatpush1.bf16.msra.mxu0 %v438
    %1292 = vmatprep.subr.bf16.mxu0 0
    %1293 = vmatpush1.bf16.msra.mxu0 %v441
    %1294 = vmatprep.subr.bf16.mxu0 0
    %1295 = vmatpush1.bf16.msra.mxu0 %v444
    %1296 = vmatprep.subr.bf16.mxu0 0
    %1297 = vmatpush1.bf16.msra.mxu0 %v447
    %1298 = vmatprep.subr.bf16.mxu0 0
    %1299 = vmatpush1.bf16.msra.mxu0 0
    %1300 = vmatprep.subr.bf16.mxu0 0
    %1301 = vmatpush1.bf16.msra.mxu0 0
    %1302 = vmatprep.subr.bf16.mxu0 0
    %1303 = vmatpush1.bf16.msra.mxu0 0
    %1304 = vmatprep.subr.bf16.mxu0 0
    %1305 = vmatpush1.bf16.msra.mxu0 0
    %1306 = vmatprep.subr.bf16.mxu0 0
    %1307 = vmatpush1.bf16.msra.mxu0 0
    %1308 = vmatprep.subr.bf16.mxu0 0
    %1309 = vmatpush1.bf16.msra.mxu0 0
    %1310 = vmatprep.subr.bf16.mxu0 0
    %1311 = vmatpush1.bf16.msra.mxu0 0
    %1312 = vmatprep.subr.bf16.mxu0 0
    %1313 = vmatpush1.bf16.msra.mxu0 0
    %1314 = vmatprep.mubr.bf16.mxu0 0
    %1315 = vmatmul.mubr.bf16.gmra.mrb[0].mxu0 %v1240
    %v1316 = vpop.f32.mrb[0].mxu0
    %v1317 = vadd.f32 0.0, %v1316
    %v1318 = vpop.f32.mrb[0].mxu0
    %v1319 = vpop.f32.mrb[0].mxu0
    %v1320 = vpop.f32.mrb[0].mxu0
    %1321 = vdwg.mxu0
    %v1322 = vadd.f32 %v1237, %v1276
    %v1323 = vxor.u32 %v1322, 2147483648
    %v1324 = vmul.f32 %v1323, 1.442695
    %v1325 = vpow.pop %v1324
    %v1326 = vadd.f32 %v1325, 1.0
    %v1327 = vrcp.pop %v1326
    %v1328 = vmul.f32 1.0, %v1327
    %v1329 = vadd.f32 %v1238, %v1278
    %v1330 = vxor.u32 %v1329, 2147483648
    %v1331 = vmul.f32 %v1330, 1.442695
    %v1332 = vpow.pop %v1331
    %v1333 = vadd.f32 %v1332, 1.0
    %v1334 = vrcp.pop %v1333
    %v1335 = vmul.f32 1.0, %v1334
    %v1336 = vadd.f32 %v1317, %v97
    %v1337 = vmul.f32 %v1328, %v1336
    %v1338 = vadd.f32 %v1239, %v1337
    %v1339 = vtanh.pop %v1338
    %v1340 = vsub.f32 1.0, %v1335
    %v1341 = vmul.f32 %v1340, %v1339
    %v1342 = vmul.f32 %v1335, %v1233
    %v1343 = vadd.f32 %v1341, %v1342
    %s1344 = scalar_lea.vmem [#allocation4], 56
    %1345 = vst [vmem:[%s1344] sm:$0xff] %v1343
    %1346 = vst [vmem:[#allocation2] sm:$0xff] %v1343
    %v1347 = vld [vmem:[#allocation4] sm:$0xff]
    %v1348 = vld [vmem:[#allocation4 + $0x8] sm:$0xff]
    %v1349 = vld [vmem:[#allocation4 + $0x10] sm:$0xff]
    %v1350 = vld [vmem:[#allocation4 + $0x18] sm:$0xff]
    %v1351 = vld [vmem:[#allocation4 + $0x20] sm:$0xff]
    %v1352 = vld [vmem:[#allocation4 + $0x28] sm:$0xff]
    %v1353 = vld [vmem:[#allocation4 + $0x30] sm:$0xff]
    %v1354 = vld [vmem:[#allocation4 + $0x38] sm:$0xff]
    %v1355 = vpack.c.bf16 %v1348, %v1347
    %v1356 = vpack.c.bf16 %v1350, %v1349
    %v1357 = vpack.c.bf16 %v1352, %v1351
    %v1358 = vpack.c.bf16 %v1354, %v1353
    %v1359 = vld [vmem:[#allocation7] sm:$0xff]
    %v1360 = vld [vmem:[#allocation7 + $0x8] sm:$0xf]
    %v1361 = vld [vmem:[#allocation7 + $0xc] sm:$0xff]
    %v1362 = vld [vmem:[#allocation7 + $0x14] sm:$0xf]
    %v1363 = vld [vmem:[#allocation7 + $0x18] sm:$0xff]
    %v1364 = vld [vmem:[#allocation7 + $0x20] sm:$0xf]
    %v1365 = vld [vmem:[#allocation7 + $0x24] sm:$0xff]
    %v1366 = vld [vmem:[#allocation7 + $0x2c] sm:$0xf]
    %v1367 = vld [vmem:[#allocation7 + $0x30] sm:$0xff]
    %v1368 = vld [vmem:[#allocation7 + $0x38] sm:$0xf]
    %v1369 = vld [vmem:[#allocation7 + $0x3c] sm:$0xff]
    %v1370 = vld [vmem:[#allocation7 + $0x44] sm:$0xf]
    %v1371 = vld [vmem:[#allocation7 + $0x48] sm:$0xff]
    %v1372 = vld [vmem:[#allocation7 + $0x50] sm:$0xf]
    %v1373 = vld [vmem:[#allocation7 + $0x54] sm:$0xff]
    %v1374 = vld [vmem:[#allocation7 + $0x5c] sm:$0xf]
    %v1375 = vld [vmem:[#allocation7 + $0x60] sm:$0xff]
    %v1376 = vld [vmem:[#allocation7 + $0x68] sm:$0xf]
    %v1377 = vld [vmem:[#allocation7 + $0x6c] sm:$0xff]
    %v1378 = vld [vmem:[#allocation7 + $0x74] sm:$0xf]
    %v1379 = vld [vmem:[#allocation7 + $0x78] sm:$0xff]
    %v1380 = vld [vmem:[#allocation7 + $0x80] sm:$0xf]
    %v1381 = vld [vmem:[#allocation7 + $0x84] sm:$0xff]
    %v1382 = vld [vmem:[#allocation7 + $0x8c] sm:$0xf]
    %v1383 = vld [vmem:[#allocation7 + $0x90] sm:$0xff]
    %v1384 = vld [vmem:[#allocation7 + $0x98] sm:$0xf]
    %v1385 = vld [vmem:[#allocation7 + $0x9c] sm:$0xff]
    %v1386 = vld [vmem:[#allocation7 + $0xa4] sm:$0xf]
    %v1387 = vld [vmem:[#allocation7 + $0xa8] sm:$0xff]
    %v1388 = vld [vmem:[#allocation7 + $0xb0] sm:$0xf]
    %v1389 = vld [vmem:[#allocation7 + $0xb4] sm:$0xff]
    %v1390 = vld [vmem:[#allocation7 + $0xbc] sm:$0xf]
    %v1391 = vld [vmem:[%s6] sm:$0x7]
    %v1393 = vlaneseq
    %v1394 = vshrl.u32 %v1393, 7
    %v1395 = vsub.s32 0, %v1394
    %v1396 = vrot.slane %v1391, %v1395
    %v1397 = vlaneseq
    %v1398 = vshrl.u32 %v1397, 7
    %v1399 = vsub.s32 1, %v1398
    %v1400 = vrot.slane %v1391, %v1399
    %v1401 = vlaneseq
    %v1402 = vshrl.u32 %v1401, 7
    %v1403 = vsub.s32 2, %v1402
    %v1404 = vrot.slane %v1391, %v1403
    %v1440 = vunpack.c.l.b16 %v1359
    %v1441 = vunpack.c.h.b16 %v1359
    %v1442 = vunpack.c.l.b16 %v1360
    %v1443 = vunpack.c.l.b16 %v1361
    %v1444 = vunpack.c.h.b16 %v1361
    %v1445 = vunpack.c.l.b16 %v1362
    %v1446 = vunpack.c.l.b16 %v1363
    %v1447 = vunpack.c.h.b16 %v1363
    %v1448 = vunpack.c.l.b16 %v1364
    %v1449 = vunpack.c.l.b16 %v1365
    %v1450 = vunpack.c.h.b16 %v1365
    %v1451 = vunpack.c.l.b16 %v1366
    %v1452 = vunpack.c.l.b16 %v1367
    %v1453 = vunpack.c.h.b16 %v1367
    %v1454 = vunpack.c.l.b16 %v1368
    %v1455 = vunpack.c.l.b16 %v1369
    %v1456 = vunpack.c.h.b16 %v1369
    %v1457 = vunpack.c.l.b16 %v1370
    %v1458 = vunpack.c.l.b16 %v1371
    %v1459 = vunpack.c.h.b16 %v1371
    %v1460 = vunpack.c.l.b16 %v1372
    %v1461 = vunpack.c.l.b16 %v1373
    %v1462 = vunpack.c.h.b16 %v1373
    %v1463 = vunpack.c.l.b16 %v1374
    %v1464 = vunpack.c.l.b16 %v1375
    %v1465 = vunpack.c.h.b16 %v1375
    %v1466 = vunpack.c.l.b16 %v1376
    %v1467 = vunpack.c.l.b16 %v1377
    %v1468 = vunpack.c.h.b16 %v1377
    %v1469 = vunpack.c.l.b16 %v1378
    %v1470 = vunpack.c.l.b16 %v1379
    %v1471 = vunpack.c.h.b16 %v1379
    %v1472 = vunpack.c.l.b16 %v1380
    %v1473 = vunpack.c.l.b16 %v1381
    %v1474 = vunpack.c.h.b16 %v1381
    %v1475 = vunpack.c.l.b16 %v1382
    %v1476 = vunpack.c.l.b16 %v1383
    %v1477 = vunpack.c.h.b16 %v1383
    %v1478 = vunpack.c.l.b16 %v1384
    %v1479 = vunpack.c.l.b16 %v1385
    %v1480 = vunpack.c.h.b16 %v1385
    %v1481 = vunpack.c.l.b16 %v1386
    %v1482 = vunpack.c.l.b16 %v1387
    %v1483 = vunpack.c.h.b16 %v1387
    %v1484 = vunpack.c.l.b16 %v1388
    %v1485 = vunpack.c.l.b16 %v1389
    %v1486 = vunpack.c.h.b16 %v1389
    %v1487 = vunpack.c.l.b16 %v1390
    %v1488 = vpack.c.b16 %v1443, %v1440
    %v1489 = vpack.c.b16 %v1444, %v1441
    %v1490 = vpack.c.b16 %v1445, %v1442
    %v1491 = vpack.c.b16 %v1449, %v1446
    %v1492 = vpack.c.b16 %v1450, %v1447
    %v1493 = vpack.c.b16 %v1451, %v1448
    %v1494 = vpack.c.b16 %v1455, %v1452
    %v1495 = vpack.c.b16 %v1456, %v1453
    %v1496 = vpack.c.b16 %v1457, %v1454
    %v1497 = vpack.c.b16 %v1461, %v1458
    %v1498 = vpack.c.b16 %v1462, %v1459
    %v1499 = vpack.c.b16 %v1463, %v1460
    %v1500 = vpack.c.b16 %v1467, %v1464
    %v1501 = vpack.c.b16 %v1468, %v1465
    %v1502 = vpack.c.b16 %v1469, %v1466
    %v1503 = vpack.c.b16 %v1473, %v1470
    %v1504 = vpack.c.b16 %v1474, %v1471
    %v1505 = vpack.c.b16 %v1475, %v1472
    %v1506 = vpack.c.b16 %v1479, %v1476
    %v1507 = vpack.c.b16 %v1480, %v1477
    %v1508 = vpack.c.b16 %v1481, %v1478
    %v1509 = vpack.c.b16 %v1485, %v1482
    %v1510 = vpack.c.b16 %v1486, %v1483
    %v1511 = vpack.c.b16 %v1487, %v1484
    %1536 = vmatprep.subr.bf16.mxu0 %v1489
    %1537 = vmatpush1.bf16.msra.mxu0 %v1488
    %1538 = vmatprep.subr.bf16.mxu0 %v1492
    %1539 = vmatpush1.bf16.msra.mxu0 %v1491
    %1540 = vmatprep.subr.bf16.mxu0 %v1495
    %1541 = vmatpush1.bf16.msra.mxu0 %v1494
    %1542 = vmatprep.subr.bf16.mxu0 %v1498
    %1543 = vmatpush1.bf16.msra.mxu0 %v1497
    %1544 = vmatprep.subr.bf16.mxu0 %v1501
    %1545 = vmatpush1.bf16.msra.mxu0 %v1500
    %1546 = vmatprep.subr.bf16.mxu0 %v1504
    %1547 = vmatpush1.bf16.msra.mxu0 %v1503
    %1548 = vmatprep.subr.bf16.mxu0 %v1507
    %1549 = vmatpush1.bf16.msra.mxu0 %v1506
    %1550 = vmatprep.subr.bf16.mxu0 %v1510
    %1551 = vmatpush1.bf16.msra.mxu0 %v1509
    %1552 = vmatprep.subr.bf16.mxu0 0
    %1553 = vmatpush1.bf16.msra.mxu0 0
    %1554 = vmatprep.subr.bf16.mxu0 0
    %1555 = vmatpush1.bf16.msra.mxu0 0
    %1556 = vmatprep.subr.bf16.mxu0 0
    %1557 = vmatpush1.bf16.msra.mxu0 0
    %1558 = vmatprep.subr.bf16.mxu0 0
    %1559 = vmatpush1.bf16.msra.mxu0 0
    %1560 = vmatprep.subr.bf16.mxu0 0
    %1561 = vmatpush1.bf16.msra.mxu0 0
    %1562 = vmatprep.subr.bf16.mxu0 0
    %1563 = vmatpush1.bf16.msra.mxu0 0
    %1564 = vmatprep.subr.bf16.mxu0 0
    %1565 = vmatpush1.bf16.msra.mxu0 0
    %1566 = vmatprep.subr.bf16.mxu0 0
    %1567 = vmatpush1.bf16.msra.mxu0 0
    %1568 = vmatprep.mubr.bf16.mxu0 0
    %1569 = vmatmul.mubr.bf16.gmra.mrb[0].mxu0 %v1355
    %v1570 = vpop.f32.mrb[0].mxu0
    %v1571 = vadd.f32 %v1396, %v1570
    %v1572 = vpop.f32.mrb[0].mxu0
    %v1573 = vadd.f32 %v1400, %v1572
    %v1574 = vpop.f32.mrb[0].mxu0
    %v1575 = vadd.f32 %v1396, %v1574
    %v1576 = vpop.f32.mrb[0].mxu0
    %v1577 = vadd.f32 %v1400, %v1576
    %1578 = vmatprep.mubr.bf16.mxu0 0
    %1579 = vmatmul.mubr.bf16.gmra.mrb[0].mxu0 %v1356
    %v1580 = vpop.f32.mrb[0].mxu0
    %v1581 = vadd.f32 %v1396, %v1580
    %v1582 = vpop.f32.mrb[0].mxu0
    %v1583 = vadd.f32 %v1400, %v1582
    %v1584 = vpop.f32.mrb[0].mxu0
    %v1585 = vadd.f32 %v1396, %v1584
    %v1586 = vpop.f32.mrb[0].mxu0
    %v1587 = vadd.f32 %v1400, %v1586
    %1588 = vmatprep.mubr.bf16.mxu0 0
    %1589 = vmatmul.mubr.bf16.gmra.mrb[0].mxu0 %v1357
    %v1590 = vpop.f32.mrb[0].mxu0
    %v1591 = vadd.f32 %v1396, %v1590
    %v1592 = vpop.f32.mrb[0].mxu0
    %v1593 = vadd.f32 %v1400, %v1592
    %v1594 = vpop.f32.mrb[0].mxu0
    %v1595 = vadd.f32 %v1396, %v1594
    %v1596 = vpop.f32.mrb[0].mxu0
    %v1597 = vadd.f32 %v1400, %v1596
    %1598 = vmatprep.mubr.bf16.mxu0 0
    %1599 = vmatmul.mubr.bf16.gmra.mrb[0].mxu0 %v1358
    %v1600 = vpop.f32.mrb[0].mxu0
    %v1601 = vadd.f32 %v1396, %v1600
    %v1602 = vpop.f32.mrb[0].mxu0
    %v1603 = vadd.f32 %v1400, %v1602
    %v1604 = vpop.f32.mrb[0].mxu0
    %v1605 = vadd.f32 %v1396, %v1604
    %v1606 = vpop.f32.mrb[0].mxu0
    %v1607 = vadd.f32 %v1400, %v1606
    %1608 = vdwg.mxu0
    %1609 = vmatprep.subr.bf16.mxu0 0
    %1610 = vmatpush1.bf16.msra.mxu0 %v1490
    %1611 = vmatprep.subr.bf16.mxu0 0
    %1612 = vmatpush1.bf16.msra.mxu0 %v1493
    %1613 = vmatprep.subr.bf16.mxu0 0
    %1614 = vmatpush1.bf16.msra.mxu0 %v1496
    %1615 = vmatprep.subr.bf16.mxu0 0
    %1616 = vmatpush1.bf16.msra.mxu0 %v1499
    %1617 = vmatprep.subr.bf16.mxu0 0
    %1618 = vmatpush1.bf16.msra.mxu0 %v1502
    %1619 = vmatprep.subr.bf16.mxu0 0
    %1620 = vmatpush1.bf16.msra.mxu0 %v1505
    %1621 = vmatprep.subr.bf16.mxu0 0
    %1622 = vmatpush1.bf16.msra.mxu0 %v1508
    %1623 = vmatprep.subr.bf16.mxu0 0
    %1624 = vmatpush1.bf16.msra.mxu0 %v1511
    %1625 = vmatprep.subr.bf16.mxu0 0
    %1626 = vmatpush1.bf16.msra.mxu0 0
    %1627 = vmatprep.subr.bf16.mxu0 0
    %1628 = vmatpush1.bf16.msra.mxu0 0
    %1629 = vmatprep.subr.bf16.mxu0 0
    %1630 = vmatpush1.bf16.msra.mxu0 0
    %1631 = vmatprep.subr.bf16.mxu0 0
    %1632 = vmatpush1.bf16.msra.mxu0 0
    %1633 = vmatprep.subr.bf16.mxu0 0
    %1634 = vmatpush1.bf16.msra.mxu0 0
    %1635 = vmatprep.subr.bf16.mxu0 0
    %1636 = vmatpush1.bf16.msra.mxu0 0
    %1637 = vmatprep.subr.bf16.mxu0 0
    %1638 = vmatpush1.bf16.msra.mxu0 0
    %1639 = vmatprep.subr.bf16.mxu0 0
    %1640 = vmatpush1.bf16.msra.mxu0 0
    %1641 = vmatprep.mubr.bf16.mxu0 0
    %1642 = vmatmul.mubr.bf16.gmra.mrb[0].mxu0 %v1355
    %v1643 = vpop.f32.mrb[0].mxu0
    %v1644 = vadd.f32 %v1404, %v1643
    %v1645 = vpop.f32.mrb[0].mxu0
    %v1646 = vpop.f32.mrb[0].mxu0
    %v1647 = vadd.f32 %v1404, %v1646
    %v1648 = vpop.f32.mrb[0].mxu0
    %1649 = vmatprep.mubr.bf16.mxu0 0
    %1650 = vmatmul.mubr.bf16.gmra.mrb[0].mxu0 %v1356
    %v1651 = vpop.f32.mrb[0].mxu0
    %v1652 = vadd.f32 %v1404, %v1651
    %v1653 = vpop.f32.mrb[0].mxu0
    %v1654 = vpop.f32.mrb[0].mxu0
    %v1655 = vadd.f32 %v1404, %v1654
    %v1656 = vpop.f32.mrb[0].mxu0
    %1657 = vmatprep.mubr.bf16.mxu0 0
    %1658 = vmatmul.mubr.bf16.gmra.mrb[0].mxu0 %v1357
    %v1659 = vpop.f32.mrb[0].mxu0
    %v1660 = vadd.f32 %v1404, %v1659
    %v1661 = vpop.f32.mrb[0].mxu0
    %v1662 = vpop.f32.mrb[0].mxu0
    %v1663 = vadd.f32 %v1404, %v1662
    %v1664 = vpop.f32.mrb[0].mxu0
    %1665 = vmatprep.mubr.bf16.mxu0 0
    %1666 = vmatmul.mubr.bf16.gmra.mrb[0].mxu0 %v1358
    %v1667 = vpop.f32.mrb[0].mxu0
    %v1668 = vadd.f32 %v1404, %v1667
    %v1669 = vpop.f32.mrb[0].mxu0
    %v1670 = vpop.f32.mrb[0].mxu0
    %v1671 = vadd.f32 %v1404, %v1670
    %v1672 = vpop.f32.mrb[0].mxu0
    %1673 = vdwg.mxu0
    %v1674 = vpack.c.bf16 %v1571, %v1571
    %v1675 = vpack.c.bf16 %v1573, %v1573
    %v1676 = vpack.c.bf16 %v1644, %v1644
    %v1677 = vpack.c.bf16 %v1575, %v1575
    %v1678 = vpack.c.bf16 %v1577, %v1577
    %v1679 = vpack.c.bf16 %v1647, %v1647
    %v1680 = vpack.c.bf16 %v1581, %v1581
    %v1681 = vpack.c.bf16 %v1583, %v1583
    %v1682 = vpack.c.bf16 %v1652, %v1652
    %v1683 = vpack.c.bf16 %v1585, %v1585
    %v1684 = vpack.c.bf16 %v1587, %v1587
    %v1685 = vpack.c.bf16 %v1655, %v1655
    %v1686 = vpack.c.bf16 %v1591, %v1591
    %v1687 = vpack.c.bf16 %v1593, %v1593
    %v1688 = vpack.c.bf16 %v1660, %v1660
    %v1689 = vpack.c.bf16 %v1595, %v1595
    %v1690 = vpack.c.bf16 %v1597, %v1597
    %v1691 = vpack.c.bf16 %v1663, %v1663
    %v1692 = vpack.c.bf16 %v1601, %v1601
    %v1693 = vpack.c.bf16 %v1603, %v1603
    %v1694 = vpack.c.bf16 %v1668, %v1668
    %v1695 = vpack.c.bf16 %v1605, %v1605
    %v1696 = vpack.c.bf16 %v1607, %v1607
    %v1697 = vpack.c.bf16 %v1671, %v1671
    %v1722 = vunpack.c.l.b16 %v1674
    %v1723 = vunpack.c.l.b16 %v1675
    %v1724 = vunpack.c.l.b16 %v1676
    %v1725 = vunpack.c.l.b16 %v1677
    %v1726 = vunpack.c.l.b16 %v1678
    %v1727 = vunpack.c.l.b16 %v1679
    %v1728 = vunpack.c.l.b16 %v1680
    %v1729 = vunpack.c.l.b16 %v1681
    %v1730 = vunpack.c.l.b16 %v1682
    %v1731 = vunpack.c.l.b16 %v1683
    %v1732 = vunpack.c.l.b16 %v1684
    %v1733 = vunpack.c.l.b16 %v1685
    %v1734 = vunpack.c.l.b16 %v1686
    %v1735 = vunpack.c.l.b16 %v1687
    %v1736 = vunpack.c.l.b16 %v1688
    %v1737 = vunpack.c.l.b16 %v1689
    %v1738 = vunpack.c.l.b16 %v1690
    %v1739 = vunpack.c.l.b16 %v1691
    %v1740 = vunpack.c.l.b16 %v1692
    %v1741 = vunpack.c.l.b16 %v1693
    %v1742 = vunpack.c.l.b16 %v1694
    %v1743 = vunpack.c.l.b16 %v1695
    %v1744 = vunpack.c.l.b16 %v1696
    %v1745 = vunpack.c.l.b16 %v1697
    %v1746 = vpack.c.b16 %v1723, %v1722
    %v1747 = vpack.c.b16 %v1724, %v1724
    %v1748 = vpack.c.b16 %v1726, %v1725
    %v1749 = vpack.c.b16 %v1727, %v1727
    %v1750 = vpack.c.b16 %v1729, %v1728
    %v1751 = vpack.c.b16 %v1730, %v1730
    %v1752 = vpack.c.b16 %v1732, %v1731
    %v1753 = vpack.c.b16 %v1733, %v1733
    %v1754 = vpack.c.b16 %v1735, %v1734
    %v1755 = vpack.c.b16 %v1736, %v1736
    %v1756 = vpack.c.b16 %v1738, %v1737
    %v1757 = vpack.c.b16 %v1739, %v1739
    %v1758 = vpack.c.b16 %v1741, %v1740
    %v1759 = vpack.c.b16 %v1742, %v1742
    %v1760 = vpack.c.b16 %v1744, %v1743
    %v1761 = vpack.c.b16 %v1745, %v1745
    %1778 = vst [vmem:[%s7] sm:$0xff] %v1746
    %1779 = vst [vmem:[%s7 + $0x8] sm:$0xf] %v1747
    %1780 = vst [vmem:[%s7 + $0xc] sm:$0xff] %v1748
    %1781 = vst [vmem:[%s7 + $0x14] sm:$0xf] %v1749
    %1782 = vst [vmem:[%s7 + $0x18] sm:$0xff] %v1750
    %1783 = vst [vmem:[%s7 + $0x20] sm:$0xf] %v1751
    %1784 = vst [vmem:[%s7 + $0x24] sm:$0xff] %v1752
    %1785 = vst [vmem:[%s7 + $0x2c] sm:$0xf] %v1753
    %1786 = vst [vmem:[%s7 + $0x30] sm:$0xff] %v1754
    %1787 = vst [vmem:[%s7 + $0x38] sm:$0xf] %v1755
    %1788 = vst [vmem:[%s7 + $0x3c] sm:$0xff] %v1756
    %1789 = vst [vmem:[%s7 + $0x44] sm:$0xf] %v1757
    %1790 = vst [vmem:[%s7 + $0x48] sm:$0xff] %v1758
    %1791 = vst [vmem:[%s7 + $0x50] sm:$0xf] %v1759
    %1792 = vst [vmem:[%s7 + $0x54] sm:$0xff] %v1760
    %1793 = vst [vmem:[%s7 + $0x5c] sm:$0xf] %v1761
    // Predicated region
    $region42: #{gru_forward.2} parent=1 // pred_check
      _
    $region43: #{gru_forward.2} parent=1 // pred_check_branch
      %1795 = sbr.rel (0) target = $region45
    $region44: #{gru_forward.2} parent=1 // pred_region
      _
    $region45: #{gru_forward.2} parent=1 // pred_fallthru
      _
    // Predicated region
    $region46: #{gru_forward.2} parent=1 // pred_check
      _
    $region47: #{gru_forward.2} parent=1 // pred_check_branch
      %1797 = sbr.rel (0) target = $region49
    $region48: #{gru_forward.2} parent=1 // pred_region
      _
    $region49: #{gru_forward.2} parent=1 // pred_fallthru
      _
    %1798 = vsyncpa [#allocation6], 1
    %1799 = vsyncpa [#allocation8], 1

</llo_original>
